<compile_context>
chip_gen: v6e
topology: v6e:2x2x1
jax: 0.10.0
libtpu: 0.0.40
codegen_flags: <defaults>
</compile_context>

<pallas_src>
import math

import jax
import jax.numpy as jnp
from jax import lax
from jax.experimental import pallas as pl
from jax.experimental.pallas import tpu as pltpu

# ------------- configuration (mirrors FFTransformerCouplingLayer.__init__) ----
CHANNELS = 4            # channels (must be even)
HIDDEN = 32             # hidden_channels
FILTER = 64             # filter_channels (768 in prod, small synthetic here)
KERNEL_SIZE = 3         # FFN causal conv kernel size
N_LAYERS = 2
N_HEADS = 2
HALF = CHANNELS // 2
K_CH = HIDDEN // N_HEADS
B = 2
T = 16
LN_EPS = 1e-5


# ------------------------------ kernel helpers --------------------------------
def _bdot(a, b):
    """bf16 operands, f32 accumulation (single-pass MXU)."""
    return jnp.dot(a.astype(jnp.bfloat16), b.astype(jnp.bfloat16),
                   preferred_element_type=jnp.float32)


def _layer_norm(x, gamma, beta):
    # VITS LayerNorm: normalize over the channel axis (last axis here).
    mean = jnp.mean(x, axis=-1, keepdims=True)
    var = jnp.mean(jnp.square(x - mean), axis=-1, keepdims=True)
    return (x - mean) * lax.rsqrt(var + LN_EPS) * gamma + beta


def _shift_back(x, s, t_col):
    # y[t] = x[t - s], zero for t < s (causal left padding); s is static.
    # t_col is a hoisted (T, 1) row-index vector (broadcast compare, no per-tap
    # full-width iota).
    if s == 0:
        return x
    rolled = pltpu.roll(x, shift=s, axis=0)
    return jnp.where(t_col >= s, rolled, 0.0)


def _causal_conv(x, w_ref, bias, layer, t_col):
    # Causal Conv1d as KERNEL_SIZE accumulating matmuls (f32 accumulation);
    # no lane-axis concat of shifted activations.
    out = bias + _bdot(_shift_back(x, KERNEL_SIZE - 1, t_col), w_ref[layer, 0])
    for j in range(1, KERNEL_SIZE):
        out = out + _bdot(_shift_back(x, KERNEL_SIZE - 1 - j, t_col),
                          w_ref[layer, j])
    return out


# ---------------------------------- kernel ------------------------------------
def _coupling_kernel(
    x_ref, mask_ref,
    pre_ref, qvw_ref, wow_ref, vec_ref,
    ffn1w_ref, ffn1b_ref, ffn2w_ref, post_ref,
    xo_ref, logdet_ref,
):
    x_in = x_ref[0]             # (T, CHANNELS)
    x0 = x_in[:, :HALF]         # (T, HALF)
    x1 = x_in[:, HALF:]         # (T, HALF)
    mask = mask_ref[0]          # (T, 1)

    # pre: 1x1 conv == channel matmul (packed rows: [pre_w ; pre_b])
    pre = pre_ref[...]
    h = (_bdot(x0, pre[:HALF]) + pre[HALF:HALF + 1]) * mask       # (T, HIDDEN)

    # hoisted index vectors (once per kernel invocation)
    t_col = lax.broadcasted_iota(jnp.int32, (T, 1), 0)            # shift mask
    row = lax.broadcasted_iota(jnp.int32, (T, T), 0)
    col = lax.broadcasted_iota(jnp.int32, (T, T), 1)
    causal = col <= row                                           # subsequent_mask
    inv_sqrt_d = 1.0 / math.sqrt(K_CH)

    # ---- FFT encoder (isflow=True, gin_channels=0 -> g=None, p_dropout=0) ----
    x = h                       # h is already masked

    for l in range(N_LAYERS):
        vl = vec_ref[l]                                  # (8, HIDDEN)
        bq, bv, bo = vl[0:1], vl[1:2], vl[2:3]
        ln0_g, ln0_b = vl[3:4], vl[4:5]
        ln1_g, ln1_b = vl[5:6], vl[6:7]
        ffn_b2 = vl[7:8]

        # ---- multi-head causal self-attention ----
        # proximal_init shares Q's weight AND bias with K -> K == Q.
        # Q and V projections fused into one (HIDDEN, 2*HIDDEN) matmul.
        qv = _bdot(x, qvw_ref[l])                        # (T, 2*HIDDEN)
        k = qv[:, :HIDDEN] + bq                          # == unscaled Q
        v = qv[:, HIDDEN:] + bv
        q = k * inv_sqrt_d                               # scale once (hoisted)

        wo_l = wow_ref[l]                                # (HIDDEN, HIDDEN) bf16
        y = bo                                           # (1, HIDDEN), broadcasts
        for hh in range(N_HEADS):
            sl = slice(hh * K_CH, (hh + 1) * K_CH)
            scores = lax.dot_general(
                q[:, sl].astype(jnp.bfloat16), k[:, sl].astype(jnp.bfloat16),
                (((1,), (1,)), ((), ())),
                preferred_element_type=jnp.float32)      # (T, T) f32
            scores = jnp.where(causal, scores, -1e4)
            scores = scores - jnp.max(scores, axis=-1, keepdims=True)
            p = jnp.exp(scores)
            # approx reciprocal (EUP slot); documented precision trade.
            p = p * pl.reciprocal(jnp.sum(p, axis=-1, keepdims=True),
                                  approx=True)
            head = _bdot(p, v[:, sl])                    # (T, K_CH)
            # accumulate through the matching rows of W_o (no head concat)
            y = y + _bdot(head, wo_l[sl, :])             # (T, HIDDEN)
        x = _layer_norm(x + y, ln0_g, ln0_b)

        # ---- causal FFN: each K=3 conv as 3 accumulating matmuls ----
        xm = x * mask
        h1 = _causal_conv(xm, ffn1w_ref, ffn1b_ref[l], l, t_col)   # (T, FILTER)
        h1 = jnp.maximum(h1, 0.0) * mask
        y = _causal_conv(h1, ffn2w_ref, ffn_b2, l, t_col) * mask   # (T, HIDDEN)
        x = _layer_norm(x + y, ln1_g, ln1_b)

    h = x * mask + h                                                # h_ + h

    # post: 1x1 conv (zero-init in the original module; nonzero deterministic
    # init here so the test exercises the full coupling math)
    post = post_ref[...]
    stats = (_bdot(h, post[:HIDDEN]) + post[HIDDEN:HIDDEN + 1]) * mask
    m = stats[:, :HALF]
    logs = stats[:, HALF:]                               # already masked

    x1n = m + x1 * jnp.exp(logs) * mask                  # forward (reverse=False)
    xo_ref[0] = jnp.concatenate([x0, x1n], axis=-1)      # single lane-dense block

    # per-batch logdet reduced in-kernel (no (B,T,HALF) logs writeback)
    ld = jnp.sum(logs, axis=0, keepdims=True)            # (1, HALF)
    logdet_ref[0] = jnp.sum(ld, axis=1, keepdims=True)   # (1, 1)


# --------------------------- parameter packing ---------------------------------
def pack_params(p):
    """Pack 18 parameter tensors into 8 kernel inputs (matmul weights as bf16)."""
    qv_w = jnp.concatenate([p["wq"], p["wv"]], axis=-1).astype(jnp.bfloat16)
    wo_w = p["wo"].astype(jnp.bfloat16)
    vecs = jnp.concatenate(
        [p["bq"], p["bv"], p["bo"], p["ln0_g"], p["ln0_b"],
         p["ln1_g"], p["ln1_b"], p["ffn_b2"]], axis=1)              # (L, 8, H)
    ffn_w1 = p["ffn_w1"].astype(jnp.bfloat16)                       # (L, K, H, F)
    ffn_w2 = p["ffn_w2"].astype(jnp.bfloat16)                       # (L, K, F, H)
    pre_pack = jnp.concatenate([p["pre_w"], p["pre_b"]], axis=0)    # (HALF+1, H)
    post_pack = jnp.concatenate([p["post_w"], p["post_b"]], axis=0) # (H+1, 2*HALF)
    return [pre_pack, qv_w, wo_w, vecs, ffn_w1, p["ffn_b1"], ffn_w2, post_pack]


# --------------------------------- wrapper -------------------------------------
def fft_coupling_forward(x_nct, x_mask_n1t, params):
    """x_nct: (B, CHANNELS, T), x_mask_n1t: (B, 1, T). Returns ((B,C,T), (B,))."""
    x_btc = jnp.transpose(x_nct, (0, 2, 1))
    mask_bt1 = jnp.transpose(x_mask_n1t, (0, 2, 1))

    packed = pack_params(params)

    def full_spec(shape):
        nd = len(shape)
        return pl.BlockSpec(shape, lambda b, _nd=nd: (0,) * _nd)

    in_specs = [
        pl.BlockSpec((1, T, CHANNELS), lambda b: (b, 0, 0)),
        pl.BlockSpec((1, T, 1), lambda b: (b, 0, 0)),
    ] + [full_spec(p.shape) for p in packed]

    out_shape = (
        jax.ShapeDtypeStruct((B, T, CHANNELS), jnp.float32),   # [x0 ; x1_new]
        jax.ShapeDtypeStruct((B, 1, 1), jnp.float32),          # per-batch logdet
    )
    out_specs = (
        pl.BlockSpec((1, T, CHANNELS), lambda b: (b, 0, 0)),
        pl.BlockSpec((1, 1, 1), lambda b: (b, 0, 0)),
    )

    # advisory cost estimate (MXU flops, softmax/exp transcendentals, HBM bytes)
    flops = B * (
        2 * T * HALF * HIDDEN
        + N_LAYERS * (2 * T * HIDDEN * 2 * HIDDEN
                      + N_HEADS * (4 * T * T * K_CH + 2 * T * K_CH * HIDDEN)
                      + KERNEL_SIZE * (2 * T * HIDDEN * FILTER
                                       + 2 * T * FILTER * HIDDEN))
        + 2 * T * HIDDEN * 2 * HALF)
    transcendentals = B * (N_LAYERS * N_HEADS * T * T + T * HALF
                           + N_LAYERS * 4 * T)
    bytes_accessed = (int(x_btc.size) + int(mask_bt1.size)
                      + B * T * CHANNELS + B) * 4 \
        + sum(int(p.size) * p.dtype.itemsize for p in packed)
    cost = pl.CostEstimate(flops=int(flops),
                           transcendentals=int(transcendentals),
                           bytes_accessed=int(bytes_accessed))

    x_out_btc, logdet = pl.pallas_call(
        _coupling_kernel,
        out_shape=out_shape,
        grid=(B,),
        in_specs=in_specs,
        out_specs=out_specs,
        compiler_params=pltpu.CompilerParams(
            dimension_semantics=("parallel",)),
        cost_estimate=cost,
    )(x_btc, mask_bt1, *packed)

    return jnp.transpose(x_out_btc, (0, 2, 1)), logdet[:, 0, 0]


# -------------------------- deterministic parameters ---------------------------
def init_params(key):
    ks = jax.random.split(key, 14)

    def nrm(k, shape, scale):
        return (scale * jax.random.normal(k, shape)).astype(jnp.float32)

    return dict(
        pre_w=nrm(ks[0], (HALF, HIDDEN), 0.2),
        pre_b=nrm(ks[1], (1, HIDDEN), 0.2),
        wq=nrm(ks[2], (N_LAYERS, HIDDEN, HIDDEN), 0.1),
        bq=nrm(ks[3], (N_LAYERS, 1, HIDDEN), 0.1),
        wv=nrm(ks[4], (N_LAYERS, HIDDEN, HIDDEN), 0.1),
        bv=nrm(ks[5], (N_LAYERS, 1, HIDDEN), 0.1),
        wo=nrm(ks[6], (N_LAYERS, HIDDEN, HIDDEN), 0.1),
        bo=nrm(ks[7], (N_LAYERS, 1, HIDDEN), 0.1),
        ln0_g=jnp.ones((N_LAYERS, 1, HIDDEN), jnp.float32),
        ln0_b=jnp.zeros((N_LAYERS, 1, HIDDEN), jnp.float32),
        ln1_g=jnp.ones((N_LAYERS, 1, HIDDEN), jnp.float32),
        ln1_b=jnp.zeros((N_LAYERS, 1, HIDDEN), jnp.float32),
        ffn_w1=nrm(ks[8], (N_LAYERS, KERNEL_SIZE, HIDDEN, FILTER), 0.1),
        ffn_b1=nrm(ks[9], (N_LAYERS, 1, FILTER), 0.1),
        ffn_w2=nrm(ks[10], (N_LAYERS, KERNEL_SIZE, FILTER, HIDDEN), 0.1),
        ffn_b2=nrm(ks[11], (N_LAYERS, 1, HIDDEN), 0.1),
        # NOTE: PyTorch zero-inits post (identity flow at init); nonzero here.
        post_w=nrm(ks[12], (HIDDEN, 2 * HALF), 0.1),
        post_b=nrm(ks[13], (1, 2 * HALF), 0.1),
    )


# ------------------------------ plain-JAX reference ----------------------------
# Reference uses the same precision policy as the kernel: bf16 matmul operands,
# f32 accumulation.
def _ref_dot(a, b):
    return jnp.matmul(a.astype(jnp.bfloat16), b.astype(jnp.bfloat16),
                      preferred_element_type=jnp.float32)


def _ref_ln(x, g, b):
    mean = jnp.mean(x, axis=-1, keepdims=True)
    var = jnp.mean(jnp.square(x - mean), axis=-1, keepdims=True)
    return (x - mean) / jnp.sqrt(var + LN_EPS) * g + b


def _ref_causal_conv(x, w_taps, bias):
    xp = jnp.pad(x, ((0, 0), (KERNEL_SIZE - 1, 0), (0, 0)))
    out = bias
    for j in range(KERNEL_SIZE):
        out = out + _ref_dot(xp[:, j:j + T, :], w_taps[j])
    return out


def ref_forward(x_nct, x_mask_n1t, p):
    bf16 = jnp.bfloat16
    x_btc = jnp.transpose(x_nct, (0, 2, 1))
    mask = jnp.transpose(x_mask_n1t, (0, 2, 1))
    x0 = x_btc[..., :HALF]
    x1 = x_btc[..., HALF:]
    h = (_ref_dot(x0, p["pre_w"]) + p["pre_b"]) * mask
    x = h * mask
    causal = jnp.tril(jnp.ones((T, T), bool))
    scale = 1.0 / math.sqrt(K_CH)
    for l in range(N_LAYERS):
        q = _ref_dot(x, p["wq"][l]) + p["bq"][l]
        k = _ref_dot(x, p["wq"][l]) + p["bq"][l]       # proximal_init: K shares Q
        v = _ref_dot(x, p["wv"][l]) + p["bv"][l]
        qh = q.reshape(B, T, N_HEADS, K_CH).transpose(0, 2, 1, 3)
        kh = k.reshape(B, T, N_HEADS, K_CH).transpose(0, 2, 1, 3)
        vh = v.reshape(B, T, N_HEADS, K_CH).transpose(0, 2, 1, 3)
        sc = jnp.einsum("bhqd,bhkd->bhqk",
                        (qh * scale).astype(bf16), kh.astype(bf16),
                        preferred_element_type=jnp.float32)
        sc = jnp.where(causal[None, None], sc, -1e4)
        pa = jax.nn.softmax(sc, axis=-1)
        out = jnp.einsum("bhqk,bhkd->bhqd",
                         pa.astype(bf16), vh.astype(bf16),
                         preferred_element_type=jnp.float32)
        out = out.transpose(0, 2, 1, 3).reshape(B, T, HIDDEN)
        y = _ref_dot(out, p["wo"][l]) + p["bo"][l]
        x = _ref_ln(x + y, p["ln0_g"][l], p["ln0_b"][l])
        xm = x * mask
        h1 = jnp.maximum(_ref_causal_conv(xm, p["ffn_w1"][l], p["ffn_b1"][l]),
                         0.0) * mask
        y = _ref_causal_conv(h1, p["ffn_w2"][l], p["ffn_b2"][l]) * mask
        x = _ref_ln(x + y, p["ln1_g"][l], p["ln1_b"][l])
    h = x * mask + h
    stats = (_ref_dot(h, p["post_w"]) + p["post_b"]) * mask
    m, logs = stats[..., :HALF], stats[..., HALF:]
    x1n = m + x1 * jnp.exp(logs) * mask
    xo = jnp.concatenate([x0, x1n], axis=-1)
    return jnp.transpose(xo, (0, 2, 1)), jnp.sum(logs, axis=(1, 2))


# ------------------------------------ main --------------------------------------
if __name__ == "__main__":
    key = jax.random.PRNGKey(0)
    kx, kp = jax.random.split(key)

    x = jax.random.normal(kx, (B, CHANNELS, T), jnp.float32)
    lengths = jnp.array([T, T - 4], jnp.int32)
    t_idx = jnp.arange(T)
    x_mask = (t_idx[None, :] < lengths[:, None]).astype(jnp.float32)[:, None, :]  # (B,1,T)

    params = init_params(kp)

    x_out, logdet = jax.block_until_ready(
        fft_coupling_forward(x, x_mask, params))

    x_ref, logdet_ref = ref_forward(x, x_mask, params)
    assert x_out.shape == (B, CHANNELS, T) and logdet.shape == (B,)
    # Tolerances account for bf16 MXU operands + approx EUP reciprocal in the
    # kernel softmax (typical observed error is well under 1e-3).
    assert jnp.allclose(x_out, x_ref, atol=1e-2, rtol=1e-2), "x mismatch"
    assert jnp.allclose(logdet, logdet_ref, atol=3e-2, rtol=1e-2), "logdet mismatch"

    print("KERNEL_OK")
</pallas_src>

<mosaic_0001>
module attributes {stable_mosaic.version = 11 : i64} {
  func.func @_coupling_kernel(%arg0: i32, %arg1: memref<1x16x4xf32, #tpu.memory_space<vmem>>, %arg2: memref<1x16x1xf32, #tpu.memory_space<vmem>>, %arg3: memref<3x32xf32, #tpu.memory_space<vmem>>, %arg4: memref<2x32x64xbf16, #tpu.memory_space<vmem>>, %arg5: memref<2x32x32xbf16, #tpu.memory_space<vmem>>, %arg6: memref<2x8x32xf32, #tpu.memory_space<vmem>>, %arg7: memref<2x3x32x64xbf16, #tpu.memory_space<vmem>>, %arg8: memref<2x1x64xf32, #tpu.memory_space<vmem>>, %arg9: memref<2x3x64x32xbf16, #tpu.memory_space<vmem>>, %arg10: memref<33x4xf32, #tpu.memory_space<vmem>>, %arg11: memref<1x16x4xf32, #tpu.memory_space<vmem>>, %arg12: memref<1x1x1xf32, #tpu.memory_space<vmem>>) attributes {dimension_semantics = [#tpu.dimension_semantics<parallel>], iteration_bounds = array<i64: 2>, scalar_prefetch = 0 : i64, scratch_operands = 0 : i64, tpu.core_type = #tpu.core_type<tc>, window_params = [{transform_indices = @transform_0, window_bounds = array<i64: 1, 16, 4>}, {transform_indices = @transform_1, window_bounds = array<i64: 1, 16, 1>}, {pipeline_mode = #tpu.pipeline_mode<synchronous>, transform_indices = @transform_2, window_bounds = array<i64: 3, 32>}, {pipeline_mode = #tpu.pipeline_mode<synchronous>, transform_indices = @transform_3, window_bounds = array<i64: 2, 32, 64>}, {pipeline_mode = #tpu.pipeline_mode<synchronous>, transform_indices = @transform_4, window_bounds = array<i64: 2, 32, 32>}, {pipeline_mode = #tpu.pipeline_mode<synchronous>, transform_indices = @transform_5, window_bounds = array<i64: 2, 8, 32>}, {pipeline_mode = #tpu.pipeline_mode<synchronous>, transform_indices = @transform_6, window_bounds = array<i64: 2, 3, 32, 64>}, {pipeline_mode = #tpu.pipeline_mode<synchronous>, transform_indices = @transform_7, window_bounds = array<i64: 2, 1, 64>}, {pipeline_mode = #tpu.pipeline_mode<synchronous>, transform_indices = @transform_8, window_bounds = array<i64: 2, 3, 64, 32>}, {pipeline_mode = #tpu.pipeline_mode<synchronous>, transform_indices = @transform_9, window_bounds = array<i64: 33, 4>}, {transform_indices = @transform_10, window_bounds = array<i64: 1, 16, 4>}, {transform_indices = @transform_11, window_bounds = array<i64: 1, 1, 1>}]} {
    %c0 = arith.constant 0 : index
    %c0_0 = arith.constant 0 : index
    %c0_1 = arith.constant 0 : index
    %0 = vector.load %arg1[%c0, %c0_0, %c0_1] : memref<1x16x4xf32, #tpu.memory_space<vmem>>, vector<1x16x4xf32>
    %1 = vector.shape_cast %0 : vector<1x16x4xf32> to vector<16x4xf32>
    %2 = vector.extract_strided_slice %1 {offsets = [0, 0], sizes = [16, 2], strides = [1, 1]} : vector<16x4xf32> to vector<16x2xf32>
    %3 = vector.extract_strided_slice %1 {offsets = [0, 2], sizes = [16, 2], strides = [1, 1]} : vector<16x4xf32> to vector<16x2xf32>
    %c0_2 = arith.constant 0 : index
    %c0_3 = arith.constant 0 : index
    %c0_4 = arith.constant 0 : index
    %4 = vector.load %arg2[%c0_2, %c0_3, %c0_4] : memref<1x16x1xf32, #tpu.memory_space<vmem>>, vector<1x16x1xf32>
    %5 = vector.shape_cast %4 : vector<1x16x1xf32> to vector<16x1xf32>
    %c0_5 = arith.constant 0 : index
    %c0_6 = arith.constant 0 : index
    %6 = vector.load %arg3[%c0_5, %c0_6] : memref<3x32xf32, #tpu.memory_space<vmem>>, vector<3x32xf32>
    %7 = vector.extract_strided_slice %6 {offsets = [0, 0], sizes = [2, 32], strides = [1, 1]} : vector<3x32xf32> to vector<2x32xf32>
    %8 = arith.truncf %2 : vector<16x2xf32> to vector<16x2xbf16>
    %9 = arith.truncf %7 : vector<2x32xf32> to vector<2x32xbf16>
    %cst = arith.constant dense<0.000000e+00> : vector<16x32xf32>
    %10 = tpu.matmul %8, %9, %cst {dimension_numbers = #tpu.dot_dimension_numbers<[1], [0], [0], [1], [0, 0, 1, 1], [], []>} : vector<16x2xbf16>, vector<2x32xbf16>, vector<16x32xf32> -> vector<16x32xf32>
    %11 = vector.extract_strided_slice %6 {offsets = [2, 0], sizes = [1, 32], strides = [1, 1]} : vector<3x32xf32> to vector<1x32xf32>
    %12 = vector.broadcast %11 : vector<1x32xf32> to vector<16x32xf32>
    %13 = arith.addf %10, %12 : vector<16x32xf32>
    %14 = vector.broadcast %5 : vector<16x1xf32> to vector<16x32xf32>
    %15 = arith.mulf %13, %14 : vector<16x32xf32>
    %16 = tpu.iota {dimensions = array<i32: 0>} : vector<16x1xi32>
    %17 = tpu.iota {dimensions = array<i32: 0>} : vector<16x16xi32>
    %18 = tpu.iota {dimensions = array<i32: 1>} : vector<16x16xi32>
    %19 = arith.cmpi sle, %18, %17 : vector<16x16xi32>
    %c0_7 = arith.constant 0 : index
    %c0_8 = arith.constant 0 : index
    %c0_9 = arith.constant 0 : index
    %20 = vector.load %arg6[%c0_7, %c0_8, %c0_9] : memref<2x8x32xf32, #tpu.memory_space<vmem>>, vector<1x8x32xf32>
    %21 = vector.shape_cast %20 : vector<1x8x32xf32> to vector<8x32xf32>
    %22 = vector.extract_strided_slice %21 {offsets = [0, 0], sizes = [1, 32], strides = [1, 1]} : vector<8x32xf32> to vector<1x32xf32>
    %23 = vector.extract_strided_slice %21 {offsets = [1, 0], sizes = [1, 32], strides = [1, 1]} : vector<8x32xf32> to vector<1x32xf32>
    %24 = vector.extract_strided_slice %21 {offsets = [2, 0], sizes = [1, 32], strides = [1, 1]} : vector<8x32xf32> to vector<1x32xf32>
    %25 = vector.extract_strided_slice %21 {offsets = [3, 0], sizes = [1, 32], strides = [1, 1]} : vector<8x32xf32> to vector<1x32xf32>
    %26 = vector.extract_strided_slice %21 {offsets = [4, 0], sizes = [1, 32], strides = [1, 1]} : vector<8x32xf32> to vector<1x32xf32>
    %27 = vector.extract_strided_slice %21 {offsets = [5, 0], sizes = [1, 32], strides = [1, 1]} : vector<8x32xf32> to vector<1x32xf32>
    %28 = vector.extract_strided_slice %21 {offsets = [6, 0], sizes = [1, 32], strides = [1, 1]} : vector<8x32xf32> to vector<1x32xf32>
    %29 = vector.extract_strided_slice %21 {offsets = [7, 0], sizes = [1, 32], strides = [1, 1]} : vector<8x32xf32> to vector<1x32xf32>
    %c0_10 = arith.constant 0 : index
    %c0_11 = arith.constant 0 : index
    %c0_12 = arith.constant 0 : index
    %30 = vector.load %arg4[%c0_10, %c0_11, %c0_12] : memref<2x32x64xbf16, #tpu.memory_space<vmem>>, vector<1x32x64xbf16>
    %31 = vector.shape_cast %30 : vector<1x32x64xbf16> to vector<32x64xbf16>
    %32 = arith.truncf %15 : vector<16x32xf32> to vector<16x32xbf16>
    %cst_13 = arith.constant dense<0.000000e+00> : vector<16x64xf32>
    %33 = tpu.matmul %32, %31, %cst_13 {dimension_numbers = #tpu.dot_dimension_numbers<[1], [0], [0], [1], [0, 0, 1, 1], [], []>} : vector<16x32xbf16>, vector<32x64xbf16>, vector<16x64xf32> -> vector<16x64xf32>
    %34 = vector.extract_strided_slice %33 {offsets = [0, 0], sizes = [16, 32], strides = [1, 1]} : vector<16x64xf32> to vector<16x32xf32>
    %35 = vector.broadcast %22 : vector<1x32xf32> to vector<16x32xf32>
    %36 = arith.addf %34, %35 : vector<16x32xf32>
    %37 = vector.extract_strided_slice %33 {offsets = [0, 32], sizes = [16, 32], strides = [1, 1]} : vector<16x64xf32> to vector<16x32xf32>
    %38 = vector.broadcast %23 : vector<1x32xf32> to vector<16x32xf32>
    %39 = arith.addf %37, %38 : vector<16x32xf32>
    %cst_14 = arith.constant 2.500000e-01 : f32
    %40 = vector.broadcast %cst_14 : f32 to vector<16x32xf32>
    %41 = arith.mulf %36, %40 : vector<16x32xf32>
    %c0_15 = arith.constant 0 : index
    %c0_16 = arith.constant 0 : index
    %c0_17 = arith.constant 0 : index
    %42 = vector.load %arg5[%c0_15, %c0_16, %c0_17] : memref<2x32x32xbf16, #tpu.memory_space<vmem>>, vector<1x32x32xbf16>
    %43 = vector.shape_cast %42 : vector<1x32x32xbf16> to vector<32x32xbf16>
    %44 = vector.extract_strided_slice %41 {offsets = [0, 0], sizes = [16, 16], strides = [1, 1]} : vector<16x32xf32> to vector<16x16xf32>
    %45 = arith.truncf %44 : vector<16x16xf32> to vector<16x16xbf16>
    %46 = vector.extract_strided_slice %36 {offsets = [0, 0], sizes = [16, 16], strides = [1, 1]} : vector<16x32xf32> to vector<16x16xf32>
    %47 = arith.truncf %46 : vector<16x16xf32> to vector<16x16xbf16>
    %cst_18 = arith.constant dense<0.000000e+00> : vector<16x16xf32>
    %48 = tpu.matmul %45, %47, %cst_18 {dimension_numbers = #tpu.dot_dimension_numbers<[1], [1], [0], [0], [0, 0, 1, 0], [], []>} : vector<16x16xbf16>, vector<16x16xbf16>, vector<16x16xf32> -> vector<16x16xf32>
    %cst_19 = arith.constant -1.000000e+04 : f32
    %49 = vector.broadcast %cst_19 : f32 to vector<16x16xf32>
    %50 = arith.select %19, %48, %49 : vector<16x16xi1>, vector<16x16xf32>
    %cst_20 = arith.constant dense<0xFF800000> : vector<16xf32>
    %51 = vector.multi_reduction <maximumf>, %50, %cst_20 [1] : vector<16x16xf32> to vector<16xf32>
    %52 = vector.shape_cast %51 : vector<16xf32> to vector<16x1xf32>
    %53 = vector.broadcast %52 : vector<16x1xf32> to vector<16x16xf32>
    %54 = arith.subf %50, %53 : vector<16x16xf32>
    %55 = math.exp %54 : vector<16x16xf32>
    %cst_21 = arith.constant dense<0.000000e+00> : vector<16xf32>
    %56 = vector.multi_reduction <add>, %55, %cst_21 [1] : vector<16x16xf32> to vector<16xf32>
    %57 = vector.shape_cast %56 : vector<16xf32> to vector<16x1xf32>
    %58 = tpu.reciprocal %57 {approx = true} : vector<16x1xf32> -> vector<16x1xf32>
    %59 = vector.broadcast %58 : vector<16x1xf32> to vector<16x16xf32>
    %60 = arith.mulf %55, %59 : vector<16x16xf32>
    %61 = vector.extract_strided_slice %39 {offsets = [0, 0], sizes = [16, 16], strides = [1, 1]} : vector<16x32xf32> to vector<16x16xf32>
    %62 = arith.truncf %60 : vector<16x16xf32> to vector<16x16xbf16>
    %63 = arith.truncf %61 : vector<16x16xf32> to vector<16x16xbf16>
    %cst_22 = arith.constant dense<0.000000e+00> : vector<16x16xf32>
    %64 = tpu.matmul %62, %63, %cst_22 {dimension_numbers = #tpu.dot_dimension_numbers<[1], [0], [0], [1], [0, 0, 1, 1], [], []>} : vector<16x16xbf16>, vector<16x16xbf16>, vector<16x16xf32> -> vector<16x16xf32>
    %65 = vector.extract_strided_slice %43 {offsets = [0, 0], sizes = [16, 32], strides = [1, 1]} : vector<32x32xbf16> to vector<16x32xbf16>
    %66 = arith.truncf %64 : vector<16x16xf32> to vector<16x16xbf16>
    %cst_23 = arith.constant dense<0.000000e+00> : vector<16x32xf32>
    %67 = tpu.matmul %66, %65, %cst_23 {dimension_numbers = #tpu.dot_dimension_numbers<[1], [0], [0], [1], [0, 0, 1, 1], [], []>} : vector<16x16xbf16>, vector<16x32xbf16>, vector<16x32xf32> -> vector<16x32xf32>
    %68 = vector.broadcast %24 : vector<1x32xf32> to vector<16x32xf32>
    %69 = arith.addf %68, %67 : vector<16x32xf32>
    %70 = vector.extract_strided_slice %41 {offsets = [0, 16], sizes = [16, 16], strides = [1, 1]} : vector<16x32xf32> to vector<16x16xf32>
    %71 = arith.truncf %70 : vector<16x16xf32> to vector<16x16xbf16>
    %72 = vector.extract_strided_slice %36 {offsets = [0, 16], sizes = [16, 16], strides = [1, 1]} : vector<16x32xf32> to vector<16x16xf32>
    %73 = arith.truncf %72 : vector<16x16xf32> to vector<16x16xbf16>
    %cst_24 = arith.constant dense<0.000000e+00> : vector<16x16xf32>
    %74 = tpu.matmul %71, %73, %cst_24 {dimension_numbers = #tpu.dot_dimension_numbers<[1], [1], [0], [0], [0, 0, 1, 0], [], []>} : vector<16x16xbf16>, vector<16x16xbf16>, vector<16x16xf32> -> vector<16x16xf32>
    %cst_25 = arith.constant -1.000000e+04 : f32
    %75 = vector.broadcast %cst_25 : f32 to vector<16x16xf32>
    %76 = arith.select %19, %74, %75 : vector<16x16xi1>, vector<16x16xf32>
    %cst_26 = arith.constant dense<0xFF800000> : vector<16xf32>
    %77 = vector.multi_reduction <maximumf>, %76, %cst_26 [1] : vector<16x16xf32> to vector<16xf32>
    %78 = vector.shape_cast %77 : vector<16xf32> to vector<16x1xf32>
    %79 = vector.broadcast %78 : vector<16x1xf32> to vector<16x16xf32>
    %80 = arith.subf %76, %79 : vector<16x16xf32>
    %81 = math.exp %80 : vector<16x16xf32>
    %cst_27 = arith.constant dense<0.000000e+00> : vector<16xf32>
    %82 = vector.multi_reduction <add>, %81, %cst_27 [1] : vector<16x16xf32> to vector<16xf32>
    %83 = vector.shape_cast %82 : vector<16xf32> to vector<16x1xf32>
    %84 = tpu.reciprocal %83 {approx = true} : vector<16x1xf32> -> vector<16x1xf32>
    %85 = vector.broadcast %84 : vector<16x1xf32> to vector<16x16xf32>
    %86 = arith.mulf %81, %85 : vector<16x16xf32>
    %87 = vector.extract_strided_slice %39 {offsets = [0, 16], sizes = [16, 16], strides = [1, 1]} : vector<16x32xf32> to vector<16x16xf32>
    %88 = arith.truncf %86 : vector<16x16xf32> to vector<16x16xbf16>
    %89 = arith.truncf %87 : vector<16x16xf32> to vector<16x16xbf16>
    %cst_28 = arith.constant dense<0.000000e+00> : vector<16x16xf32>
    %90 = tpu.matmul %88, %89, %cst_28 {dimension_numbers = #tpu.dot_dimension_numbers<[1], [0], [0], [1], [0, 0, 1, 1], [], []>} : vector<16x16xbf16>, vector<16x16xbf16>, vector<16x16xf32> -> vector<16x16xf32>
    %91 = vector.extract_strided_slice %43 {offsets = [16, 0], sizes = [16, 32], strides = [1, 1]} : vector<32x32xbf16> to vector<16x32xbf16>
    %92 = arith.truncf %90 : vector<16x16xf32> to vector<16x16xbf16>
    %cst_29 = arith.constant dense<0.000000e+00> : vector<16x32xf32>
    %93 = tpu.matmul %92, %91, %cst_29 {dimension_numbers = #tpu.dot_dimension_numbers<[1], [0], [0], [1], [0, 0, 1, 1], [], []>} : vector<16x16xbf16>, vector<16x32xbf16>, vector<16x32xf32> -> vector<16x32xf32>
    %94 = arith.addf %69, %93 : vector<16x32xf32>
    %95 = arith.addf %15, %94 : vector<16x32xf32>
    %cst_30 = arith.constant dense<0.000000e+00> : vector<16xf32>
    %96 = vector.multi_reduction <add>, %95, %cst_30 [1] : vector<16x32xf32> to vector<16xf32>
    %97 = vector.shape_cast %96 : vector<16xf32> to vector<16x1xf32>
    %cst_31 = arith.constant 3.200000e+01 : f32
    %98 = vector.broadcast %cst_31 : f32 to vector<16x1xf32>
    %99 = arith.divf %97, %98 : vector<16x1xf32>
    %100 = vector.broadcast %99 : vector<16x1xf32> to vector<16x32xf32>
    %101 = arith.subf %95, %100 : vector<16x32xf32>
    %102 = arith.mulf %101, %101 : vector<16x32xf32>
    %cst_32 = arith.constant dense<0.000000e+00> : vector<16xf32>
    %103 = vector.multi_reduction <add>, %102, %cst_32 [1] : vector<16x32xf32> to vector<16xf32>
    %104 = vector.shape_cast %103 : vector<16xf32> to vector<16x1xf32>
    %cst_33 = arith.constant 3.200000e+01 : f32
    %105 = vector.broadcast %cst_33 : f32 to vector<16x1xf32>
    %106 = arith.divf %104, %105 : vector<16x1xf32>
    %107 = vector.broadcast %99 : vector<16x1xf32> to vector<16x32xf32>
    %108 = arith.subf %95, %107 : vector<16x32xf32>
    %cst_34 = arith.constant 9.99999974E-6 : f32
    %109 = vector.broadcast %cst_34 : f32 to vector<16x1xf32>
    %110 = arith.addf %106, %109 : vector<16x1xf32>
    %111 = math.rsqrt %110 : vector<16x1xf32>
    %112 = vector.broadcast %111 : vector<16x1xf32> to vector<16x32xf32>
    %113 = arith.mulf %108, %112 : vector<16x32xf32>
    %114 = vector.broadcast %25 : vector<1x32xf32> to vector<16x32xf32>
    %115 = arith.mulf %113, %114 : vector<16x32xf32>
    %116 = vector.broadcast %26 : vector<1x32xf32> to vector<16x32xf32>
    %117 = arith.addf %115, %116 : vector<16x32xf32>
    %118 = vector.broadcast %5 : vector<16x1xf32> to vector<16x32xf32>
    %119 = arith.mulf %117, %118 : vector<16x32xf32>
    %c0_35 = arith.constant 0 : index
    %c0_36 = arith.constant 0 : index
    %c0_37 = arith.constant 0 : index
    %120 = vector.load %arg8[%c0_35, %c0_36, %c0_37] : memref<2x1x64xf32, #tpu.memory_space<vmem>>, vector<1x1x64xf32>
    %121 = vector.shape_cast %120 : vector<1x1x64xf32> to vector<1x64xf32>
    %c2_i32 = arith.constant 2 : i32
    %122 = tpu.dynamic_rotate %119 by %c2_i32 dim 0 : vector<16x32xf32>, i32 -> vector<16x32xf32>
    %c2_i32_38 = arith.constant 2 : i32
    %123 = vector.broadcast %c2_i32_38 : i32 to vector<16x1xi32>
    %124 = arith.cmpi sge, %16, %123 : vector<16x1xi32>
    %cst_39 = arith.constant 0.000000e+00 : f32
    %125 = vector.shape_cast %124 : vector<16x1xi1> to vector<16x1xi1>
    %126 = vector.broadcast %125 : vector<16x1xi1> to vector<16x32xi1>
    %127 = vector.broadcast %cst_39 : f32 to vector<16x32xf32>
    %128 = arith.select %126, %122, %127 : vector<16x32xi1>, vector<16x32xf32>
    %c0_40 = arith.constant 0 : index
    %c0_41 = arith.constant 0 : index
    %c0_42 = arith.constant 0 : index
    %c0_43 = arith.constant 0 : index
    %129 = vector.load %arg7[%c0_40, %c0_41, %c0_42, %c0_43] : memref<2x3x32x64xbf16, #tpu.memory_space<vmem>>, vector<1x1x32x64xbf16>
    %130 = vector.shape_cast %129 : vector<1x1x32x64xbf16> to vector<32x64xbf16>
    %131 = arith.truncf %128 : vector<16x32xf32> to vector<16x32xbf16>
    %cst_44 = arith.constant dense<0.000000e+00> : vector<16x64xf32>
    %132 = tpu.matmul %131, %130, %cst_44 {dimension_numbers = #tpu.dot_dimension_numbers<[1], [0], [0], [1], [0, 0, 1, 1], [], []>} : vector<16x32xbf16>, vector<32x64xbf16>, vector<16x64xf32> -> vector<16x64xf32>
    %133 = vector.broadcast %121 : vector<1x64xf32> to vector<16x64xf32>
    %134 = arith.addf %133, %132 : vector<16x64xf32>
    %c1_i32 = arith.constant 1 : i32
    %135 = tpu.dynamic_rotate %119 by %c1_i32 dim 0 : vector<16x32xf32>, i32 -> vector<16x32xf32>
    %c1_i32_45 = arith.constant 1 : i32
    %136 = vector.broadcast %c1_i32_45 : i32 to vector<16x1xi32>
    %137 = arith.cmpi sge, %16, %136 : vector<16x1xi32>
    %cst_46 = arith.constant 0.000000e+00 : f32
    %138 = vector.shape_cast %137 : vector<16x1xi1> to vector<16x1xi1>
    %139 = vector.broadcast %138 : vector<16x1xi1> to vector<16x32xi1>
    %140 = vector.broadcast %cst_46 : f32 to vector<16x32xf32>
    %141 = arith.select %139, %135, %140 : vector<16x32xi1>, vector<16x32xf32>
    %c0_47 = arith.constant 0 : index
    %c1 = arith.constant 1 : index
    %c0_48 = arith.constant 0 : index
    %c0_49 = arith.constant 0 : index
    %142 = vector.load %arg7[%c0_47, %c1, %c0_48, %c0_49] : memref<2x3x32x64xbf16, #tpu.memory_space<vmem>>, vector<1x1x32x64xbf16>
    %143 = vector.shape_cast %142 : vector<1x1x32x64xbf16> to vector<32x64xbf16>
    %144 = arith.truncf %141 : vector<16x32xf32> to vector<16x32xbf16>
    %cst_50 = arith.constant dense<0.000000e+00> : vector<16x64xf32>
    %145 = tpu.matmul %144, %143, %cst_50 {dimension_numbers = #tpu.dot_dimension_numbers<[1], [0], [0], [1], [0, 0, 1, 1], [], []>} : vector<16x32xbf16>, vector<32x64xbf16>, vector<16x64xf32> -> vector<16x64xf32>
    %146 = arith.addf %134, %145 : vector<16x64xf32>
    %c0_51 = arith.constant 0 : index
    %c2 = arith.constant 2 : index
    %c0_52 = arith.constant 0 : index
    %c0_53 = arith.constant 0 : index
    %147 = vector.load %arg7[%c0_51, %c2, %c0_52, %c0_53] : memref<2x3x32x64xbf16, #tpu.memory_space<vmem>>, vector<1x1x32x64xbf16>
    %148 = vector.shape_cast %147 : vector<1x1x32x64xbf16> to vector<32x64xbf16>
    %149 = arith.truncf %119 : vector<16x32xf32> to vector<16x32xbf16>
    %cst_54 = arith.constant dense<0.000000e+00> : vector<16x64xf32>
    %150 = tpu.matmul %149, %148, %cst_54 {dimension_numbers = #tpu.dot_dimension_numbers<[1], [0], [0], [1], [0, 0, 1, 1], [], []>} : vector<16x32xbf16>, vector<32x64xbf16>, vector<16x64xf32> -> vector<16x64xf32>
    %151 = arith.addf %146, %150 : vector<16x64xf32>
    %cst_55 = arith.constant 0.000000e+00 : f32
    %152 = vector.broadcast %cst_55 : f32 to vector<16x64xf32>
    %153 = arith.maximumf %151, %152 : vector<16x64xf32>
    %154 = vector.broadcast %5 : vector<16x1xf32> to vector<16x64xf32>
    %155 = arith.mulf %153, %154 : vector<16x64xf32>
    %c2_i32_56 = arith.constant 2 : i32
    %156 = tpu.dynamic_rotate %155 by %c2_i32_56 dim 0 : vector<16x64xf32>, i32 -> vector<16x64xf32>
    %c2_i32_57 = arith.constant 2 : i32
    %157 = vector.broadcast %c2_i32_57 : i32 to vector<16x1xi32>
    %158 = arith.cmpi sge, %16, %157 : vector<16x1xi32>
    %cst_58 = arith.constant 0.000000e+00 : f32
    %159 = vector.shape_cast %158 : vector<16x1xi1> to vector<16x1xi1>
    %160 = vector.broadcast %159 : vector<16x1xi1> to vector<16x64xi1>
    %161 = vector.broadcast %cst_58 : f32 to vector<16x64xf32>
    %162 = arith.select %160, %156, %161 : vector<16x64xi1>, vector<16x64xf32>
    %c0_59 = arith.constant 0 : index
    %c0_60 = arith.constant 0 : index
    %c0_61 = arith.constant 0 : index
    %c0_62 = arith.constant 0 : index
    %163 = vector.load %arg9[%c0_59, %c0_60, %c0_61, %c0_62] : memref<2x3x64x32xbf16, #tpu.memory_space<vmem>>, vector<1x1x64x32xbf16>
    %164 = vector.shape_cast %163 : vector<1x1x64x32xbf16> to vector<64x32xbf16>
    %165 = arith.truncf %162 : vector<16x64xf32> to vector<16x64xbf16>
    %cst_63 = arith.constant dense<0.000000e+00> : vector<16x32xf32>
    %166 = tpu.matmul %165, %164, %cst_63 {dimension_numbers = #tpu.dot_dimension_numbers<[1], [0], [0], [1], [0, 0, 1, 1], [], []>} : vector<16x64xbf16>, vector<64x32xbf16>, vector<16x32xf32> -> vector<16x32xf32>
    %167 = vector.broadcast %29 : vector<1x32xf32> to vector<16x32xf32>
    %168 = arith.addf %167, %166 : vector<16x32xf32>
    %c1_i32_64 = arith.constant 1 : i32
    %169 = tpu.dynamic_rotate %155 by %c1_i32_64 dim 0 : vector<16x64xf32>, i32 -> vector<16x64xf32>
    %c1_i32_65 = arith.constant 1 : i32
    %170 = vector.broadcast %c1_i32_65 : i32 to vector<16x1xi32>
    %171 = arith.cmpi sge, %16, %170 : vector<16x1xi32>
    %cst_66 = arith.constant 0.000000e+00 : f32
    %172 = vector.shape_cast %171 : vector<16x1xi1> to vector<16x1xi1>
    %173 = vector.broadcast %172 : vector<16x1xi1> to vector<16x64xi1>
    %174 = vector.broadcast %cst_66 : f32 to vector<16x64xf32>
    %175 = arith.select %173, %169, %174 : vector<16x64xi1>, vector<16x64xf32>
    %c0_67 = arith.constant 0 : index
    %c1_68 = arith.constant 1 : index
    %c0_69 = arith.constant 0 : index
    %c0_70 = arith.constant 0 : index
    %176 = vector.load %arg9[%c0_67, %c1_68, %c0_69, %c0_70] : memref<2x3x64x32xbf16, #tpu.memory_space<vmem>>, vector<1x1x64x32xbf16>
    %177 = vector.shape_cast %176 : vector<1x1x64x32xbf16> to vector<64x32xbf16>
    %178 = arith.truncf %175 : vector<16x64xf32> to vector<16x64xbf16>
    %cst_71 = arith.constant dense<0.000000e+00> : vector<16x32xf32>
    %179 = tpu.matmul %178, %177, %cst_71 {dimension_numbers = #tpu.dot_dimension_numbers<[1], [0], [0], [1], [0, 0, 1, 1], [], []>} : vector<16x64xbf16>, vector<64x32xbf16>, vector<16x32xf32> -> vector<16x32xf32>
    %180 = arith.addf %168, %179 : vector<16x32xf32>
    %c0_72 = arith.constant 0 : index
    %c2_73 = arith.constant 2 : index
    %c0_74 = arith.constant 0 : index
    %c0_75 = arith.constant 0 : index
    %181 = vector.load %arg9[%c0_72, %c2_73, %c0_74, %c0_75] : memref<2x3x64x32xbf16, #tpu.memory_space<vmem>>, vector<1x1x64x32xbf16>
    %182 = vector.shape_cast %181 : vector<1x1x64x32xbf16> to vector<64x32xbf16>
    %183 = arith.truncf %155 : vector<16x64xf32> to vector<16x64xbf16>
    %cst_76 = arith.constant dense<0.000000e+00> : vector<16x32xf32>
    %184 = tpu.matmul %183, %182, %cst_76 {dimension_numbers = #tpu.dot_dimension_numbers<[1], [0], [0], [1], [0, 0, 1, 1], [], []>} : vector<16x64xbf16>, vector<64x32xbf16>, vector<16x32xf32> -> vector<16x32xf32>
    %185 = arith.addf %180, %184 : vector<16x32xf32>
    %186 = vector.broadcast %5 : vector<16x1xf32> to vector<16x32xf32>
    %187 = arith.mulf %185, %186 : vector<16x32xf32>
    %188 = arith.addf %117, %187 : vector<16x32xf32>
    %cst_77 = arith.constant dense<0.000000e+00> : vector<16xf32>
    %189 = vector.multi_reduction <add>, %188, %cst_77 [1] : vector<16x32xf32> to vector<16xf32>
    %190 = vector.shape_cast %189 : vector<16xf32> to vector<16x1xf32>
    %cst_78 = arith.constant 3.200000e+01 : f32
    %191 = vector.broadcast %cst_78 : f32 to vector<16x1xf32>
    %192 = arith.divf %190, %191 : vector<16x1xf32>
    %193 = vector.broadcast %192 : vector<16x1xf32> to vector<16x32xf32>
    %194 = arith.subf %188, %193 : vector<16x32xf32>
    %195 = arith.mulf %194, %194 : vector<16x32xf32>
    %cst_79 = arith.constant dense<0.000000e+00> : vector<16xf32>
    %196 = vector.multi_reduction <add>, %195, %cst_79 [1] : vector<16x32xf32> to vector<16xf32>
    %197 = vector.shape_cast %196 : vector<16xf32> to vector<16x1xf32>
    %cst_80 = arith.constant 3.200000e+01 : f32
    %198 = vector.broadcast %cst_80 : f32 to vector<16x1xf32>
    %199 = arith.divf %197, %198 : vector<16x1xf32>
    %200 = vector.broadcast %192 : vector<16x1xf32> to vector<16x32xf32>
    %201 = arith.subf %188, %200 : vector<16x32xf32>
    %cst_81 = arith.constant 9.99999974E-6 : f32
    %202 = vector.broadcast %cst_81 : f32 to vector<16x1xf32>
    %203 = arith.addf %199, %202 : vector<16x1xf32>
    %204 = math.rsqrt %203 : vector<16x1xf32>
    %205 = vector.broadcast %204 : vector<16x1xf32> to vector<16x32xf32>
    %206 = arith.mulf %201, %205 : vector<16x32xf32>
    %207 = vector.broadcast %27 : vector<1x32xf32> to vector<16x32xf32>
    %208 = arith.mulf %206, %207 : vector<16x32xf32>
    %209 = vector.broadcast %28 : vector<1x32xf32> to vector<16x32xf32>
    %210 = arith.addf %208, %209 : vector<16x32xf32>
    %c1_82 = arith.constant 1 : index
    %c0_83 = arith.constant 0 : index
    %c0_84 = arith.constant 0 : index
    %211 = vector.load %arg6[%c1_82, %c0_83, %c0_84] : memref<2x8x32xf32, #tpu.memory_space<vmem>>, vector<1x8x32xf32>
    %212 = vector.shape_cast %211 : vector<1x8x32xf32> to vector<8x32xf32>
    %213 = vector.extract_strided_slice %212 {offsets = [0, 0], sizes = [1, 32], strides = [1, 1]} : vector<8x32xf32> to vector<1x32xf32>
    %214 = vector.extract_strided_slice %212 {offsets = [1, 0], sizes = [1, 32], strides = [1, 1]} : vector<8x32xf32> to vector<1x32xf32>
    %215 = vector.extract_strided_slice %212 {offsets = [2, 0], sizes = [1, 32], strides = [1, 1]} : vector<8x32xf32> to vector<1x32xf32>
    %216 = vector.extract_strided_slice %212 {offsets = [3, 0], sizes = [1, 32], strides = [1, 1]} : vector<8x32xf32> to vector<1x32xf32>
    %217 = vector.extract_strided_slice %212 {offsets = [4, 0], sizes = [1, 32], strides = [1, 1]} : vector<8x32xf32> to vector<1x32xf32>
    %218 = vector.extract_strided_slice %212 {offsets = [5, 0], sizes = [1, 32], strides = [1, 1]} : vector<8x32xf32> to vector<1x32xf32>
    %219 = vector.extract_strided_slice %212 {offsets = [6, 0], sizes = [1, 32], strides = [1, 1]} : vector<8x32xf32> to vector<1x32xf32>
    %220 = vector.extract_strided_slice %212 {offsets = [7, 0], sizes = [1, 32], strides = [1, 1]} : vector<8x32xf32> to vector<1x32xf32>
    %c1_85 = arith.constant 1 : index
    %c0_86 = arith.constant 0 : index
    %c0_87 = arith.constant 0 : index
    %221 = vector.load %arg4[%c1_85, %c0_86, %c0_87] : memref<2x32x64xbf16, #tpu.memory_space<vmem>>, vector<1x32x64xbf16>
    %222 = vector.shape_cast %221 : vector<1x32x64xbf16> to vector<32x64xbf16>
    %223 = arith.truncf %210 : vector<16x32xf32> to vector<16x32xbf16>
    %cst_88 = arith.constant dense<0.000000e+00> : vector<16x64xf32>
    %224 = tpu.matmul %223, %222, %cst_88 {dimension_numbers = #tpu.dot_dimension_numbers<[1], [0], [0], [1], [0, 0, 1, 1], [], []>} : vector<16x32xbf16>, vector<32x64xbf16>, vector<16x64xf32> -> vector<16x64xf32>
    %225 = vector.extract_strided_slice %224 {offsets = [0, 0], sizes = [16, 32], strides = [1, 1]} : vector<16x64xf32> to vector<16x32xf32>
    %226 = vector.broadcast %213 : vector<1x32xf32> to vector<16x32xf32>
    %227 = arith.addf %225, %226 : vector<16x32xf32>
    %228 = vector.extract_strided_slice %224 {offsets = [0, 32], sizes = [16, 32], strides = [1, 1]} : vector<16x64xf32> to vector<16x32xf32>
    %229 = vector.broadcast %214 : vector<1x32xf32> to vector<16x32xf32>
    %230 = arith.addf %228, %229 : vector<16x32xf32>
    %cst_89 = arith.constant 2.500000e-01 : f32
    %231 = vector.broadcast %cst_89 : f32 to vector<16x32xf32>
    %232 = arith.mulf %227, %231 : vector<16x32xf32>
    %c1_90 = arith.constant 1 : index
    %c0_91 = arith.constant 0 : index
    %c0_92 = arith.constant 0 : index
    %233 = vector.load %arg5[%c1_90, %c0_91, %c0_92] : memref<2x32x32xbf16, #tpu.memory_space<vmem>>, vector<1x32x32xbf16>
    %234 = vector.shape_cast %233 : vector<1x32x32xbf16> to vector<32x32xbf16>
    %235 = vector.extract_strided_slice %232 {offsets = [0, 0], sizes = [16, 16], strides = [1, 1]} : vector<16x32xf32> to vector<16x16xf32>
    %236 = arith.truncf %235 : vector<16x16xf32> to vector<16x16xbf16>
    %237 = vector.extract_strided_slice %227 {offsets = [0, 0], sizes = [16, 16], strides = [1, 1]} : vector<16x32xf32> to vector<16x16xf32>
    %238 = arith.truncf %237 : vector<16x16xf32> to vector<16x16xbf16>
    %cst_93 = arith.constant dense<0.000000e+00> : vector<16x16xf32>
    %239 = tpu.matmul %236, %238, %cst_93 {dimension_numbers = #tpu.dot_dimension_numbers<[1], [1], [0], [0], [0, 0, 1, 0], [], []>} : vector<16x16xbf16>, vector<16x16xbf16>, vector<16x16xf32> -> vector<16x16xf32>
    %cst_94 = arith.constant -1.000000e+04 : f32
    %240 = vector.broadcast %cst_94 : f32 to vector<16x16xf32>
    %241 = arith.select %19, %239, %240 : vector<16x16xi1>, vector<16x16xf32>
    %cst_95 = arith.constant dense<0xFF800000> : vector<16xf32>
    %242 = vector.multi_reduction <maximumf>, %241, %cst_95 [1] : vector<16x16xf32> to vector<16xf32>
    %243 = vector.shape_cast %242 : vector<16xf32> to vector<16x1xf32>
    %244 = vector.broadcast %243 : vector<16x1xf32> to vector<16x16xf32>
    %245 = arith.subf %241, %244 : vector<16x16xf32>
    %246 = math.exp %245 : vector<16x16xf32>
    %cst_96 = arith.constant dense<0.000000e+00> : vector<16xf32>
    %247 = vector.multi_reduction <add>, %246, %cst_96 [1] : vector<16x16xf32> to vector<16xf32>
    %248 = vector.shape_cast %247 : vector<16xf32> to vector<16x1xf32>
    %249 = tpu.reciprocal %248 {approx = true} : vector<16x1xf32> -> vector<16x1xf32>
    %250 = vector.broadcast %249 : vector<16x1xf32> to vector<16x16xf32>
    %251 = arith.mulf %246, %250 : vector<16x16xf32>
    %252 = vector.extract_strided_slice %230 {offsets = [0, 0], sizes = [16, 16], strides = [1, 1]} : vector<16x32xf32> to vector<16x16xf32>
    %253 = arith.truncf %251 : vector<16x16xf32> to vector<16x16xbf16>
    %254 = arith.truncf %252 : vector<16x16xf32> to vector<16x16xbf16>
    %cst_97 = arith.constant dense<0.000000e+00> : vector<16x16xf32>
    %255 = tpu.matmul %253, %254, %cst_97 {dimension_numbers = #tpu.dot_dimension_numbers<[1], [0], [0], [1], [0, 0, 1, 1], [], []>} : vector<16x16xbf16>, vector<16x16xbf16>, vector<16x16xf32> -> vector<16x16xf32>
    %256 = vector.extract_strided_slice %234 {offsets = [0, 0], sizes = [16, 32], strides = [1, 1]} : vector<32x32xbf16> to vector<16x32xbf16>
    %257 = arith.truncf %255 : vector<16x16xf32> to vector<16x16xbf16>
    %cst_98 = arith.constant dense<0.000000e+00> : vector<16x32xf32>
    %258 = tpu.matmul %257, %256, %cst_98 {dimension_numbers = #tpu.dot_dimension_numbers<[1], [0], [0], [1], [0, 0, 1, 1], [], []>} : vector<16x16xbf16>, vector<16x32xbf16>, vector<16x32xf32> -> vector<16x32xf32>
    %259 = vector.broadcast %215 : vector<1x32xf32> to vector<16x32xf32>
    %260 = arith.addf %259, %258 : vector<16x32xf32>
    %261 = vector.extract_strided_slice %232 {offsets = [0, 16], sizes = [16, 16], strides = [1, 1]} : vector<16x32xf32> to vector<16x16xf32>
    %262 = arith.truncf %261 : vector<16x16xf32> to vector<16x16xbf16>
    %263 = vector.extract_strided_slice %227 {offsets = [0, 16], sizes = [16, 16], strides = [1, 1]} : vector<16x32xf32> to vector<16x16xf32>
    %264 = arith.truncf %263 : vector<16x16xf32> to vector<16x16xbf16>
    %cst_99 = arith.constant dense<0.000000e+00> : vector<16x16xf32>
    %265 = tpu.matmul %262, %264, %cst_99 {dimension_numbers = #tpu.dot_dimension_numbers<[1], [1], [0], [0], [0, 0, 1, 0], [], []>} : vector<16x16xbf16>, vector<16x16xbf16>, vector<16x16xf32> -> vector<16x16xf32>
    %cst_100 = arith.constant -1.000000e+04 : f32
    %266 = vector.broadcast %cst_100 : f32 to vector<16x16xf32>
    %267 = arith.select %19, %265, %266 : vector<16x16xi1>, vector<16x16xf32>
    %cst_101 = arith.constant dense<0xFF800000> : vector<16xf32>
    %268 = vector.multi_reduction <maximumf>, %267, %cst_101 [1] : vector<16x16xf32> to vector<16xf32>
    %269 = vector.shape_cast %268 : vector<16xf32> to vector<16x1xf32>
    %270 = vector.broadcast %269 : vector<16x1xf32> to vector<16x16xf32>
    %271 = arith.subf %267, %270 : vector<16x16xf32>
    %272 = math.exp %271 : vector<16x16xf32>
    %cst_102 = arith.constant dense<0.000000e+00> : vector<16xf32>
    %273 = vector.multi_reduction <add>, %272, %cst_102 [1] : vector<16x16xf32> to vector<16xf32>
    %274 = vector.shape_cast %273 : vector<16xf32> to vector<16x1xf32>
    %275 = tpu.reciprocal %274 {approx = true} : vector<16x1xf32> -> vector<16x1xf32>
    %276 = vector.broadcast %275 : vector<16x1xf32> to vector<16x16xf32>
    %277 = arith.mulf %272, %276 : vector<16x16xf32>
    %278 = vector.extract_strided_slice %230 {offsets = [0, 16], sizes = [16, 16], strides = [1, 1]} : vector<16x32xf32> to vector<16x16xf32>
    %279 = arith.truncf %277 : vector<16x16xf32> to vector<16x16xbf16>
    %280 = arith.truncf %278 : vector<16x16xf32> to vector<16x16xbf16>
    %cst_103 = arith.constant dense<0.000000e+00> : vector<16x16xf32>
    %281 = tpu.matmul %279, %280, %cst_103 {dimension_numbers = #tpu.dot_dimension_numbers<[1], [0], [0], [1], [0, 0, 1, 1], [], []>} : vector<16x16xbf16>, vector<16x16xbf16>, vector<16x16xf32> -> vector<16x16xf32>
    %282 = vector.extract_strided_slice %234 {offsets = [16, 0], sizes = [16, 32], strides = [1, 1]} : vector<32x32xbf16> to vector<16x32xbf16>
    %283 = arith.truncf %281 : vector<16x16xf32> to vector<16x16xbf16>
    %cst_104 = arith.constant dense<0.000000e+00> : vector<16x32xf32>
    %284 = tpu.matmul %283, %282, %cst_104 {dimension_numbers = #tpu.dot_dimension_numbers<[1], [0], [0], [1], [0, 0, 1, 1], [], []>} : vector<16x16xbf16>, vector<16x32xbf16>, vector<16x32xf32> -> vector<16x32xf32>
    %285 = arith.addf %260, %284 : vector<16x32xf32>
    %286 = arith.addf %210, %285 : vector<16x32xf32>
    %cst_105 = arith.constant dense<0.000000e+00> : vector<16xf32>
    %287 = vector.multi_reduction <add>, %286, %cst_105 [1] : vector<16x32xf32> to vector<16xf32>
    %288 = vector.shape_cast %287 : vector<16xf32> to vector<16x1xf32>
    %cst_106 = arith.constant 3.200000e+01 : f32
    %289 = vector.broadcast %cst_106 : f32 to vector<16x1xf32>
    %290 = arith.divf %288, %289 : vector<16x1xf32>
    %291 = vector.broadcast %290 : vector<16x1xf32> to vector<16x32xf32>
    %292 = arith.subf %286, %291 : vector<16x32xf32>
    %293 = arith.mulf %292, %292 : vector<16x32xf32>
    %cst_107 = arith.constant dense<0.000000e+00> : vector<16xf32>
    %294 = vector.multi_reduction <add>, %293, %cst_107 [1] : vector<16x32xf32> to vector<16xf32>
    %295 = vector.shape_cast %294 : vector<16xf32> to vector<16x1xf32>
    %cst_108 = arith.constant 3.200000e+01 : f32
    %296 = vector.broadcast %cst_108 : f32 to vector<16x1xf32>
    %297 = arith.divf %295, %296 : vector<16x1xf32>
    %298 = vector.broadcast %290 : vector<16x1xf32> to vector<16x32xf32>
    %299 = arith.subf %286, %298 : vector<16x32xf32>
    %cst_109 = arith.constant 9.99999974E-6 : f32
    %300 = vector.broadcast %cst_109 : f32 to vector<16x1xf32>
    %301 = arith.addf %297, %300 : vector<16x1xf32>
    %302 = math.rsqrt %301 : vector<16x1xf32>
    %303 = vector.broadcast %302 : vector<16x1xf32> to vector<16x32xf32>
    %304 = arith.mulf %299, %303 : vector<16x32xf32>
    %305 = vector.broadcast %216 : vector<1x32xf32> to vector<16x32xf32>
    %306 = arith.mulf %304, %305 : vector<16x32xf32>
    %307 = vector.broadcast %217 : vector<1x32xf32> to vector<16x32xf32>
    %308 = arith.addf %306, %307 : vector<16x32xf32>
    %309 = vector.broadcast %5 : vector<16x1xf32> to vector<16x32xf32>
    %310 = arith.mulf %308, %309 : vector<16x32xf32>
    %c1_110 = arith.constant 1 : index
    %c0_111 = arith.constant 0 : index
    %c0_112 = arith.constant 0 : index
    %311 = vector.load %arg8[%c1_110, %c0_111, %c0_112] : memref<2x1x64xf32, #tpu.memory_space<vmem>>, vector<1x1x64xf32>
    %312 = vector.shape_cast %311 : vector<1x1x64xf32> to vector<1x64xf32>
    %c2_i32_113 = arith.constant 2 : i32
    %313 = tpu.dynamic_rotate %310 by %c2_i32_113 dim 0 : vector<16x32xf32>, i32 -> vector<16x32xf32>
    %c2_i32_114 = arith.constant 2 : i32
    %314 = vector.broadcast %c2_i32_114 : i32 to vector<16x1xi32>
    %315 = arith.cmpi sge, %16, %314 : vector<16x1xi32>
    %cst_115 = arith.constant 0.000000e+00 : f32
    %316 = vector.shape_cast %315 : vector<16x1xi1> to vector<16x1xi1>
    %317 = vector.broadcast %316 : vector<16x1xi1> to vector<16x32xi1>
    %318 = vector.broadcast %cst_115 : f32 to vector<16x32xf32>
    %319 = arith.select %317, %313, %318 : vector<16x32xi1>, vector<16x32xf32>
    %c1_116 = arith.constant 1 : index
    %c0_117 = arith.constant 0 : index
    %c0_118 = arith.constant 0 : index
    %c0_119 = arith.constant 0 : index
    %320 = vector.load %arg7[%c1_116, %c0_117, %c0_118, %c0_119] : memref<2x3x32x64xbf16, #tpu.memory_space<vmem>>, vector<1x1x32x64xbf16>
    %321 = vector.shape_cast %320 : vector<1x1x32x64xbf16> to vector<32x64xbf16>
    %322 = arith.truncf %319 : vector<16x32xf32> to vector<16x32xbf16>
    %cst_120 = arith.constant dense<0.000000e+00> : vector<16x64xf32>
    %323 = tpu.matmul %322, %321, %cst_120 {dimension_numbers = #tpu.dot_dimension_numbers<[1], [0], [0], [1], [0, 0, 1, 1], [], []>} : vector<16x32xbf16>, vector<32x64xbf16>, vector<16x64xf32> -> vector<16x64xf32>
    %324 = vector.broadcast %312 : vector<1x64xf32> to vector<16x64xf32>
    %325 = arith.addf %324, %323 : vector<16x64xf32>
    %c1_i32_121 = arith.constant 1 : i32
    %326 = tpu.dynamic_rotate %310 by %c1_i32_121 dim 0 : vector<16x32xf32>, i32 -> vector<16x32xf32>
    %c1_i32_122 = arith.constant 1 : i32
    %327 = vector.broadcast %c1_i32_122 : i32 to vector<16x1xi32>
    %328 = arith.cmpi sge, %16, %327 : vector<16x1xi32>
    %cst_123 = arith.constant 0.000000e+00 : f32
    %329 = vector.shape_cast %328 : vector<16x1xi1> to vector<16x1xi1>
    %330 = vector.broadcast %329 : vector<16x1xi1> to vector<16x32xi1>
    %331 = vector.broadcast %cst_123 : f32 to vector<16x32xf32>
    %332 = arith.select %330, %326, %331 : vector<16x32xi1>, vector<16x32xf32>
    %c1_124 = arith.constant 1 : index
    %c1_125 = arith.constant 1 : index
    %c0_126 = arith.constant 0 : index
    %c0_127 = arith.constant 0 : index
    %333 = vector.load %arg7[%c1_124, %c1_125, %c0_126, %c0_127] : memref<2x3x32x64xbf16, #tpu.memory_space<vmem>>, vector<1x1x32x64xbf16>
    %334 = vector.shape_cast %333 : vector<1x1x32x64xbf16> to vector<32x64xbf16>
    %335 = arith.truncf %332 : vector<16x32xf32> to vector<16x32xbf16>
    %cst_128 = arith.constant dense<0.000000e+00> : vector<16x64xf32>
    %336 = tpu.matmul %335, %334, %cst_128 {dimension_numbers = #tpu.dot_dimension_numbers<[1], [0], [0], [1], [0, 0, 1, 1], [], []>} : vector<16x32xbf16>, vector<32x64xbf16>, vector<16x64xf32> -> vector<16x64xf32>
    %337 = arith.addf %325, %336 : vector<16x64xf32>
    %c1_129 = arith.constant 1 : index
    %c2_130 = arith.constant 2 : index
    %c0_131 = arith.constant 0 : index
    %c0_132 = arith.constant 0 : index
    %338 = vector.load %arg7[%c1_129, %c2_130, %c0_131, %c0_132] : memref<2x3x32x64xbf16, #tpu.memory_space<vmem>>, vector<1x1x32x64xbf16>
    %339 = vector.shape_cast %338 : vector<1x1x32x64xbf16> to vector<32x64xbf16>
    %340 = arith.truncf %310 : vector<16x32xf32> to vector<16x32xbf16>
    %cst_133 = arith.constant dense<0.000000e+00> : vector<16x64xf32>
    %341 = tpu.matmul %340, %339, %cst_133 {dimension_numbers = #tpu.dot_dimension_numbers<[1], [0], [0], [1], [0, 0, 1, 1], [], []>} : vector<16x32xbf16>, vector<32x64xbf16>, vector<16x64xf32> -> vector<16x64xf32>
    %342 = arith.addf %337, %341 : vector<16x64xf32>
    %cst_134 = arith.constant 0.000000e+00 : f32
    %343 = vector.broadcast %cst_134 : f32 to vector<16x64xf32>
    %344 = arith.maximumf %342, %343 : vector<16x64xf32>
    %345 = vector.broadcast %5 : vector<16x1xf32> to vector<16x64xf32>
    %346 = arith.mulf %344, %345 : vector<16x64xf32>
    %c2_i32_135 = arith.constant 2 : i32
    %347 = tpu.dynamic_rotate %346 by %c2_i32_135 dim 0 : vector<16x64xf32>, i32 -> vector<16x64xf32>
    %c2_i32_136 = arith.constant 2 : i32
    %348 = vector.broadcast %c2_i32_136 : i32 to vector<16x1xi32>
    %349 = arith.cmpi sge, %16, %348 : vector<16x1xi32>
    %cst_137 = arith.constant 0.000000e+00 : f32
    %350 = vector.shape_cast %349 : vector<16x1xi1> to vector<16x1xi1>
    %351 = vector.broadcast %350 : vector<16x1xi1> to vector<16x64xi1>
    %352 = vector.broadcast %cst_137 : f32 to vector<16x64xf32>
    %353 = arith.select %351, %347, %352 : vector<16x64xi1>, vector<16x64xf32>
    %c1_138 = arith.constant 1 : index
    %c0_139 = arith.constant 0 : index
    %c0_140 = arith.constant 0 : index
    %c0_141 = arith.constant 0 : index
    %354 = vector.load %arg9[%c1_138, %c0_139, %c0_140, %c0_141] : memref<2x3x64x32xbf16, #tpu.memory_space<vmem>>, vector<1x1x64x32xbf16>
    %355 = vector.shape_cast %354 : vector<1x1x64x32xbf16> to vector<64x32xbf16>
    %356 = arith.truncf %353 : vector<16x64xf32> to vector<16x64xbf16>
    %cst_142 = arith.constant dense<0.000000e+00> : vector<16x32xf32>
    %357 = tpu.matmul %356, %355, %cst_142 {dimension_numbers = #tpu.dot_dimension_numbers<[1], [0], [0], [1], [0, 0, 1, 1], [], []>} : vector<16x64xbf16>, vector<64x32xbf16>, vector<16x32xf32> -> vector<16x32xf32>
    %358 = vector.broadcast %220 : vector<1x32xf32> to vector<16x32xf32>
    %359 = arith.addf %358, %357 : vector<16x32xf32>
    %c1_i32_143 = arith.constant 1 : i32
    %360 = tpu.dynamic_rotate %346 by %c1_i32_143 dim 0 : vector<16x64xf32>, i32 -> vector<16x64xf32>
    %c1_i32_144 = arith.constant 1 : i32
    %361 = vector.broadcast %c1_i32_144 : i32 to vector<16x1xi32>
    %362 = arith.cmpi sge, %16, %361 : vector<16x1xi32>
    %cst_145 = arith.constant 0.000000e+00 : f32
    %363 = vector.shape_cast %362 : vector<16x1xi1> to vector<16x1xi1>
    %364 = vector.broadcast %363 : vector<16x1xi1> to vector<16x64xi1>
    %365 = vector.broadcast %cst_145 : f32 to vector<16x64xf32>
    %366 = arith.select %364, %360, %365 : vector<16x64xi1>, vector<16x64xf32>
    %c1_146 = arith.constant 1 : index
    %c1_147 = arith.constant 1 : index
    %c0_148 = arith.constant 0 : index
    %c0_149 = arith.constant 0 : index
    %367 = vector.load %arg9[%c1_146, %c1_147, %c0_148, %c0_149] : memref<2x3x64x32xbf16, #tpu.memory_space<vmem>>, vector<1x1x64x32xbf16>
    %368 = vector.shape_cast %367 : vector<1x1x64x32xbf16> to vector<64x32xbf16>
    %369 = arith.truncf %366 : vector<16x64xf32> to vector<16x64xbf16>
    %cst_150 = arith.constant dense<0.000000e+00> : vector<16x32xf32>
    %370 = tpu.matmul %369, %368, %cst_150 {dimension_numbers = #tpu.dot_dimension_numbers<[1], [0], [0], [1], [0, 0, 1, 1], [], []>} : vector<16x64xbf16>, vector<64x32xbf16>, vector<16x32xf32> -> vector<16x32xf32>
    %371 = arith.addf %359, %370 : vector<16x32xf32>
    %c1_151 = arith.constant 1 : index
    %c2_152 = arith.constant 2 : index
    %c0_153 = arith.constant 0 : index
    %c0_154 = arith.constant 0 : index
    %372 = vector.load %arg9[%c1_151, %c2_152, %c0_153, %c0_154] : memref<2x3x64x32xbf16, #tpu.memory_space<vmem>>, vector<1x1x64x32xbf16>
    %373 = vector.shape_cast %372 : vector<1x1x64x32xbf16> to vector<64x32xbf16>
    %374 = arith.truncf %346 : vector<16x64xf32> to vector<16x64xbf16>
    %cst_155 = arith.constant dense<0.000000e+00> : vector<16x32xf32>
    %375 = tpu.matmul %374, %373, %cst_155 {dimension_numbers = #tpu.dot_dimension_numbers<[1], [0], [0], [1], [0, 0, 1, 1], [], []>} : vector<16x64xbf16>, vector<64x32xbf16>, vector<16x32xf32> -> vector<16x32xf32>
    %376 = arith.addf %371, %375 : vector<16x32xf32>
    %377 = vector.broadcast %5 : vector<16x1xf32> to vector<16x32xf32>
    %378 = arith.mulf %376, %377 : vector<16x32xf32>
    %379 = arith.addf %308, %378 : vector<16x32xf32>
    %cst_156 = arith.constant dense<0.000000e+00> : vector<16xf32>
    %380 = vector.multi_reduction <add>, %379, %cst_156 [1] : vector<16x32xf32> to vector<16xf32>
    %381 = vector.shape_cast %380 : vector<16xf32> to vector<16x1xf32>
    %cst_157 = arith.constant 3.200000e+01 : f32
    %382 = vector.broadcast %cst_157 : f32 to vector<16x1xf32>
    %383 = arith.divf %381, %382 : vector<16x1xf32>
    %384 = vector.broadcast %383 : vector<16x1xf32> to vector<16x32xf32>
    %385 = arith.subf %379, %384 : vector<16x32xf32>
    %386 = arith.mulf %385, %385 : vector<16x32xf32>
    %cst_158 = arith.constant dense<0.000000e+00> : vector<16xf32>
    %387 = vector.multi_reduction <add>, %386, %cst_158 [1] : vector<16x32xf32> to vector<16xf32>
    %388 = vector.shape_cast %387 : vector<16xf32> to vector<16x1xf32>
    %cst_159 = arith.constant 3.200000e+01 : f32
    %389 = vector.broadcast %cst_159 : f32 to vector<16x1xf32>
    %390 = arith.divf %388, %389 : vector<16x1xf32>
    %391 = vector.broadcast %383 : vector<16x1xf32> to vector<16x32xf32>
    %392 = arith.subf %379, %391 : vector<16x32xf32>
    %cst_160 = arith.constant 9.99999974E-6 : f32
    %393 = vector.broadcast %cst_160 : f32 to vector<16x1xf32>
    %394 = arith.addf %390, %393 : vector<16x1xf32>
    %395 = math.rsqrt %394 : vector<16x1xf32>
    %396 = vector.broadcast %395 : vector<16x1xf32> to vector<16x32xf32>
    %397 = arith.mulf %392, %396 : vector<16x32xf32>
    %398 = vector.broadcast %218 : vector<1x32xf32> to vector<16x32xf32>
    %399 = arith.mulf %397, %398 : vector<16x32xf32>
    %400 = vector.broadcast %219 : vector<1x32xf32> to vector<16x32xf32>
    %401 = arith.addf %399, %400 : vector<16x32xf32>
    %402 = vector.broadcast %5 : vector<16x1xf32> to vector<16x32xf32>
    %403 = arith.mulf %401, %402 : vector<16x32xf32>
    %404 = arith.addf %403, %15 : vector<16x32xf32>
    %c0_161 = arith.constant 0 : index
    %c0_162 = arith.constant 0 : index
    %405 = vector.load %arg10[%c0_161, %c0_162] : memref<33x4xf32, #tpu.memory_space<vmem>>, vector<33x4xf32>
    %406 = vector.extract_strided_slice %405 {offsets = [0, 0], sizes = [32, 4], strides = [1, 1]} : vector<33x4xf32> to vector<32x4xf32>
    %407 = arith.truncf %404 : vector<16x32xf32> to vector<16x32xbf16>
    %408 = arith.truncf %406 : vector<32x4xf32> to vector<32x4xbf16>
    %cst_163 = arith.constant dense<0.000000e+00> : vector<16x4xf32>
    %409 = tpu.matmul %407, %408, %cst_163 {dimension_numbers = #tpu.dot_dimension_numbers<[1], [0], [0], [1], [0, 0, 1, 1], [], []>} : vector<16x32xbf16>, vector<32x4xbf16>, vector<16x4xf32> -> vector<16x4xf32>
    %410 = vector.extract_strided_slice %405 {offsets = [32, 0], sizes = [1, 4], strides = [1, 1]} : vector<33x4xf32> to vector<1x4xf32>
    %411 = vector.broadcast %410 : vector<1x4xf32> to vector<16x4xf32>
    %412 = arith.addf %409, %411 : vector<16x4xf32>
    %413 = vector.broadcast %5 : vector<16x1xf32> to vector<16x4xf32>
    %414 = arith.mulf %412, %413 : vector<16x4xf32>
    %415 = vector.extract_strided_slice %414 {offsets = [0, 0], sizes = [16, 2], strides = [1, 1]} : vector<16x4xf32> to vector<16x2xf32>
    %416 = vector.extract_strided_slice %414 {offsets = [0, 2], sizes = [16, 2], strides = [1, 1]} : vector<16x4xf32> to vector<16x2xf32>
    %417 = math.exp %416 : vector<16x2xf32>
    %418 = arith.mulf %3, %417 : vector<16x2xf32>
    %419 = vector.broadcast %5 : vector<16x1xf32> to vector<16x2xf32>
    %420 = arith.mulf %418, %419 : vector<16x2xf32>
    %421 = arith.addf %415, %420 : vector<16x2xf32>
    %422 = tpu.concatenate %2, %421 in 1 : vector<16x2xf32>, vector<16x2xf32> -> vector<16x4xf32>
    %c0_164 = arith.constant 0 : index
    %c0_165 = arith.constant 0 : index
    %c0_166 = arith.constant 0 : index
    %423 = vector.load %arg11[%c0_164, %c0_165, %c0_166] : memref<1x16x4xf32, #tpu.memory_space<vmem>>, vector<1x16x4xf32>
    %424 = vector.shape_cast %423 : vector<1x16x4xf32> to vector<16x4xf32>
    %425 = vector.shape_cast %422 : vector<16x4xf32> to vector<1x16x4xf32>
    tpu.vector_store %arg11[%c0_164, %c0_165, %c0_166], %425 {strides = array<i32>} : memref<1x16x4xf32, #tpu.memory_space<vmem>>, vector<1x16x4xf32>,
    %cst_167 = arith.constant dense<0.000000e+00> : vector<2xf32>
    %426 = vector.multi_reduction <add>, %416, %cst_167 [0] : vector<16x2xf32> to vector<2xf32>
    %427 = vector.shape_cast %426 : vector<2xf32> to vector<1x2xf32>
    %cst_168 = arith.constant dense<0.000000e+00> : vector<1xf32>
    %428 = vector.multi_reduction <add>, %427, %cst_168 [1] : vector<1x2xf32> to vector<1xf32>
    %429 = vector.shape_cast %428 : vector<1xf32> to vector<1x1xf32>
    %c0_169 = arith.constant 0 : index
    %c0_170 = arith.constant 0 : index
    %c0_171 = arith.constant 0 : index
    %430 = vector.load %arg12[%c0_169, %c0_170, %c0_171] : memref<1x1x1xf32, #tpu.memory_space<vmem>>, vector<1x1x1xf32>
    %431 = vector.shape_cast %430 : vector<1x1x1xf32> to vector<1x1xf32>
    %432 = vector.shape_cast %429 : vector<1x1xf32> to vector<1x1x1xf32>
    tpu.vector_store %arg12[%c0_169, %c0_170, %c0_171], %432 {strides = array<i32>} : memref<1x1x1xf32, #tpu.memory_space<vmem>>, vector<1x1x1xf32>,
    return
  }
  func.func @transform_0(%arg0: i32) -> (i32, i32, i32) {
    %c0_i32 = arith.constant 0 : i32
    %c0_i32_0 = arith.constant 0 : i32
    %c0_i32_1 = arith.constant 0 : i32
    return %arg0, %c0_i32, %c0_i32_0 : i32, i32, i32
  }
  func.func @transform_1(%arg0: i32) -> (i32, i32, i32) {
    %c0_i32 = arith.constant 0 : i32
    %c0_i32_0 = arith.constant 0 : i32
    %c0_i32_1 = arith.constant 0 : i32
    return %arg0, %c0_i32, %c0_i32_0 : i32, i32, i32
  }
  func.func @transform_2(%arg0: i32) -> (i32, i32) {
    %c0_i32 = arith.constant 0 : i32
    %c0_i32_0 = arith.constant 0 : i32
    %c0_i32_1 = arith.constant 0 : i32
    return %c0_i32, %c0_i32_0 : i32, i32
  }
  func.func @transform_3(%arg0: i32) -> (i32, i32, i32) {
    %c0_i32 = arith.constant 0 : i32
    %c0_i32_0 = arith.constant 0 : i32
    %c0_i32_1 = arith.constant 0 : i32
    %c0_i32_2 = arith.constant 0 : i32
    return %c0_i32, %c0_i32_0, %c0_i32_1 : i32, i32, i32
  }
  func.func @transform_4(%arg0: i32) -> (i32, i32, i32) {
    %c0_i32 = arith.constant 0 : i32
    %c0_i32_0 = arith.constant 0 : i32
    %c0_i32_1 = arith.constant 0 : i32
    %c0_i32_2 = arith.constant 0 : i32
    return %c0_i32, %c0_i32_0, %c0_i32_1 : i32, i32, i32
  }
  func.func @transform_5(%arg0: i32) -> (i32, i32, i32) {
    %c0_i32 = arith.constant 0 : i32
    %c0_i32_0 = arith.constant 0 : i32
    %c0_i32_1 = arith.constant 0 : i32
    %c0_i32_2 = arith.constant 0 : i32
    return %c0_i32, %c0_i32_0, %c0_i32_1 : i32, i32, i32
  }
  func.func @transform_6(%arg0: i32) -> (i32, i32, i32, i32) {
    %c0_i32 = arith.constant 0 : i32
    %c0_i32_0 = arith.constant 0 : i32
    %c0_i32_1 = arith.constant 0 : i32
    %c0_i32_2 = arith.constant 0 : i32
    %c0_i32_3 = arith.constant 0 : i32
    return %c0_i32, %c0_i32_0, %c0_i32_1, %c0_i32_2 : i32, i32, i32, i32
  }
  func.func @transform_7(%arg0: i32) -> (i32, i32, i32) {
    %c0_i32 = arith.constant 0 : i32
    %c0_i32_0 = arith.constant 0 : i32
    %c0_i32_1 = arith.constant 0 : i32
    %c0_i32_2 = arith.constant 0 : i32
    return %c0_i32, %c0_i32_0, %c0_i32_1 : i32, i32, i32
  }
  func.func @transform_8(%arg0: i32) -> (i32, i32, i32, i32) {
    %c0_i32 = arith.constant 0 : i32
    %c0_i32_0 = arith.constant 0 : i32
    %c0_i32_1 = arith.constant 0 : i32
    %c0_i32_2 = arith.constant 0 : i32
    %c0_i32_3 = arith.constant 0 : i32
    return %c0_i32, %c0_i32_0, %c0_i32_1, %c0_i32_2 : i32, i32, i32, i32
  }
  func.func @transform_9(%arg0: i32) -> (i32, i32) {
    %c0_i32 = arith.constant 0 : i32
    %c0_i32_0 = arith.constant 0 : i32
    %c0_i32_1 = arith.constant 0 : i32
    return %c0_i32, %c0_i32_0 : i32, i32
  }
  func.func @transform_10(%arg0: i32) -> (i32, i32, i32) {
    %c0_i32 = arith.constant 0 : i32
    %c0_i32_0 = arith.constant 0 : i32
    %c0_i32_1 = arith.constant 0 : i32
    return %arg0, %c0_i32, %c0_i32_0 : i32, i32, i32
  }
  func.func @transform_11(%arg0: i32) -> (i32, i32, i32) {
    %c0_i32 = arith.constant 0 : i32
    %c0_i32_0 = arith.constant 0 : i32
    %c0_i32_1 = arith.constant 0 : i32
    return %arg0, %c0_i32, %c0_i32_0 : i32, i32, i32
  }
}

</mosaic_0001>

<llo_original>
// kernel: tpu_custom_call.1
$region0: #{tpu_custom_call.1}
  #allocation0 [shape = 'u32[]', space=smem, size = 0x4, offset = 0x4, fixed_abs, tag = 'smem constant byte address 0x4 - core index']
  #allocation1 [shape = 'u32[144,128]{1,0:T(1,128)}', space=vmem, size = 0x12000, scoped, tag = 'internal scratch']
  %s0 = inlined_call_operand.vmem [shape: f32[2,16,4], index: 0, kind: input, shape index: {}]
  %s1 = inlined_call_operand.vmem [shape: f32[2,16,1], index: 1, kind: input, shape index: {}]
  %s2 = inlined_call_operand.vmem [shape: f32[3,32], index: 2, kind: input, shape index: {}]
  %s3 = inlined_call_operand.vmem [shape: bf16[2,32,64], index: 3, kind: input, shape index: {}]
  %s4 = inlined_call_operand.vmem [shape: bf16[2,32,32], index: 4, kind: input, shape index: {}]
  %s5 = inlined_call_operand.vmem [shape: f32[2,8,32], index: 5, kind: input, shape index: {}]
  %s6 = inlined_call_operand.vmem [shape: bf16[2,3,32,64], index: 6, kind: input, shape index: {}]
  %s7 = inlined_call_operand.vmem [shape: f32[2,1,64], index: 7, kind: input, shape index: {}]
  %s8 = inlined_call_operand.vmem [shape: bf16[2,3,64,32], index: 8, kind: input, shape index: {}]
  %s9 = inlined_call_operand.vmem [shape: f32[33,4], index: 9, kind: input, shape index: {}]
  %s10 = inlined_call_operand.vmem [shape: f32[2,16,4], index: 10, kind: output, shape index: {0}]
  %s11 = inlined_call_operand.vmem [shape: f32[2,1,1], index: 11, kind: output, shape index: {1}]
  %12 = xla_tuple %s10, %s11
  %s13 = sld [smem:[#allocation0]]
  $region81: #{tpu_custom_call.1} parent=0
    _
  %s15 = ssub.s32 1, %s13
  %s16 = scalar_select 0, %s15, %s13
  loop: start=0, step=1, limit=4
  $region2: #{tpu_custom_call.1} parent=0 // loop_pre_header
    _
  $region3: #{tpu_custom_call.1} parent=0 // loop_header
    %s18 = sphi 0, %s22
    %p19 = scmp.ge.s32.totalorder %s18, 4
    %s28 = sphi 0, %s30
    %s31 = sphi 0, %s28
    %s32 = sphi 0, %s31
    %s48 = sphi 0, %s32
    %s54 = sphi 0, %s56
    %s57 = sphi 0, %s54
    %s58 = sphi 0, %s57
    %s74 = sphi 0, %s58
    %s78 = sphi 0, %s78
    %s80 = sphi 0, %s78
    %s81 = sphi 0, %s80
    %s95 = sphi 0, %s81
    %s99 = sphi 0, %s99
    %s101 = sphi 0, %s99
    %s102 = sphi 0, %s101
    %s116 = sphi 0, %s102
    %s120 = sphi 0, %s120
    %s122 = sphi 0, %s120
    %s123 = sphi 0, %s122
    %s137 = sphi 0, %s123
    %s141 = sphi 0, %s141
    %s143 = sphi 0, %s141
    %s144 = sphi 0, %s143
    %s158 = sphi 0, %s144
    %s162 = sphi 0, %s162
    %s164 = sphi 0, %s162
    %s165 = sphi 0, %s164
    %s179 = sphi 0, %s165
    %s183 = sphi 0, %s183
    %s185 = sphi 0, %s183
    %s186 = sphi 0, %s185
    %s200 = sphi 0, %s186
    %s204 = sphi 0, %s204
    %s206 = sphi 0, %s204
    %s207 = sphi 0, %s206
    %s221 = sphi 0, %s207
    %s225 = sphi 0, %s225
    %s227 = sphi 0, %s225
    %s228 = sphi 0, %s227
    %s242 = sphi 0, %s228
    %s248 = sphi 0, %s250
    %s251 = sphi 0, %s248
    %s252 = sphi 0, %s251
    %s268 = sphi 0, %s252
    %s274 = sphi 0, %s276
    %s277 = sphi 0, %s274
    %s278 = sphi 0, %s277
    %s294 = sphi 0, %s278
  $region4: #{tpu_custom_call.1} parent=0 // loop_header_branch
    %21 = sbr.rel (%p19) target = $region8
  $region5: #{tpu_custom_call.1} parent=0 // loop_body
    %s23 = ssub.s32 %s18, 1
    %s24 = ssub.s32 %s18, 2
    %s25 = sadd.s32 %s18, 1
    %s26 = ssub.s32 %s18, %s25
    %p27 = scmp.eq.s32.totalorder %s26, 0
    %s29 = sadd.s32 %s28, 1
    %s30 = scalar_select %p27, %s28, %s29
    %p33 = pneg %p27
    %p34 = scmp.eq.s32.totalorder %s18, 1
    %p35 = por %p33, %p34
    %p36 = scmp.ne.s32.totalorder %s28, %s31
    %p37 = scmp.eq.s32.totalorder %s18, 0
    %p38 = por %p36, %p37
    %p39 = scmp.ne.s32.totalorder %s28, %s31
    %p40 = scmp.eq.s32.totalorder %s23, 1
    %p41 = por %p39, %p40
    %p42 = scmp.ne.s32.totalorder %s31, %s32
    %p43 = scmp.eq.s32.totalorder %s23, 0
    %p44 = por %p42, %p43
    %p45 = scmp.ne.s32.totalorder %s31, %s32
    %p46 = scmp.eq.s32.totalorder %s24, 1
    %p47 = por %p45, %p46
    %p49 = scmp.ne.s32.totalorder %s32, %s48
    %p50 = scmp.eq.s32.totalorder %s24, 0
    %p51 = por %p49, %p50
    %s52 = ssub.s32 %s18, %s25
    %p53 = scmp.eq.s32.totalorder %s52, 0
    %s55 = sadd.s32 %s54, 1
    %s56 = scalar_select %p53, %s54, %s55
    %p59 = pneg %p53
    %p60 = scmp.eq.s32.totalorder %s18, 1
    %p61 = por %p59, %p60
    %p62 = scmp.ne.s32.totalorder %s54, %s57
    %p63 = scmp.eq.s32.totalorder %s18, 0
    %p64 = por %p62, %p63
    %p65 = scmp.ne.s32.totalorder %s54, %s57
    %p66 = scmp.eq.s32.totalorder %s23, 1
    %p67 = por %p65, %p66
    %p68 = scmp.ne.s32.totalorder %s57, %s58
    %p69 = scmp.eq.s32.totalorder %s23, 0
    %p70 = por %p68, %p69
    %p71 = scmp.ne.s32.totalorder %s57, %s58
    %p72 = scmp.eq.s32.totalorder %s24, 1
    %p73 = por %p71, %p72
    %p75 = scmp.ne.s32.totalorder %s58, %s74
    %p76 = scmp.eq.s32.totalorder %s24, 0
    %p77 = por %p75, %p76
    %s79 = sadd.s32 %s78, 1
    %p82 = scmp.eq.s32.totalorder %s18, 1
    %p83 = scmp.ne.s32.totalorder %s78, %s80
    %p84 = scmp.eq.s32.totalorder %s18, 0
    %p85 = por %p83, %p84
    %p86 = scmp.ne.s32.totalorder %s78, %s80
    %p87 = scmp.eq.s32.totalorder %s23, 1
    %p88 = por %p86, %p87
    %p89 = scmp.ne.s32.totalorder %s80, %s81
    %p90 = scmp.eq.s32.totalorder %s23, 0
    %p91 = por %p89, %p90
    %p92 = scmp.ne.s32.totalorder %s80, %s81
    %p93 = scmp.eq.s32.totalorder %s24, 1
    %p94 = por %p92, %p93
    %p96 = scmp.ne.s32.totalorder %s81, %s95
    %p97 = scmp.eq.s32.totalorder %s24, 0
    %p98 = por %p96, %p97
    %s100 = sadd.s32 %s99, 1
    %p103 = scmp.eq.s32.totalorder %s18, 1
    %p104 = scmp.ne.s32.totalorder %s99, %s101
    %p105 = scmp.eq.s32.totalorder %s18, 0
    %p106 = por %p104, %p105
    %p107 = scmp.ne.s32.totalorder %s99, %s101
    %p108 = scmp.eq.s32.totalorder %s23, 1
    %p109 = por %p107, %p108
    %p110 = scmp.ne.s32.totalorder %s101, %s102
    %p111 = scmp.eq.s32.totalorder %s23, 0
    %p112 = por %p110, %p111
    %p113 = scmp.ne.s32.totalorder %s101, %s102
    %p114 = scmp.eq.s32.totalorder %s24, 1
    %p115 = por %p113, %p114
    %p117 = scmp.ne.s32.totalorder %s102, %s116
    %p118 = scmp.eq.s32.totalorder %s24, 0
    %p119 = por %p117, %p118
    %s121 = sadd.s32 %s120, 1
    %p124 = scmp.eq.s32.totalorder %s18, 1
    %p125 = scmp.ne.s32.totalorder %s120, %s122
    %p126 = scmp.eq.s32.totalorder %s18, 0
    %p127 = por %p125, %p126
    %p128 = scmp.ne.s32.totalorder %s120, %s122
    %p129 = scmp.eq.s32.totalorder %s23, 1
    %p130 = por %p128, %p129
    %p131 = scmp.ne.s32.totalorder %s122, %s123
    %p132 = scmp.eq.s32.totalorder %s23, 0
    %p133 = por %p131, %p132
    %p134 = scmp.ne.s32.totalorder %s122, %s123
    %p135 = scmp.eq.s32.totalorder %s24, 1
    %p136 = por %p134, %p135
    %p138 = scmp.ne.s32.totalorder %s123, %s137
    %p139 = scmp.eq.s32.totalorder %s24, 0
    %p140 = por %p138, %p139
    %s142 = sadd.s32 %s141, 1
    %p145 = scmp.eq.s32.totalorder %s18, 1
    %p146 = scmp.ne.s32.totalorder %s141, %s143
    %p147 = scmp.eq.s32.totalorder %s18, 0
    %p148 = por %p146, %p147
    %p149 = scmp.ne.s32.totalorder %s141, %s143
    %p150 = scmp.eq.s32.totalorder %s23, 1
    %p151 = por %p149, %p150
    %p152 = scmp.ne.s32.totalorder %s143, %s144
    %p153 = scmp.eq.s32.totalorder %s23, 0
    %p154 = por %p152, %p153
    %p155 = scmp.ne.s32.totalorder %s143, %s144
    %p156 = scmp.eq.s32.totalorder %s24, 1
    %p157 = por %p155, %p156
    %p159 = scmp.ne.s32.totalorder %s144, %s158
    %p160 = scmp.eq.s32.totalorder %s24, 0
    %p161 = por %p159, %p160
    %s163 = sadd.s32 %s162, 1
    %p166 = scmp.eq.s32.totalorder %s18, 1
    %p167 = scmp.ne.s32.totalorder %s162, %s164
    %p168 = scmp.eq.s32.totalorder %s18, 0
    %p169 = por %p167, %p168
    %p170 = scmp.ne.s32.totalorder %s162, %s164
    %p171 = scmp.eq.s32.totalorder %s23, 1
    %p172 = por %p170, %p171
    %p173 = scmp.ne.s32.totalorder %s164, %s165
    %p174 = scmp.eq.s32.totalorder %s23, 0
    %p175 = por %p173, %p174
    %p176 = scmp.ne.s32.totalorder %s164, %s165
    %p177 = scmp.eq.s32.totalorder %s24, 1
    %p178 = por %p176, %p177
    %p180 = scmp.ne.s32.totalorder %s165, %s179
    %p181 = scmp.eq.s32.totalorder %s24, 0
    %p182 = por %p180, %p181
    %s184 = sadd.s32 %s183, 1
    %p187 = scmp.eq.s32.totalorder %s18, 1
    %p188 = scmp.ne.s32.totalorder %s183, %s185
    %p189 = scmp.eq.s32.totalorder %s18, 0
    %p190 = por %p188, %p189
    %p191 = scmp.ne.s32.totalorder %s183, %s185
    %p192 = scmp.eq.s32.totalorder %s23, 1
    %p193 = por %p191, %p192
    %p194 = scmp.ne.s32.totalorder %s185, %s186
    %p195 = scmp.eq.s32.totalorder %s23, 0
    %p196 = por %p194, %p195
    %p197 = scmp.ne.s32.totalorder %s185, %s186
    %p198 = scmp.eq.s32.totalorder %s24, 1
    %p199 = por %p197, %p198
    %p201 = scmp.ne.s32.totalorder %s186, %s200
    %p202 = scmp.eq.s32.totalorder %s24, 0
    %p203 = por %p201, %p202
    %s205 = sadd.s32 %s204, 1
    %p208 = scmp.eq.s32.totalorder %s18, 1
    %p209 = scmp.ne.s32.totalorder %s204, %s206
    %p210 = scmp.eq.s32.totalorder %s18, 0
    %p211 = por %p209, %p210
    %p212 = scmp.ne.s32.totalorder %s204, %s206
    %p213 = scmp.eq.s32.totalorder %s23, 1
    %p214 = por %p212, %p213
    %p215 = scmp.ne.s32.totalorder %s206, %s207
    %p216 = scmp.eq.s32.totalorder %s23, 0
    %p217 = por %p215, %p216
    %p218 = scmp.ne.s32.totalorder %s206, %s207
    %p219 = scmp.eq.s32.totalorder %s24, 1
    %p220 = por %p218, %p219
    %p222 = scmp.ne.s32.totalorder %s207, %s221
    %p223 = scmp.eq.s32.totalorder %s24, 0
    %p224 = por %p222, %p223
    %s226 = sadd.s32 %s225, 1
    %p229 = scmp.eq.s32.totalorder %s18, 1
    %p230 = scmp.ne.s32.totalorder %s225, %s227
    %p231 = scmp.eq.s32.totalorder %s18, 0
    %p232 = por %p230, %p231
    %p233 = scmp.ne.s32.totalorder %s225, %s227
    %p234 = scmp.eq.s32.totalorder %s23, 1
    %p235 = por %p233, %p234
    %p236 = scmp.ne.s32.totalorder %s227, %s228
    %p237 = scmp.eq.s32.totalorder %s23, 0
    %p238 = por %p236, %p237
    %p239 = scmp.ne.s32.totalorder %s227, %s228
    %p240 = scmp.eq.s32.totalorder %s24, 1
    %p241 = por %p239, %p240
    %p243 = scmp.ne.s32.totalorder %s228, %s242
    %p244 = scmp.eq.s32.totalorder %s24, 0
    %p245 = por %p243, %p244
    %s246 = ssub.s32 %s18, %s25
    %p247 = scmp.eq.s32.totalorder %s246, 0
    %s249 = sadd.s32 %s248, 1
    %s250 = scalar_select %p247, %s248, %s249
    %p253 = pneg %p247
    %p254 = scmp.eq.s32.totalorder %s18, 1
    %p255 = por %p253, %p254
    %p256 = scmp.ne.s32.totalorder %s248, %s251
    %p257 = scmp.eq.s32.totalorder %s18, 0
    %p258 = por %p256, %p257
    %p259 = scmp.ne.s32.totalorder %s248, %s251
    %p260 = scmp.eq.s32.totalorder %s23, 1
    %p261 = por %p259, %p260
    %p262 = scmp.ne.s32.totalorder %s251, %s252
    %p263 = scmp.eq.s32.totalorder %s23, 0
    %p264 = por %p262, %p263
    %p265 = scmp.ne.s32.totalorder %s251, %s252
    %p266 = scmp.eq.s32.totalorder %s24, 1
    %p267 = por %p265, %p266
    %p269 = scmp.ne.s32.totalorder %s252, %s268
    %p270 = scmp.eq.s32.totalorder %s24, 0
    %p271 = por %p269, %p270
    %s272 = ssub.s32 %s18, %s25
    %p273 = scmp.eq.s32.totalorder %s272, 0
    %s275 = sadd.s32 %s274, 1
    %s276 = scalar_select %p273, %s274, %s275
    %p279 = pneg %p273
    %p280 = scmp.eq.s32.totalorder %s18, 1
    %p281 = por %p279, %p280
    %p282 = scmp.ne.s32.totalorder %s274, %s277
    %p283 = scmp.eq.s32.totalorder %s18, 0
    %p284 = por %p282, %p283
    %p285 = scmp.ne.s32.totalorder %s274, %s277
    %p286 = scmp.eq.s32.totalorder %s23, 1
    %p287 = por %p285, %p286
    %p288 = scmp.ne.s32.totalorder %s277, %s278
    %p289 = scmp.eq.s32.totalorder %s23, 0
    %p290 = por %p288, %p289
    %p291 = scmp.ne.s32.totalorder %s277, %s278
    %p292 = scmp.eq.s32.totalorder %s24, 1
    %p293 = por %p291, %p292
    %p295 = scmp.ne.s32.totalorder %s278, %s294
    %p296 = scmp.eq.s32.totalorder %s24, 0
    %p297 = por %p295, %p296
    %p298 = scmp.le.s32.totalorder 1, %s18
    %p299 = scmp.lt.s32.totalorder %s18, 3
    %p300 = pnand %p298, %p299
    %p301 = pneg %p300
    // Predicated region
    $region9: #{tpu_custom_call.1} parent=5 // pred_check
      _
    $region10: #{tpu_custom_call.1} parent=5 // pred_check_branch
      %303 = sbr.rel (%p300) target = $region12
    $region11: #{tpu_custom_call.1} parent=5 // pred_region
      %s304 = ssub.s32 %s18, 1
      // Predicated region
      $region13: #{tpu_custom_call.1} parent=11 // pred_check
        %p305 = pneg %p91
      $region14: #{tpu_custom_call.1} parent=11 // pred_check_branch
        %307 = sbr.rel (%p305) target = $region16
      $region15: #{tpu_custom_call.1} parent=11 // pred_region
        _
      $region16: #{tpu_custom_call.1} parent=11 // pred_fallthru
        _
      // Predicated region
      $region17: #{tpu_custom_call.1} parent=11 // pred_check
        %p308 = pneg %p112
      $region18: #{tpu_custom_call.1} parent=11 // pred_check_branch
        %310 = sbr.rel (%p308) target = $region20
      $region19: #{tpu_custom_call.1} parent=11 // pred_region
        _
      $region20: #{tpu_custom_call.1} parent=11 // pred_fallthru
        _
      // Predicated region
      $region21: #{tpu_custom_call.1} parent=11 // pred_check
        %p311 = pneg %p133
      $region22: #{tpu_custom_call.1} parent=11 // pred_check_branch
        %313 = sbr.rel (%p311) target = $region24
      $region23: #{tpu_custom_call.1} parent=11 // pred_region
        _
      $region24: #{tpu_custom_call.1} parent=11 // pred_fallthru
        _
      // Predicated region
      $region25: #{tpu_custom_call.1} parent=11 // pred_check
        %p314 = pneg %p154
      $region26: #{tpu_custom_call.1} parent=11 // pred_check_branch
        %316 = sbr.rel (%p314) target = $region28
      $region27: #{tpu_custom_call.1} parent=11 // pred_region
        _
      $region28: #{tpu_custom_call.1} parent=11 // pred_fallthru
        _
      // Predicated region
      $region29: #{tpu_custom_call.1} parent=11 // pred_check
        %p317 = pneg %p175
      $region30: #{tpu_custom_call.1} parent=11 // pred_check_branch
        %319 = sbr.rel (%p317) target = $region32
      $region31: #{tpu_custom_call.1} parent=11 // pred_region
        _
      $region32: #{tpu_custom_call.1} parent=11 // pred_fallthru
        _
      // Predicated region
      $region33: #{tpu_custom_call.1} parent=11 // pred_check
        %p320 = pneg %p196
      $region34: #{tpu_custom_call.1} parent=11 // pred_check_branch
        %322 = sbr.rel (%p320) target = $region36
      $region35: #{tpu_custom_call.1} parent=11 // pred_region
        _
      $region36: #{tpu_custom_call.1} parent=11 // pred_fallthru
        _
      // Predicated region
      $region37: #{tpu_custom_call.1} parent=11 // pred_check
        %p323 = pneg %p217
      $region38: #{tpu_custom_call.1} parent=11 // pred_check_branch
        %325 = sbr.rel (%p323) target = $region40
      $region39: #{tpu_custom_call.1} parent=11 // pred_region
        _
      $region40: #{tpu_custom_call.1} parent=11 // pred_fallthru
        _
      // Predicated region
      $region41: #{tpu_custom_call.1} parent=11 // pred_check
        %p326 = pneg %p238
      $region42: #{tpu_custom_call.1} parent=11 // pred_check_branch
        %328 = sbr.rel (%p326) target = $region44
      $region43: #{tpu_custom_call.1} parent=11 // pred_region
        _
      $region44: #{tpu_custom_call.1} parent=11 // pred_fallthru
        _
    $region12: #{tpu_custom_call.1} parent=5 // pred_fallthru
      _
    %p329 = scmp.lt.s32.totalorder %s18, 2
    // Predicated region
    $region45: #{tpu_custom_call.1} parent=5 // pred_check
      %p330 = pneg %p329
    $region46: #{tpu_custom_call.1} parent=5 // pred_check_branch
      %332 = sbr.rel (%p330) target = $region48
    $region47: #{tpu_custom_call.1} parent=5 // pred_region
      // Predicated region
      $region49: #{tpu_custom_call.1} parent=47 // pred_check
        %p333 = pneg %p38
      $region50: #{tpu_custom_call.1} parent=47 // pred_check_branch
        %335 = sbr.rel (%p333) target = $region52
      $region51: #{tpu_custom_call.1} parent=47 // pred_region
        %p336 = scmp.lt.s32.totalorder %s18, 1
        %s337 = scalar_select %p336, %s18, 1
        %s338 = smul.addr %s337, 2
        %s339 = smul.addr %s338, 8
        %s340 = scalar_lea.vmem %s0, %s339
      $region52: #{tpu_custom_call.1} parent=47 // pred_fallthru
        _
      // Predicated region
      $region53: #{tpu_custom_call.1} parent=47 // pred_check
        %p341 = pneg %p64
      $region54: #{tpu_custom_call.1} parent=47 // pred_check_branch
        %343 = sbr.rel (%p341) target = $region56
      $region55: #{tpu_custom_call.1} parent=47 // pred_region
        %p344 = scmp.lt.s32.totalorder %s18, 1
        %s345 = scalar_select %p344, %s18, 1
        %s346 = smul.addr %s345, 2
        %s347 = smul.addr %s346, 8
        %s348 = scalar_lea.vmem %s1, %s347
      $region56: #{tpu_custom_call.1} parent=47 // pred_fallthru
        _
    $region48: #{tpu_custom_call.1} parent=5 // pred_fallthru
      _
    %p349 = scmp.le.s32.totalorder 1, %s18
    %p350 = scmp.lt.s32.totalorder %s18, 3
    %p351 = pnand %p349, %p350
    %p352 = pneg %p351
    // Predicated region
    $region57: #{tpu_custom_call.1} parent=5 // pred_check
      _
    $region58: #{tpu_custom_call.1} parent=5 // pred_check_branch
      %354 = sbr.rel (%p351) target = $region60
    $region59: #{tpu_custom_call.1} parent=5 // pred_region
      %s355 = ssub.s32 %s18, 1
      %p356 = scmp.lt.s32.totalorder %s23, 1
      %s357 = scalar_select %p356, %s23, 1
      %s358 = smul.addr %s357, 2
      %s359 = smul.addr %s358, 8
      %s360 = scalar_lea.vmem %s0, %s359
      %p361 = pneg %p44
      %p362 = pneg %p41
      %p363 = scmp.lt.s32.totalorder %s23, 1
      %s364 = scalar_select %p363, %s23, 1
      %s365 = smul.addr %s364, 2
      %s366 = smul.addr %s365, 8
      %s367 = scalar_lea.vmem %s1, %s366
      %p368 = pneg %p70
      %p369 = pneg %p67
      %p370 = pneg %p91
      %p371 = pneg %p88
      %p372 = pneg %p112
      %p373 = pneg %p109
      %p374 = pneg %p133
      %p375 = pneg %p130
      %p376 = pneg %p154
      %p377 = pneg %p151
      %p378 = pneg %p175
      %p379 = pneg %p172
      %p380 = pneg %p196
      %p381 = pneg %p193
      %p382 = pneg %p217
      %p383 = pneg %p214
      %p384 = pneg %p238
      %p385 = pneg %p235
      %p386 = pneg %p264
      %p387 = pneg %p261
      %p388 = scmp.lt.s32.totalorder %s23, 1
      %s389 = scalar_select %p388, %s23, 1
      %s390 = smul.addr %s389, 2
      %s391 = smul.addr %s390, 8
      %s392 = scalar_lea.vmem %s10, %s391
      %p393 = pneg %p290
      %p394 = pneg %p287
      %p395 = scmp.lt.s32.totalorder %s23, 1
      %s396 = scalar_select %p395, %s23, 1
      %s397 = scalar_lea.vmem %s11, %s396
      %p398 = scmp.lt.s32.totalorder %s23, 1
      %s399 = scalar_select %p398, %s23, 1
      %s400 = smul.addr %s399, 2
      %s401 = smul.addr %s400, 8
      %s402 = scalar_lea.vmem %s0, %s401
      %p403 = scmp.lt.s32.totalorder %s23, 1
      %s404 = scalar_select %p403, %s23, 1
      %s405 = smul.addr %s404, 2
      %s406 = smul.addr %s405, 8
      %s407 = scalar_lea.vmem %s1, %s406
      %p408 = scmp.lt.s32.totalorder %s23, 1
      %s409 = scalar_select %p408, %s23, 1
      %s410 = smul.addr %s409, 2
      %s411 = smul.addr %s410, 8
      %s412 = scalar_lea.vmem %s10, %s411
      %p413 = scmp.lt.s32.totalorder %s23, 1
      %s414 = scalar_select %p413, %s23, 1
      %s415 = scalar_lea.vmem %s11, %s414
      %v417 = vld [vmem:[%s402] sm:$0xff]
      %v418 = vld [vmem:[%s402 + $0x8] sm:$0xff]
      %v419 = vld [vmem:[%s407] sm:$0xff]
      %v420 = vld [vmem:[%s407 + $0x8] sm:$0xff]
      %v421 = vld [vmem:[%s2] sm:$0x7]
      %v422 = vpack.c.bf16 %v418, %v417
      %v423 = vpack.c.bf16 %v421, %v421
      %v424 = vlaneseq
      %v425 = vshrl.u32 %v424, 7
      %v426 = vsub.s32 2, %v425
      %v427 = vrot.slane %v421, %v426
      %vm428 = vcmask 15360
      %v430 = vsel %vm428, %v422, 0
      %vm432 = vcmask 1040384
      %v434 = vsel %vm432, %v423, 0
      %436 = vmatprep.subr.bf16.mxu0 0
      %437 = vmatpush1.bf16.msra.mxu0 0
      %438 = vmatprep.subr.bf16.mxu0 0
      %439 = vmatpush1.bf16.msra.mxu0 0
      %440 = vmatprep.subr.bf16.mxu0 0
      %441 = vmatpush1.bf16.msra.mxu0 0
      %442 = vmatprep.subr.bf16.mxu0 0
      %443 = vmatpush1.bf16.msra.mxu0 0
      %444 = vmatprep.subr.bf16.mxu0 0
      %445 = vmatpush1.bf16.msra.mxu0 0
      %446 = vmatprep.subr.bf16.mxu0 0
      %447 = vmatpush1.bf16.msra.mxu0 0
      %448 = vmatprep.subr.bf16.mxu0 0
      %449 = vmatpush1.bf16.msra.mxu0 0
      %450 = vmatprep.subr.bf16.mxu0 0
      %451 = vmatpush1.bf16.msra.mxu0 %v434
      %452 = vmatprep.subr.bf16.mxu0 0
      %453 = vmatpush2.bf16.msra.mxu0 0
      %454 = vmatprep.subr.bf16.mxu0 0
      %455 = vmatpush2.bf16.msra.mxu0 0
      %456 = vmatprep.subr.bf16.mxu0 0
      %457 = vmatpush2.bf16.msra.mxu0 0
      %458 = vmatprep.subr.bf16.mxu0 0
      %459 = vmatpush2.bf16.msra.mxu0 0
      %460 = vmatprep.subr.bf16.mxu0 0
      %461 = vmatpush2.bf16.msra.mxu0 0
      %462 = vmatprep.subr.bf16.mxu0 0
      %463 = vmatpush2.bf16.msra.mxu0 0
      %464 = vmatprep.subr.bf16.mxu0 0
      %465 = vmatpush2.bf16.msra.mxu0 0
      %466 = vmatprep.subr.bf16.mxu0 0
      %467 = vmatpush2.bf16.msra.mxu0 0
      %468 = vmatprep.mubr.bf16.mxu0 0
      %469 = vmatmul.mubr.bf16.gmra.mxu0 %v430
      %v470 = vpop.f32.mrf.mxu0
      %v471 = vadd.f32 %v427, %v470
      %v472 = vpop.f32.mrf.mxu0
      %v473 = vpop.f32.mrf.mxu0
      %v474 = vadd.f32 %v427, %v473
      %v475 = vpop.f32.mrf.mxu0
      %476 = vdwg.mxu0
      %478 = vset.pattern.permute.xlu0 0
      %479 = vperm.xlu0 %478, %v419
      %v480 = vpop.permute.xlu0 %479
      %483 = vset.pattern.permute.xlu0 0
      %484 = vperm.xlu0 %483, %v420
      %v485 = vpop.permute.xlu0 %484
      %v487 = vmul.f32 %v471, %v480
      %v488 = vmul.f32 %v474, %v485
      %v489 = vlaneseq
      %v490 = vshrl.u32 %v489, 7
      %v491 = vadd.s32 %v490, 8
      %v492 = vlaneseq
      %v493 = vand.u32 %v492, 127
      %vm494 = vcmp.le.s32.totalorder %v493, %v490
      %vm495 = vcmp.le.s32.totalorder %v493, %v491
      %v496 = vld [vmem:[%s5] sm:$0xff]
      %v497 = vld [vmem:[%s3] sm:$0xf]
      %v498 = vld [vmem:[%s3 + $0x4] sm:$0xf]
      %v499 = vld [vmem:[%s3 + $0x8] sm:$0xf]
      %v500 = vld [vmem:[%s3 + $0xc] sm:$0xf]
      %v501 = vpack.c.bf16 %v488, %v487
      %v506 = vunpack.c.l.b16 %v497
      %v507 = vunpack.c.l.b16 %v498
      %v508 = vunpack.c.l.b16 %v499
      %v509 = vunpack.c.l.b16 %v500
      %v510 = vpack.c.b16 %v507, %v506
      %v511 = vpack.c.b16 %v509, %v508
      %vm514 = vcmask 261120
      %v516 = vsel %vm514, %v501, 0
      %518 = vmatprep.subr.bf16.mxu0 0
      %519 = vmatpush1.bf16.msra.mxu0 0
      %520 = vmatprep.subr.bf16.mxu0 0
      %521 = vmatpush1.bf16.msra.mxu0 0
      %522 = vmatprep.subr.bf16.mxu0 0
      %523 = vmatpush1.bf16.msra.mxu0 0
      %524 = vmatprep.subr.bf16.mxu0 0
      %525 = vmatpush1.bf16.msra.mxu0 0
      %526 = vmatprep.subr.bf16.mxu0 0
      %527 = vmatpush1.bf16.msra.mxu0 0
      %528 = vmatprep.subr.bf16.mxu0 0
      %529 = vmatpush1.bf16.msra.mxu0 0
      %530 = vmatprep.subr.bf16.mxu0 0
      %531 = vmatpush1.bf16.msra.mxu0 %v511
      %532 = vmatprep.subr.bf16.mxu0 0
      %533 = vmatpush1.bf16.msra.mxu0 %v510
      %534 = vmatprep.subr.bf16.mxu0 0
      %535 = vmatpush2.bf16.msra.mxu0 0
      %536 = vmatprep.subr.bf16.mxu0 0
      %537 = vmatpush2.bf16.msra.mxu0 0
      %538 = vmatprep.subr.bf16.mxu0 0
      %539 = vmatpush2.bf16.msra.mxu0 0
      %540 = vmatprep.subr.bf16.mxu0 0
      %541 = vmatpush2.bf16.msra.mxu0 0
      %542 = vmatprep.subr.bf16.mxu0 0
      %543 = vmatpush2.bf16.msra.mxu0 0
      %544 = vmatprep.subr.bf16.mxu0 0
      %545 = vmatpush2.bf16.msra.mxu0 0
      %546 = vmatprep.subr.bf16.mxu0 0
      %547 = vmatpush2.bf16.msra.mxu0 0
      %548 = vmatprep.subr.bf16.mxu0 0
      %549 = vmatpush2.bf16.msra.mxu0 0
      %550 = vmatprep.mubr.bf16.mxu0 0
      %551 = vmatmul.mubr.bf16.gmra.mxu0 %v516
      %v552 = vpop.f32.mrf.mxu0
      %v553 = vadd.f32 0.0, %v552
      %v554 = vpop.f32.mrf.mxu0
      %v555 = vpop.f32.mrf.mxu0
      %v556 = vadd.f32 0.0, %v555
      %v557 = vpop.f32.mrf.mxu0
      %558 = vdwg.mxu0
      %v559 = vlaneseq
      %v560 = vshrl.u32 %v559, 7
      %v561 = vsub.s32 0, %v560
      %v562 = vrot.slane %v496, %v561
      %v563 = vadd.f32 %v553, %v562
      %v564 = vadd.f32 %v556, %v562
      %v565 = vlaneseq
      %v566 = vshrl.u32 %v565, 7
      %v567 = vsub.s32 1, %v566
      %v568 = vrot.slane %v496, %v567
      %570 = vrot.lane.b32.xlu0 %v568, 32
      %v571 = vpop.permute.xlu0 %570
      %v573 = vadd.f32 %v553, %v571
      %v574 = vadd.f32 %v556, %v571
      %v575 = vmul.f32 %v563, 0.25
      %v576 = vmul.f32 %v564, 0.25
      %v577 = vld [vmem:[%s4] sm:$0xf]
      %v578 = vld [vmem:[%s4 + $0x4] sm:$0xf]
      %v579 = vld [vmem:[%s4 + $0x8] sm:$0xf]
      %v580 = vld [vmem:[%s4 + $0xc] sm:$0xf]
      %v581 = vpack.c.bf16 %v576, %v575
      %v582 = vpack.c.bf16 %v564, %v563
      %vm583 = vcmask 130048
      %v585 = vsel %vm583, %v581, 0
      %v588 = vsel %vm583, %v582, 0
      %590 = vmatprep.subr.bf16.mxu0 0
      %591 = vmatpush1.bf16.xpose.msra.mxu0 0
      %592 = vmatprep.subr.bf16.mxu0 0
      %593 = vmatpush1.bf16.xpose.msra.mxu0 0
      %594 = vmatprep.subr.bf16.mxu0 0
      %595 = vmatpush1.bf16.xpose.msra.mxu0 0
      %596 = vmatprep.subr.bf16.mxu0 0
      %597 = vmatpush1.bf16.xpose.msra.mxu0 0
      %598 = vmatprep.subr.bf16.mxu0 0
      %599 = vmatpush1.bf16.xpose.msra.mxu0 0
      %600 = vmatprep.subr.bf16.mxu0 0
      %601 = vmatpush1.bf16.xpose.msra.mxu0 0
      %602 = vmatprep.subr.bf16.mxu0 0
      %603 = vmatpush1.bf16.xpose.msra.mxu0 0
      %604 = vmatprep.subr.bf16.mxu0 0
      %605 = vmatpush1.bf16.xpose.msra.mxu0 %v588
      %606 = vmatprep.subr.bf16.mxu0 0
      %607 = vmatpush2.bf16.xpose.msra.mxu0 0
      %608 = vmatprep.subr.bf16.mxu0 0
      %609 = vmatpush2.bf16.xpose.msra.mxu0 0
      %610 = vmatprep.subr.bf16.mxu0 0
      %611 = vmatpush2.bf16.xpose.msra.mxu0 0
      %612 = vmatprep.subr.bf16.mxu0 0
      %613 = vmatpush2.bf16.xpose.msra.mxu0 0
      %614 = vmatprep.subr.bf16.mxu0 0
      %615 = vmatpush2.bf16.xpose.msra.mxu0 0
      %616 = vmatprep.subr.bf16.mxu0 0
      %617 = vmatpush2.bf16.xpose.msra.mxu0 0
      %618 = vmatprep.subr.bf16.mxu0 0
      %619 = vmatpush2.bf16.xpose.msra.mxu0 0
      %620 = vmatprep.subr.bf16.mxu0 0
      %621 = vmatpush2.bf16.xpose.msra.mxu0 0
      %622 = vmatprep.mubr.bf16.mxu0 0
      %623 = vmatmul.mubr.bf16.gmra.mxu0 %v585
      %v624 = vpop.f32.mrf.mxu0
      %v625 = vadd.f32 0.0, %v624
      %v626 = vpop.f32.mrf.mxu0
      %v627 = vpop.f32.mrf.mxu0
      %v628 = vadd.f32 0.0, %v627
      %v629 = vpop.f32.mrf.mxu0
      %630 = vdwg.mxu0
      %v631 = vsel %vm494, %v625, -10000.0
      %v632 = vsel %vm495, %v628, -10000.0
      %v633 = vsel %vm583, %v631, -inf
      %634 = vmax.xlane.f32.xlu0 %v633
      %v635 = vpop.xlane.xlu0 %634
      %v636 = vsel %vm583, %v632, -inf
      %637 = vmax.xlane.f32.xlu0 %v636
      %v638 = vpop.xlane.xlu0 %637
      %v639 = vsub.f32 %v631, %v635
      %v640 = vsub.f32 %v632, %v638
      %v641 = vmul.f32 %v639, 1.442695
      %v642 = vpow.pop %v641
      %v643 = vmul.f32 %v640, 1.442695
      %v644 = vpow.pop %v643
      %v645 = vsel %vm583, %v642, 0.0
      %646 = vadd.xlane.f32.xlu0 %v645
      %v647 = vpop.xlane.xlu0 %646
      %v648 = vsel %vm583, %v644, 0.0
      %649 = vadd.xlane.f32.xlu0 %v648
      %v650 = vpop.xlane.xlu0 %649
      %v651 = vrcp.pop %v647
      %v652 = vrcp.pop %v650
      %v653 = vmul.f32 %v642, %v651
      %v654 = vmul.f32 %v644, %v652
      %v655 = vpack.c.bf16 %v654, %v653
      %v656 = vpack.c.bf16 %v574, %v573
      %658 = vrot.lane.b32.xlu0 %v656, 96
      %v659 = vpop.permute.xlu0 %658
      %v662 = vsel %vm583, %v655, 0
      %664 = vmatprep.subr.bf16.mxu0 0
      %665 = vmatpush1.bf16.msra.mxu0 0
      %666 = vmatprep.subr.bf16.mxu0 0
      %667 = vmatpush1.bf16.msra.mxu0 0
      %668 = vmatprep.subr.bf16.mxu0 0
      %669 = vmatpush1.bf16.msra.mxu0 0
      %670 = vmatprep.subr.bf16.mxu0 0
      %671 = vmatpush1.bf16.msra.mxu0 0
      %672 = vmatprep.subr.bf16.mxu0 0
      %673 = vmatpush1.bf16.msra.mxu0 0
      %674 = vmatprep.subr.bf16.mxu0 0
      %675 = vmatpush1.bf16.msra.mxu0 0
      %676 = vmatprep.subr.bf16.mxu0 0
      %677 = vmatpush1.bf16.msra.mxu0 0
      %678 = vmatprep.subr.bf16.mxu0 0
      %679 = vmatpush1.bf16.msra.mxu0 %v659
      %680 = vmatprep.subr.bf16.mxu0 0
      %681 = vmatpush2.bf16.msra.mxu0 0
      %682 = vmatprep.subr.bf16.mxu0 0
      %683 = vmatpush2.bf16.msra.mxu0 0
      %684 = vmatprep.subr.bf16.mxu0 0
      %685 = vmatpush2.bf16.msra.mxu0 0
      %686 = vmatprep.subr.bf16.mxu0 0
      %687 = vmatpush2.bf16.msra.mxu0 0
      %688 = vmatprep.subr.bf16.mxu0 0
      %689 = vmatpush2.bf16.msra.mxu0 0
      %690 = vmatprep.subr.bf16.mxu0 0
      %691 = vmatpush2.bf16.msra.mxu0 0
      %692 = vmatprep.subr.bf16.mxu0 0
      %693 = vmatpush2.bf16.msra.mxu0 0
      %694 = vmatprep.subr.bf16.mxu0 0
      %695 = vmatpush2.bf16.msra.mxu0 0
      %696 = vmatprep.mubr.bf16.mxu0 0
      %697 = vmatmul.mubr.bf16.gmra.mxu0 %v662
      %v698 = vpop.f32.mrf.mxu0
      %v699 = vadd.f32 0.0, %v698
      %v700 = vpop.f32.mrf.mxu0
      %v701 = vpop.f32.mrf.mxu0
      %v702 = vadd.f32 0.0, %v701
      %v703 = vpop.f32.mrf.mxu0
      %704 = vdwg.mxu0
      %v705 = vpack.c.bf16 %v702, %v699
      %v708 = vunpack.c.l.b16 %v577
      %v709 = vunpack.c.l.b16 %v578
      %v710 = vpack.c.b16 %v709, %v708
      %v713 = vsel %vm583, %v705, 0
      %715 = vmatprep.subr.bf16.mxu0 0
      %716 = vmatpush1.bf16.msra.mxu0 0
      %717 = vmatprep.subr.bf16.mxu0 0
      %718 = vmatpush1.bf16.msra.mxu0 0
      %719 = vmatprep.subr.bf16.mxu0 0
      %720 = vmatpush1.bf16.msra.mxu0 0
      %721 = vmatprep.subr.bf16.mxu0 0
      %722 = vmatpush1.bf16.msra.mxu0 0
      %723 = vmatprep.subr.bf16.mxu0 0
      %724 = vmatpush1.bf16.msra.mxu0 0
      %725 = vmatprep.subr.bf16.mxu0 0
      %726 = vmatpush1.bf16.msra.mxu0 0
      %727 = vmatprep.subr.bf16.mxu0 0
      %728 = vmatpush1.bf16.msra.mxu0 0
      %729 = vmatprep.subr.bf16.mxu0 0
      %730 = vmatpush1.bf16.msra.mxu0 %v710
      %731 = vmatprep.subr.bf16.mxu0 0
      %732 = vmatpush2.bf16.msra.mxu0 0
      %733 = vmatprep.subr.bf16.mxu0 0
      %734 = vmatpush2.bf16.msra.mxu0 0
      %735 = vmatprep.subr.bf16.mxu0 0
      %736 = vmatpush2.bf16.msra.mxu0 0
      %737 = vmatprep.subr.bf16.mxu0 0
      %738 = vmatpush2.bf16.msra.mxu0 0
      %739 = vmatprep.subr.bf16.mxu0 0
      %740 = vmatpush2.bf16.msra.mxu0 0
      %741 = vmatprep.subr.bf16.mxu0 0
      %742 = vmatpush2.bf16.msra.mxu0 0
      %743 = vmatprep.subr.bf16.mxu0 0
      %744 = vmatpush2.bf16.msra.mxu0 0
      %745 = vmatprep.subr.bf16.mxu0 0
      %746 = vmatpush2.bf16.msra.mxu0 0
      %747 = vmatprep.mubr.bf16.mxu0 0
      %748 = vmatmul.mubr.bf16.gmra.mxu0 %v713
      %v749 = vpop.f32.mrf.mxu0
      %v750 = vadd.f32 0.0, %v749
      %v751 = vpop.f32.mrf.mxu0
      %v752 = vpop.f32.mrf.mxu0
      %v753 = vadd.f32 0.0, %v752
      %v754 = vpop.f32.mrf.mxu0
      %755 = vdwg.mxu0
      %v756 = vlaneseq
      %v757 = vshrl.u32 %v756, 7
      %v758 = vsub.s32 2, %v757
      %v759 = vrot.slane %v496, %v758
      %v760 = vadd.f32 %v759, %v750
      %v761 = vadd.f32 %v759, %v753
      %763 = vrot.lane.b32.xlu0 %v581, 112
      %v764 = vpop.permute.xlu0 %763
      %766 = vrot.lane.b32.xlu0 %v582, 112
      %v767 = vpop.permute.xlu0 %766
      %v769 = vsel %vm583, %v764, 0
      %v772 = vsel %vm583, %v767, 0
      %774 = vmatprep.subr.bf16.mxu0 0
      %775 = vmatpush1.bf16.xpose.msra.mxu0 0
      %776 = vmatprep.subr.bf16.mxu0 0
      %777 = vmatpush1.bf16.xpose.msra.mxu0 0
      %778 = vmatprep.subr.bf16.mxu0 0
      %779 = vmatpush1.bf16.xpose.msra.mxu0 0
      %780 = vmatprep.subr.bf16.mxu0 0
      %781 = vmatpush1.bf16.xpose.msra.mxu0 0
      %782 = vmatprep.subr.bf16.mxu0 0
      %783 = vmatpush1.bf16.xpose.msra.mxu0 0
      %784 = vmatprep.subr.bf16.mxu0 0
      %785 = vmatpush1.bf16.xpose.msra.mxu0 0
      %786 = vmatprep.subr.bf16.mxu0 0
      %787 = vmatpush1.bf16.xpose.msra.mxu0 0
      %788 = vmatprep.subr.bf16.mxu0 0
      %789 = vmatpush1.bf16.xpose.msra.mxu0 %v772
      %790 = vmatprep.subr.bf16.mxu0 0
      %791 = vmatpush2.bf16.xpose.msra.mxu0 0
      %792 = vmatprep.subr.bf16.mxu0 0
      %793 = vmatpush2.bf16.xpose.msra.mxu0 0
      %794 = vmatprep.subr.bf16.mxu0 0
      %795 = vmatpush2.bf16.xpose.msra.mxu0 0
      %796 = vmatprep.subr.bf16.mxu0 0
      %797 = vmatpush2.bf16.xpose.msra.mxu0 0
      %798 = vmatprep.subr.bf16.mxu0 0
      %799 = vmatpush2.bf16.xpose.msra.mxu0 0
      %800 = vmatprep.subr.bf16.mxu0 0
      %801 = vmatpush2.bf16.xpose.msra.mxu0 0
      %802 = vmatprep.subr.bf16.mxu0 0
      %803 = vmatpush2.bf16.xpose.msra.mxu0 0
      %804 = vmatprep.subr.bf16.mxu0 0
      %805 = vmatpush2.bf16.xpose.msra.mxu0 0
      %806 = vmatprep.mubr.bf16.mxu0 0
      %807 = vmatmul.mubr.bf16.gmra.mxu0 %v769
      %v808 = vpop.f32.mrf.mxu0
      %v809 = vadd.f32 0.0, %v808
      %v810 = vpop.f32.mrf.mxu0
      %v811 = vpop.f32.mrf.mxu0
      %v812 = vadd.f32 0.0, %v811
      %v813 = vpop.f32.mrf.mxu0
      %814 = vdwg.mxu0
      %v815 = vsel %vm494, %v809, -10000.0
      %v816 = vsel %vm495, %v812, -10000.0
      %v817 = vsel %vm583, %v815, -inf
      %818 = vmax.xlane.f32.xlu0 %v817
      %v819 = vpop.xlane.xlu0 %818
      %v820 = vsel %vm583, %v816, -inf
      %821 = vmax.xlane.f32.xlu0 %v820
      %v822 = vpop.xlane.xlu0 %821
      %v823 = vsub.f32 %v815, %v819
      %v824 = vsub.f32 %v816, %v822
      %v825 = vmul.f32 %v823, 1.442695
      %v826 = vpow.pop %v825
      %v827 = vmul.f32 %v824, 1.442695
      %v828 = vpow.pop %v827
      %v829 = vsel %vm583, %v826, 0.0
      %830 = vadd.xlane.f32.xlu0 %v829
      %v831 = vpop.xlane.xlu0 %830
      %v832 = vsel %vm583, %v828, 0.0
      %833 = vadd.xlane.f32.xlu0 %v832
      %v834 = vpop.xlane.xlu0 %833
      %v835 = vrcp.pop %v831
      %v836 = vrcp.pop %v834
      %v837 = vmul.f32 %v826, %v835
      %v838 = vmul.f32 %v828, %v836
      %v839 = vpack.c.bf16 %v838, %v837
      %840 = vrot.lane.b32.xlu0 %v656, 80
      %v841 = vpop.permute.xlu0 %840
      %v844 = vsel %vm583, %v839, 0
      %846 = vmatprep.subr.bf16.mxu0 0
      %847 = vmatpush1.bf16.msra.mxu0 0
      %848 = vmatprep.subr.bf16.mxu0 0
      %849 = vmatpush1.bf16.msra.mxu0 0
      %850 = vmatprep.subr.bf16.mxu0 0
      %851 = vmatpush1.bf16.msra.mxu0 0
      %852 = vmatprep.subr.bf16.mxu0 0
      %853 = vmatpush1.bf16.msra.mxu0 0
      %854 = vmatprep.subr.bf16.mxu0 0
      %855 = vmatpush1.bf16.msra.mxu0 0
      %856 = vmatprep.subr.bf16.mxu0 0
      %857 = vmatpush1.bf16.msra.mxu0 0
      %858 = vmatprep.subr.bf16.mxu0 0
      %859 = vmatpush1.bf16.msra.mxu0 0
      %860 = vmatprep.subr.bf16.mxu0 0
      %861 = vmatpush1.bf16.msra.mxu0 %v841
      %862 = vmatprep.subr.bf16.mxu0 0
      %863 = vmatpush2.bf16.msra.mxu0 0
      %864 = vmatprep.subr.bf16.mxu0 0
      %865 = vmatpush2.bf16.msra.mxu0 0
      %866 = vmatprep.subr.bf16.mxu0 0
      %867 = vmatpush2.bf16.msra.mxu0 0
      %868 = vmatprep.subr.bf16.mxu0 0
      %869 = vmatpush2.bf16.msra.mxu0 0
      %870 = vmatprep.subr.bf16.mxu0 0
      %871 = vmatpush2.bf16.msra.mxu0 0
      %872 = vmatprep.subr.bf16.mxu0 0
      %873 = vmatpush2.bf16.msra.mxu0 0
      %874 = vmatprep.subr.bf16.mxu0 0
      %875 = vmatpush2.bf16.msra.mxu0 0
      %876 = vmatprep.subr.bf16.mxu0 0
      %877 = vmatpush2.bf16.msra.mxu0 0
      %878 = vmatprep.mubr.bf16.mxu0 0
      %879 = vmatmul.mubr.bf16.gmra.mxu0 %v844
      %v880 = vpop.f32.mrf.mxu0
      %v881 = vadd.f32 0.0, %v880
      %v882 = vpop.f32.mrf.mxu0
      %v883 = vpop.f32.mrf.mxu0
      %v884 = vadd.f32 0.0, %v883
      %v885 = vpop.f32.mrf.mxu0
      %886 = vdwg.mxu0
      %v887 = vpack.c.bf16 %v884, %v881
      %v890 = vunpack.c.l.b16 %v579
      %v891 = vunpack.c.l.b16 %v580
      %v892 = vpack.c.b16 %v891, %v890
      %v895 = vsel %vm583, %v887, 0
      %897 = vmatprep.subr.bf16.mxu0 0
      %898 = vmatpush1.bf16.msra.mxu0 0
      %899 = vmatprep.subr.bf16.mxu0 0
      %900 = vmatpush1.bf16.msra.mxu0 0
      %901 = vmatprep.subr.bf16.mxu0 0
      %902 = vmatpush1.bf16.msra.mxu0 0
      %903 = vmatprep.subr.bf16.mxu0 0
      %904 = vmatpush1.bf16.msra.mxu0 0
      %905 = vmatprep.subr.bf16.mxu0 0
      %906 = vmatpush1.bf16.msra.mxu0 0
      %907 = vmatprep.subr.bf16.mxu0 0
      %908 = vmatpush1.bf16.msra.mxu0 0
      %909 = vmatprep.subr.bf16.mxu0 0
      %910 = vmatpush1.bf16.msra.mxu0 0
      %911 = vmatprep.subr.bf16.mxu0 0
      %912 = vmatpush1.bf16.msra.mxu0 %v892
      %913 = vmatprep.subr.bf16.mxu0 0
      %914 = vmatpush2.bf16.msra.mxu0 0
      %915 = vmatprep.subr.bf16.mxu0 0
      %916 = vmatpush2.bf16.msra.mxu0 0
      %917 = vmatprep.subr.bf16.mxu0 0
      %918 = vmatpush2.bf16.msra.mxu0 0
      %919 = vmatprep.subr.bf16.mxu0 0
      %920 = vmatpush2.bf16.msra.mxu0 0
      %921 = vmatprep.subr.bf16.mxu0 0
      %922 = vmatpush2.bf16.msra.mxu0 0
      %923 = vmatprep.subr.bf16.mxu0 0
      %924 = vmatpush2.bf16.msra.mxu0 0
      %925 = vmatprep.subr.bf16.mxu0 0
      %926 = vmatpush2.bf16.msra.mxu0 0
      %927 = vmatprep.subr.bf16.mxu0 0
      %928 = vmatpush2.bf16.msra.mxu0 0
      %929 = vmatprep.mubr.bf16.mxu0 0
      %930 = vmatmul.mubr.bf16.gmra.mxu0 %v895
      %v931 = vpop.f32.mrf.mxu0
      %v932 = vadd.f32 0.0, %v931
      %v933 = vpop.f32.mrf.mxu0
      %v934 = vpop.f32.mrf.mxu0
      %v935 = vadd.f32 0.0, %v934
      %v936 = vpop.f32.mrf.mxu0
      %937 = vdwg.mxu0
      %v938 = vadd.f32 %v760, %v932
      %v939 = vadd.f32 %v761, %v935
      %v940 = vadd.f32 %v487, %v938
      %v941 = vadd.f32 %v488, %v939
      %v942 = vsel %vm514, %v940, 0.0
      %943 = vadd.xlane.f32.xlu0 %v942
      %v944 = vpop.xlane.xlu0 %943
      %v945 = vsel %vm514, %v941, 0.0
      %946 = vadd.xlane.f32.xlu0 %v945
      %v947 = vpop.xlane.xlu0 %946
      %v948 = vrcp.pop 32.0
      %v949 = vmul.f32 %v944, %v948
      %v950 = vmul.f32 %v947, %v948
      %v951 = vsub.f32 %v940, %v949
      %v952 = vsub.f32 %v941, %v950
      %v953 = vmul.f32 %v951, %v951
      %v954 = vmul.f32 %v952, %v952
      %v955 = vsel %vm514, %v953, 0.0
      %956 = vadd.xlane.f32.xlu0 %v955
      %v957 = vpop.xlane.xlu0 %956
      %v958 = vsel %vm514, %v954, 0.0
      %959 = vadd.xlane.f32.xlu0 %v958
      %v960 = vpop.xlane.xlu0 %959
      %v961 = vmul.f32 %v957, %v948
      %v962 = vmul.f32 %v960, %v948
      %v963 = vadd.f32 %v961, 1e-05
      %v964 = vadd.f32 %v962, 1e-05
      %v965 = vrsqrt.pop %v963
      %v966 = vrsqrt.pop %v964
      %v967 = vmul.f32 %v951, %v965
      %v968 = vmul.f32 %v952, %v966
      %v969 = vlaneseq
      %v970 = vshrl.u32 %v969, 7
      %v971 = vsub.s32 3, %v970
      %v972 = vrot.slane %v496, %v971
      %v973 = vmul.f32 %v967, %v972
      %v974 = vmul.f32 %v968, %v972
      %v975 = vlaneseq
      %v976 = vshrl.u32 %v975, 7
      %v977 = vsub.s32 4, %v976
      %v978 = vrot.slane %v496, %v977
      %v979 = vadd.f32 %v973, %v978
      %v980 = vadd.f32 %v974, %v978
      %v981 = vmul.f32 %v979, %v480
      %v982 = vmul.f32 %v980, %v485
      %v983 = vld [vmem:[%s7] sm:$0x1]
      %v984 = vrot.slane %v981, 6
      %v985 = vrot.slane %v982, 6
      %vm986 = vcmp.lt.s32.totalorder %v490, 2
      %v987 = vsel %vm986, %v984, %v985
      %v988 = vsel %vm986, %v985, %v984
      %vm989 = vcmp.ge.s32.totalorder %v490, 2
      %vm990 = vcmp.ge.s32.totalorder %v491, 2
      %v991 = vsel %vm989, 1, 0
      %v992 = vsel %vm990, 1, 0
      %vm993 = vcmp.eq.s32.totalorder %v991, 1
      %vm994 = vcmp.eq.s32.totalorder %v992, 1
      %v995 = vsel %vm993, %v988, 0.0
      %v996 = vsel %vm994, %v987, 0.0
      %v997 = vld [vmem:[%s6] sm:$0xf]
      %v998 = vld [vmem:[%s6 + $0x4] sm:$0xf]
      %v999 = vld [vmem:[%s6 + $0x8] sm:$0xf]
      %v1000 = vld [vmem:[%s6 + $0xc] sm:$0xf]
      %v1001 = vpack.c.bf16 %v996, %v995
      %v1006 = vunpack.c.l.b16 %v997
      %v1007 = vunpack.c.l.b16 %v998
      %v1008 = vunpack.c.l.b16 %v999
      %v1009 = vunpack.c.l.b16 %v1000
      %v1010 = vpack.c.b16 %v1007, %v1006
      %v1011 = vpack.c.b16 %v1009, %v1008
      %v1015 = vsel %vm514, %v1001, 0
      %1017 = vmatprep.subr.bf16.mxu0 0
      %1018 = vmatpush1.bf16.msra.mxu0 0
      %1019 = vmatprep.subr.bf16.mxu0 0
      %1020 = vmatpush1.bf16.msra.mxu0 0
      %1021 = vmatprep.subr.bf16.mxu0 0
      %1022 = vmatpush1.bf16.msra.mxu0 0
      %1023 = vmatprep.subr.bf16.mxu0 0
      %1024 = vmatpush1.bf16.msra.mxu0 0
      %1025 = vmatprep.subr.bf16.mxu0 0
      %1026 = vmatpush1.bf16.msra.mxu0 0
      %1027 = vmatprep.subr.bf16.mxu0 0
      %1028 = vmatpush1.bf16.msra.mxu0 0
      %1029 = vmatprep.subr.bf16.mxu0 0
      %1030 = vmatpush1.bf16.msra.mxu0 %v1011
      %1031 = vmatprep.subr.bf16.mxu0 0
      %1032 = vmatpush1.bf16.msra.mxu0 %v1010
      %1033 = vmatprep.subr.bf16.mxu0 0
      %1034 = vmatpush2.bf16.msra.mxu0 0
      %1035 = vmatprep.subr.bf16.mxu0 0
      %1036 = vmatpush2.bf16.msra.mxu0 0
      %1037 = vmatprep.subr.bf16.mxu0 0
      %1038 = vmatpush2.bf16.msra.mxu0 0
      %1039 = vmatprep.subr.bf16.mxu0 0
      %1040 = vmatpush2.bf16.msra.mxu0 0
      %1041 = vmatprep.subr.bf16.mxu0 0
      %1042 = vmatpush2.bf16.msra.mxu0 0
      %1043 = vmatprep.subr.bf16.mxu0 0
      %1044 = vmatpush2.bf16.msra.mxu0 0
      %1045 = vmatprep.subr.bf16.mxu0 0
      %1046 = vmatpush2.bf16.msra.mxu0 0
      %1047 = vmatprep.subr.bf16.mxu0 0
      %1048 = vmatpush2.bf16.msra.mxu0 0
      %1049 = vmatprep.mubr.bf16.mxu0 0
      %1050 = vmatmul.mubr.bf16.gmra.mxu0 %v1015
      %v1051 = vpop.f32.mrf.mxu0
      %v1052 = vadd.f32 0.0, %v1051
      %v1053 = vpop.f32.mrf.mxu0
      %v1054 = vpop.f32.mrf.mxu0
      %v1055 = vadd.f32 0.0, %v1054
      %v1056 = vpop.f32.mrf.mxu0
      %1057 = vdwg.mxu0
      %v1059 = vlaneseq
      %v1060 = vshrl.u32 %v1059, 7
      %v1061 = vsub.s32 0, %v1060
      %v1062 = vrot.slane %v983, %v1061
      %v1064 = vadd.f32 %v1062, %v1052
      %v1065 = vadd.f32 %v1062, %v1055
      %v1066 = vrot.slane %v981, 7
      %v1067 = vrot.slane %v982, 7
      %vm1068 = vcmp.lt.s32.totalorder %v490, 1
      %v1069 = vsel %vm1068, %v1066, %v1067
      %v1070 = vsel %vm1068, %v1067, %v1066
      %vm1071 = vcmp.ge.s32.totalorder %v490, 1
      %vm1072 = vcmp.ge.s32.totalorder %v491, 1
      %v1073 = vsel %vm1071, 1, 0
      %v1074 = vsel %vm1072, 1, 0
      %vm1075 = vcmp.eq.s32.totalorder %v1073, 1
      %vm1076 = vcmp.eq.s32.totalorder %v1074, 1
      %v1077 = vsel %vm1075, %v1070, 0.0
      %v1078 = vsel %vm1076, %v1069, 0.0
      %s1079 = scalar_lea.vmem %s6, 16
      %v1080 = vld [vmem:[%s1079] sm:$0xf]
      %v1081 = vld [vmem:[%s1079 + $0x4] sm:$0xf]
      %v1082 = vld [vmem:[%s1079 + $0x8] sm:$0xf]
      %v1083 = vld [vmem:[%s1079 + $0xc] sm:$0xf]
      %v1084 = vpack.c.bf16 %v1078, %v1077
      %v1089 = vunpack.c.l.b16 %v1080
      %v1090 = vunpack.c.l.b16 %v1081
      %v1091 = vunpack.c.l.b16 %v1082
      %v1092 = vunpack.c.l.b16 %v1083
      %v1093 = vpack.c.b16 %v1090, %v1089
      %v1094 = vpack.c.b16 %v1092, %v1091
      %v1098 = vsel %vm514, %v1084, 0
      %1100 = vmatprep.subr.bf16.mxu0 0
      %1101 = vmatpush1.bf16.msra.mxu0 0
      %1102 = vmatprep.subr.bf16.mxu0 0
      %1103 = vmatpush1.bf16.msra.mxu0 0
      %1104 = vmatprep.subr.bf16.mxu0 0
      %1105 = vmatpush1.bf16.msra.mxu0 0
      %1106 = vmatprep.subr.bf16.mxu0 0
      %1107 = vmatpush1.bf16.msra.mxu0 0
      %1108 = vmatprep.subr.bf16.mxu0 0
      %1109 = vmatpush1.bf16.msra.mxu0 0
      %1110 = vmatprep.subr.bf16.mxu0 0
      %1111 = vmatpush1.bf16.msra.mxu0 0
      %1112 = vmatprep.subr.bf16.mxu0 0
      %1113 = vmatpush1.bf16.msra.mxu0 %v1094
      %1114 = vmatprep.subr.bf16.mxu0 0
      %1115 = vmatpush1.bf16.msra.mxu0 %v1093
      %1116 = vmatprep.subr.bf16.mxu0 0
      %1117 = vmatpush2.bf16.msra.mxu0 0
      %1118 = vmatprep.subr.bf16.mxu0 0
      %1119 = vmatpush2.bf16.msra.mxu0 0
      %1120 = vmatprep.subr.bf16.mxu0 0
      %1121 = vmatpush2.bf16.msra.mxu0 0
      %1122 = vmatprep.subr.bf16.mxu0 0
      %1123 = vmatpush2.bf16.msra.mxu0 0
      %1124 = vmatprep.subr.bf16.mxu0 0
      %1125 = vmatpush2.bf16.msra.mxu0 0
      %1126 = vmatprep.subr.bf16.mxu0 0
      %1127 = vmatpush2.bf16.msra.mxu0 0
      %1128 = vmatprep.subr.bf16.mxu0 0
      %1129 = vmatpush2.bf16.msra.mxu0 0
      %1130 = vmatprep.subr.bf16.mxu0 0
      %1131 = vmatpush2.bf16.msra.mxu0 0
      %1132 = vmatprep.mubr.bf16.mxu0 0
      %1133 = vmatmul.mubr.bf16.gmra.mxu0 %v1098
      %v1134 = vpop.f32.mrf.mxu0
      %v1135 = vadd.f32 0.0, %v1134
      %v1136 = vpop.f32.mrf.mxu0
      %v1137 = vpop.f32.mrf.mxu0
      %v1138 = vadd.f32 0.0, %v1137
      %v1139 = vpop.f32.mrf.mxu0
      %1140 = vdwg.mxu0
      %v1141 = vadd.f32 %v1064, %v1135
      %v1142 = vadd.f32 %v1065, %v1138
      %s1143 = scalar_lea.vmem %s6, 32
      %v1144 = vld [vmem:[%s1143] sm:$0xf]
      %v1145 = vld [vmem:[%s1143 + $0x4] sm:$0xf]
      %v1146 = vld [vmem:[%s1143 + $0x8] sm:$0xf]
      %v1147 = vld [vmem:[%s1143 + $0xc] sm:$0xf]
      %v1148 = vpack.c.bf16 %v982, %v981
      %v1153 = vunpack.c.l.b16 %v1144
      %v1154 = vunpack.c.l.b16 %v1145
      %v1155 = vunpack.c.l.b16 %v1146
      %v1156 = vunpack.c.l.b16 %v1147
      %v1157 = vpack.c.b16 %v1154, %v1153
      %v1158 = vpack.c.b16 %v1156, %v1155
      %v1162 = vsel %vm514, %v1148, 0
      %1164 = vmatprep.subr.bf16.mxu0 0
      %1165 = vmatpush1.bf16.msra.mxu0 0
      %1166 = vmatprep.subr.bf16.mxu0 0
      %1167 = vmatpush1.bf16.msra.mxu0 0
      %1168 = vmatprep.subr.bf16.mxu0 0
      %1169 = vmatpush1.bf16.msra.mxu0 0
      %1170 = vmatprep.subr.bf16.mxu0 0
      %1171 = vmatpush1.bf16.msra.mxu0 0
      %1172 = vmatprep.subr.bf16.mxu0 0
      %1173 = vmatpush1.bf16.msra.mxu0 0
      %1174 = vmatprep.subr.bf16.mxu0 0
      %1175 = vmatpush1.bf16.msra.mxu0 0
      %1176 = vmatprep.subr.bf16.mxu0 0
      %1177 = vmatpush1.bf16.msra.mxu0 %v1158
      %1178 = vmatprep.subr.bf16.mxu0 0
      %1179 = vmatpush1.bf16.msra.mxu0 %v1157
      %1180 = vmatprep.subr.bf16.mxu0 0
      %1181 = vmatpush2.bf16.msra.mxu0 0
      %1182 = vmatprep.subr.bf16.mxu0 0
      %1183 = vmatpush2.bf16.msra.mxu0 0
      %1184 = vmatprep.subr.bf16.mxu0 0
      %1185 = vmatpush2.bf16.msra.mxu0 0
      %1186 = vmatprep.subr.bf16.mxu0 0
      %1187 = vmatpush2.bf16.msra.mxu0 0
      %1188 = vmatprep.subr.bf16.mxu0 0
      %1189 = vmatpush2.bf16.msra.mxu0 0
      %1190 = vmatprep.subr.bf16.mxu0 0
      %1191 = vmatpush2.bf16.msra.mxu0 0
      %1192 = vmatprep.subr.bf16.mxu0 0
      %1193 = vmatpush2.bf16.msra.mxu0 0
      %1194 = vmatprep.subr.bf16.mxu0 0
      %1195 = vmatpush2.bf16.msra.mxu0 0
      %1196 = vmatprep.mubr.bf16.mxu0 0
      %1197 = vmatmul.mubr.bf16.gmra.mxu0 %v1162
      %v1198 = vpop.f32.mrf.mxu0
      %v1199 = vadd.f32 0.0, %v1198
      %v1200 = vpop.f32.mrf.mxu0
      %v1201 = vpop.f32.mrf.mxu0
      %v1202 = vadd.f32 0.0, %v1201
      %v1203 = vpop.f32.mrf.mxu0
      %1204 = vdwg.mxu0
      %v1205 = vadd.f32 %v1141, %v1199
      %v1206 = vadd.f32 %v1142, %v1202
      %v1207 = vmax.f32 %v1205, 0.0
      %v1208 = vmax.f32 %v1206, 0.0
      %v1209 = vmul.f32 %v1207, %v480
      %v1210 = vmul.f32 %v1208, %v485
      %v1211 = vrot.slane %v1209, 6
      %v1212 = vrot.slane %v1210, 6
      %v1213 = vsel %vm986, %v1211, %v1212
      %v1214 = vsel %vm986, %v1212, %v1211
      %v1215 = vsel %vm993, %v1214, 0.0
      %v1216 = vsel %vm994, %v1213, 0.0
      %v1217 = vld [vmem:[%s8] sm:$0xf]
      %v1218 = vld [vmem:[%s8 + $0x4] sm:$0xf]
      %v1219 = vld [vmem:[%s8 + $0x8] sm:$0xf]
      %v1220 = vld [vmem:[%s8 + $0xc] sm:$0xf]
      %v1221 = vld [vmem:[%s8 + $0x10] sm:$0xf]
      %v1222 = vld [vmem:[%s8 + $0x14] sm:$0xf]
      %v1223 = vld [vmem:[%s8 + $0x18] sm:$0xf]
      %v1224 = vld [vmem:[%s8 + $0x1c] sm:$0xf]
      %v1225 = vpack.c.bf16 %v1216, %v1215
      %v1234 = vunpack.c.l.b16 %v1217
      %v1235 = vunpack.c.l.b16 %v1218
      %v1236 = vunpack.c.l.b16 %v1219
      %v1237 = vunpack.c.l.b16 %v1220
      %v1238 = vunpack.c.l.b16 %v1221
      %v1239 = vunpack.c.l.b16 %v1222
      %v1240 = vunpack.c.l.b16 %v1223
      %v1241 = vunpack.c.l.b16 %v1224
      %v1242 = vpack.c.b16 %v1235, %v1234
      %v1243 = vpack.c.b16 %v1237, %v1236
      %v1244 = vpack.c.b16 %v1239, %v1238
      %v1245 = vpack.c.b16 %v1241, %v1240
      %vm1250 = vcmask 523264
      %v1252 = vsel %vm1250, %v1225, 0
      %1254 = vmatprep.subr.bf16.mxu0 0
      %1255 = vmatpush1.bf16.msra.mxu0 0
      %1256 = vmatprep.subr.bf16.mxu0 0
      %1257 = vmatpush1.bf16.msra.mxu0 0
      %1258 = vmatprep.subr.bf16.mxu0 0
      %1259 = vmatpush1.bf16.msra.mxu0 0
      %1260 = vmatprep.subr.bf16.mxu0 0
      %1261 = vmatpush1.bf16.msra.mxu0 0
      %1262 = vmatprep.subr.bf16.mxu0 0
      %1263 = vmatpush1.bf16.msra.mxu0 %v1245
      %1264 = vmatprep.subr.bf16.mxu0 0
      %1265 = vmatpush1.bf16.msra.mxu0 %v1244
      %1266 = vmatprep.subr.bf16.mxu0 0
      %1267 = vmatpush1.bf16.msra.mxu0 %v1243
      %1268 = vmatprep.subr.bf16.mxu0 0
      %1269 = vmatpush1.bf16.msra.mxu0 %v1242
      %1270 = vmatprep.subr.bf16.mxu0 0
      %1271 = vmatpush2.bf16.msra.mxu0 0
      %1272 = vmatprep.subr.bf16.mxu0 0
      %1273 = vmatpush2.bf16.msra.mxu0 0
      %1274 = vmatprep.subr.bf16.mxu0 0
      %1275 = vmatpush2.bf16.msra.mxu0 0
      %1276 = vmatprep.subr.bf16.mxu0 0
      %1277 = vmatpush2.bf16.msra.mxu0 0
      %1278 = vmatprep.subr.bf16.mxu0 0
      %1279 = vmatpush2.bf16.msra.mxu0 0
      %1280 = vmatprep.subr.bf16.mxu0 0
      %1281 = vmatpush2.bf16.msra.mxu0 0
      %1282 = vmatprep.subr.bf16.mxu0 0
      %1283 = vmatpush2.bf16.msra.mxu0 0
      %1284 = vmatprep.subr.bf16.mxu0 0
      %1285 = vmatpush2.bf16.msra.mxu0 0
      %1286 = vmatprep.mubr.bf16.mxu0 0
      %1287 = vmatmul.mubr.bf16.gmra.mxu0 %v1252
      %v1288 = vpop.f32.mrf.mxu0
      %v1289 = vadd.f32 0.0, %v1288
      %v1290 = vpop.f32.mrf.mxu0
      %v1291 = vpop.f32.mrf.mxu0
      %v1292 = vadd.f32 0.0, %v1291
      %v1293 = vpop.f32.mrf.mxu0
      %1294 = vdwg.mxu0
      %v1295 = vlaneseq
      %v1296 = vshrl.u32 %v1295, 7
      %v1297 = vsub.s32 7, %v1296
      %v1298 = vrot.slane %v496, %v1297
      %v1299 = vadd.f32 %v1298, %v1289
      %v1300 = vadd.f32 %v1298, %v1292
      %v1301 = vrot.slane %v1209, 7
      %v1302 = vrot.slane %v1210, 7
      %v1303 = vsel %vm1068, %v1301, %v1302
      %v1304 = vsel %vm1068, %v1302, %v1301
      %v1305 = vsel %vm1075, %v1304, 0.0
      %v1306 = vsel %vm1076, %v1303, 0.0
      %s1307 = scalar_lea.vmem %s8, 32
      %v1308 = vld [vmem:[%s1307] sm:$0xf]
      %v1309 = vld [vmem:[%s1307 + $0x4] sm:$0xf]
      %v1310 = vld [vmem:[%s1307 + $0x8] sm:$0xf]
      %v1311 = vld [vmem:[%s1307 + $0xc] sm:$0xf]
      %v1312 = vld [vmem:[%s1307 + $0x10] sm:$0xf]
      %v1313 = vld [vmem:[%s1307 + $0x14] sm:$0xf]
      %v1314 = vld [vmem:[%s1307 + $0x18] sm:$0xf]
      %v1315 = vld [vmem:[%s1307 + $0x1c] sm:$0xf]
      %v1316 = vpack.c.bf16 %v1306, %v1305
      %v1325 = vunpack.c.l.b16 %v1308
      %v1326 = vunpack.c.l.b16 %v1309
      %v1327 = vunpack.c.l.b16 %v1310
      %v1328 = vunpack.c.l.b16 %v1311
      %v1329 = vunpack.c.l.b16 %v1312
      %v1330 = vunpack.c.l.b16 %v1313
      %v1331 = vunpack.c.l.b16 %v1314
      %v1332 = vunpack.c.l.b16 %v1315
      %v1333 = vpack.c.b16 %v1326, %v1325
      %v1334 = vpack.c.b16 %v1328, %v1327
      %v1335 = vpack.c.b16 %v1330, %v1329
      %v1336 = vpack.c.b16 %v1332, %v1331
      %v1342 = vsel %vm1250, %v1316, 0
      %1344 = vmatprep.subr.bf16.mxu0 0
      %1345 = vmatpush1.bf16.msra.mxu0 0
      %1346 = vmatprep.subr.bf16.mxu0 0
      %1347 = vmatpush1.bf16.msra.mxu0 0
      %1348 = vmatprep.subr.bf16.mxu0 0
      %1349 = vmatpush1.bf16.msra.mxu0 0
      %1350 = vmatprep.subr.bf16.mxu0 0
      %1351 = vmatpush1.bf16.msra.mxu0 0
      %1352 = vmatprep.subr.bf16.mxu0 0
      %1353 = vmatpush1.bf16.msra.mxu0 %v1336
      %1354 = vmatprep.subr.bf16.mxu0 0
      %1355 = vmatpush1.bf16.msra.mxu0 %v1335
      %1356 = vmatprep.subr.bf16.mxu0 0
      %1357 = vmatpush1.bf16.msra.mxu0 %v1334
      %1358 = vmatprep.subr.bf16.mxu0 0
      %1359 = vmatpush1.bf16.msra.mxu0 %v1333
      %1360 = vmatprep.subr.bf16.mxu0 0
      %1361 = vmatpush2.bf16.msra.mxu0 0
      %1362 = vmatprep.subr.bf16.mxu0 0
      %1363 = vmatpush2.bf16.msra.mxu0 0
      %1364 = vmatprep.subr.bf16.mxu0 0
      %1365 = vmatpush2.bf16.msra.mxu0 0
      %1366 = vmatprep.subr.bf16.mxu0 0
      %1367 = vmatpush2.bf16.msra.mxu0 0
      %1368 = vmatprep.subr.bf16.mxu0 0
      %1369 = vmatpush2.bf16.msra.mxu0 0
      %1370 = vmatprep.subr.bf16.mxu0 0
      %1371 = vmatpush2.bf16.msra.mxu0 0
      %1372 = vmatprep.subr.bf16.mxu0 0
      %1373 = vmatpush2.bf16.msra.mxu0 0
      %1374 = vmatprep.subr.bf16.mxu0 0
      %1375 = vmatpush2.bf16.msra.mxu0 0
      %1376 = vmatprep.mubr.bf16.mxu0 0
      %1377 = vmatmul.mubr.bf16.gmra.mxu0 %v1342
      %v1378 = vpop.f32.mrf.mxu0
      %v1379 = vadd.f32 0.0, %v1378
      %v1380 = vpop.f32.mrf.mxu0
      %v1381 = vpop.f32.mrf.mxu0
      %v1382 = vadd.f32 0.0, %v1381
      %v1383 = vpop.f32.mrf.mxu0
      %1384 = vdwg.mxu0
      %v1385 = vadd.f32 %v1299, %v1379
      %v1386 = vadd.f32 %v1300, %v1382
      %s1387 = scalar_lea.vmem %s8, 64
      %v1388 = vld [vmem:[%s1387] sm:$0xf]
      %v1389 = vld [vmem:[%s1387 + $0x4] sm:$0xf]
      %v1390 = vld [vmem:[%s1387 + $0x8] sm:$0xf]
      %v1391 = vld [vmem:[%s1387 + $0xc] sm:$0xf]
      %v1392 = vld [vmem:[%s1387 + $0x10] sm:$0xf]
      %v1393 = vld [vmem:[%s1387 + $0x14] sm:$0xf]
      %v1394 = vld [vmem:[%s1387 + $0x18] sm:$0xf]
      %v1395 = vld [vmem:[%s1387 + $0x1c] sm:$0xf]
      %v1396 = vpack.c.bf16 %v1210, %v1209
      %v1405 = vunpack.c.l.b16 %v1388
      %v1406 = vunpack.c.l.b16 %v1389
      %v1407 = vunpack.c.l.b16 %v1390
      %v1408 = vunpack.c.l.b16 %v1391
      %v1409 = vunpack.c.l.b16 %v1392
      %v1410 = vunpack.c.l.b16 %v1393
      %v1411 = vunpack.c.l.b16 %v1394
      %v1412 = vunpack.c.l.b16 %v1395
      %v1413 = vpack.c.b16 %v1406, %v1405
      %v1414 = vpack.c.b16 %v1408, %v1407
      %v1415 = vpack.c.b16 %v1410, %v1409
      %v1416 = vpack.c.b16 %v1412, %v1411
      %v1422 = vsel %vm1250, %v1396, 0
      %1424 = vmatprep.subr.bf16.mxu0 0
      %1425 = vmatpush1.bf16.msra.mxu0 0
      %1426 = vmatprep.subr.bf16.mxu0 0
      %1427 = vmatpush1.bf16.msra.mxu0 0
      %1428 = vmatprep.subr.bf16.mxu0 0
      %1429 = vmatpush1.bf16.msra.mxu0 0
      %1430 = vmatprep.subr.bf16.mxu0 0
      %1431 = vmatpush1.bf16.msra.mxu0 0
      %1432 = vmatprep.subr.bf16.mxu0 0
      %1433 = vmatpush1.bf16.msra.mxu0 %v1416
      %1434 = vmatprep.subr.bf16.mxu0 0
      %1435 = vmatpush1.bf16.msra.mxu0 %v1415
      %1436 = vmatprep.subr.bf16.mxu0 0
      %1437 = vmatpush1.bf16.msra.mxu0 %v1414
      %1438 = vmatprep.subr.bf16.mxu0 0
      %1439 = vmatpush1.bf16.msra.mxu0 %v1413
      %1440 = vmatprep.subr.bf16.mxu0 0
      %1441 = vmatpush2.bf16.msra.mxu0 0
      %1442 = vmatprep.subr.bf16.mxu0 0
      %1443 = vmatpush2.bf16.msra.mxu0 0
      %1444 = vmatprep.subr.bf16.mxu0 0
      %1445 = vmatpush2.bf16.msra.mxu0 0
      %1446 = vmatprep.subr.bf16.mxu0 0
      %1447 = vmatpush2.bf16.msra.mxu0 0
      %1448 = vmatprep.subr.bf16.mxu0 0
      %1449 = vmatpush2.bf16.msra.mxu0 0
      %1450 = vmatprep.subr.bf16.mxu0 0
      %1451 = vmatpush2.bf16.msra.mxu0 0
      %1452 = vmatprep.subr.bf16.mxu0 0
      %1453 = vmatpush2.bf16.msra.mxu0 0
      %1454 = vmatprep.subr.bf16.mxu0 0
      %1455 = vmatpush2.bf16.msra.mxu0 0
      %1456 = vmatprep.mubr.bf16.mxu0 0
      %1457 = vmatmul.mubr.bf16.gmra.mxu0 %v1422
      %v1458 = vpop.f32.mrf.mxu0
      %v1459 = vadd.f32 0.0, %v1458
      %v1460 = vpop.f32.mrf.mxu0
      %v1461 = vpop.f32.mrf.mxu0
      %v1462 = vadd.f32 0.0, %v1461
      %v1463 = vpop.f32.mrf.mxu0
      %1464 = vdwg.mxu0
      %v1465 = vadd.f32 %v1385, %v1459
      %v1466 = vadd.f32 %v1386, %v1462
      %v1467 = vmul.f32 %v1465, %v480
      %v1468 = vmul.f32 %v1466, %v485
      %v1469 = vadd.f32 %v979, %v1467
      %v1470 = vadd.f32 %v980, %v1468
      %v1471 = vsel %vm514, %v1469, 0.0
      %1472 = vadd.xlane.f32.xlu0 %v1471
      %v1473 = vpop.xlane.xlu0 %1472
      %v1474 = vsel %vm514, %v1470, 0.0
      %1475 = vadd.xlane.f32.xlu0 %v1474
      %v1476 = vpop.xlane.xlu0 %1475
      %v1477 = vmul.f32 %v1473, %v948
      %v1478 = vmul.f32 %v1476, %v948
      %v1479 = vsub.f32 %v1469, %v1477
      %v1480 = vsub.f32 %v1470, %v1478
      %v1481 = vmul.f32 %v1479, %v1479
      %v1482 = vmul.f32 %v1480, %v1480
      %v1483 = vsel %vm514, %v1481, 0.0
      %1484 = vadd.xlane.f32.xlu0 %v1483
      %v1485 = vpop.xlane.xlu0 %1484
      %v1486 = vsel %vm514, %v1482, 0.0
      %1487 = vadd.xlane.f32.xlu0 %v1486
      %v1488 = vpop.xlane.xlu0 %1487
      %v1489 = vmul.f32 %v1485, %v948
      %v1490 = vmul.f32 %v1488, %v948
      %v1491 = vadd.f32 %v1489, 1e-05
      %v1492 = vadd.f32 %v1490, 1e-05
      %v1493 = vrsqrt.pop %v1491
      %v1494 = vrsqrt.pop %v1492
      %v1495 = vmul.f32 %v1479, %v1493
      %v1496 = vmul.f32 %v1480, %v1494
      %v1497 = vlaneseq
      %v1498 = vshrl.u32 %v1497, 7
      %v1499 = vsub.s32 5, %v1498
      %v1500 = vrot.slane %v496, %v1499
      %v1501 = vmul.f32 %v1495, %v1500
      %v1502 = vmul.f32 %v1496, %v1500
      %v1503 = vlaneseq
      %v1504 = vshrl.u32 %v1503, 7
      %v1505 = vsub.s32 6, %v1504
      %v1506 = vrot.slane %v496, %v1505
      %v1507 = vadd.f32 %v1501, %v1506
      %v1508 = vadd.f32 %v1502, %v1506
      %s1509 = scalar_lea.vmem %s5, 8
      %v1510 = vld [vmem:[%s1509] sm:$0xff]
      %s1511 = scalar_lea.vmem %s3, 16
      %v1512 = vld [vmem:[%s1511] sm:$0xf]
      %v1513 = vld [vmem:[%s1511 + $0x4] sm:$0xf]
      %v1514 = vld [vmem:[%s1511 + $0x8] sm:$0xf]
      %v1515 = vld [vmem:[%s1511 + $0xc] sm:$0xf]
      %v1516 = vpack.c.bf16 %v1508, %v1507
      %v1521 = vunpack.c.l.b16 %v1512
      %v1522 = vunpack.c.l.b16 %v1513
      %v1523 = vunpack.c.l.b16 %v1514
      %v1524 = vunpack.c.l.b16 %v1515
      %v1525 = vpack.c.b16 %v1522, %v1521
      %v1526 = vpack.c.b16 %v1524, %v1523
      %v1530 = vsel %vm514, %v1516, 0
      %1532 = vmatprep.subr.bf16.mxu0 0
      %1533 = vmatpush1.bf16.msra.mxu0 0
      %1534 = vmatprep.subr.bf16.mxu0 0
      %1535 = vmatpush1.bf16.msra.mxu0 0
      %1536 = vmatprep.subr.bf16.mxu0 0
      %1537 = vmatpush1.bf16.msra.mxu0 0
      %1538 = vmatprep.subr.bf16.mxu0 0
      %1539 = vmatpush1.bf16.msra.mxu0 0
      %1540 = vmatprep.subr.bf16.mxu0 0
      %1541 = vmatpush1.bf16.msra.mxu0 0
      %1542 = vmatprep.subr.bf16.mxu0 0
      %1543 = vmatpush1.bf16.msra.mxu0 0
      %1544 = vmatprep.subr.bf16.mxu0 0
      %1545 = vmatpush1.bf16.msra.mxu0 %v1526
      %1546 = vmatprep.subr.bf16.mxu0 0
      %1547 = vmatpush1.bf16.msra.mxu0 %v1525
      %1548 = vmatprep.subr.bf16.mxu0 0
      %1549 = vmatpush2.bf16.msra.mxu0 0
      %1550 = vmatprep.subr.bf16.mxu0 0
      %1551 = vmatpush2.bf16.msra.mxu0 0
      %1552 = vmatprep.subr.bf16.mxu0 0
      %1553 = vmatpush2.bf16.msra.mxu0 0
      %1554 = vmatprep.subr.bf16.mxu0 0
      %1555 = vmatpush2.bf16.msra.mxu0 0
      %1556 = vmatprep.subr.bf16.mxu0 0
      %1557 = vmatpush2.bf16.msra.mxu0 0
      %1558 = vmatprep.subr.bf16.mxu0 0
      %1559 = vmatpush2.bf16.msra.mxu0 0
      %1560 = vmatprep.subr.bf16.mxu0 0
      %1561 = vmatpush2.bf16.msra.mxu0 0
      %1562 = vmatprep.subr.bf16.mxu0 0
      %1563 = vmatpush2.bf16.msra.mxu0 0
      %1564 = vmatprep.mubr.bf16.mxu0 0
      %1565 = vmatmul.mubr.bf16.gmra.mxu0 %v1530
      %v1566 = vpop.f32.mrf.mxu0
      %v1567 = vadd.f32 0.0, %v1566
      %v1568 = vpop.f32.mrf.mxu0
      %v1569 = vpop.f32.mrf.mxu0
      %v1570 = vadd.f32 0.0, %v1569
      %v1571 = vpop.f32.mrf.mxu0
      %1572 = vdwg.mxu0
      %v1573 = vlaneseq
      %v1574 = vshrl.u32 %v1573, 7
      %v1575 = vsub.s32 0, %v1574
      %v1576 = vrot.slane %v1510, %v1575
      %v1577 = vadd.f32 %v1567, %v1576
      %v1578 = vadd.f32 %v1570, %v1576
      %v1579 = vlaneseq
      %v1580 = vshrl.u32 %v1579, 7
      %v1581 = vsub.s32 1, %v1580
      %v1582 = vrot.slane %v1510, %v1581
      %1584 = vrot.lane.b32.xlu0 %v1582, 32
      %v1585 = vpop.permute.xlu0 %1584
      %v1587 = vadd.f32 %v1567, %v1585
      %v1588 = vadd.f32 %v1570, %v1585
      %v1589 = vmul.f32 %v1577, 0.25
      %v1590 = vmul.f32 %v1578, 0.25
      %s1591 = scalar_lea.vmem %s4, 16
      %v1592 = vld [vmem:[%s1591] sm:$0xf]
      %v1593 = vld [vmem:[%s1591 + $0x4] sm:$0xf]
      %v1594 = vld [vmem:[%s1591 + $0x8] sm:$0xf]
      %v1595 = vld [vmem:[%s1591 + $0xc] sm:$0xf]
      %v1596 = vpack.c.bf16 %v1590, %v1589
      %v1597 = vpack.c.bf16 %v1578, %v1577
      %v1599 = vsel %vm583, %v1596, 0
      %v1602 = vsel %vm583, %v1597, 0
      %1604 = vmatprep.subr.bf16.mxu0 0
      %1605 = vmatpush1.bf16.xpose.msra.mxu0 0
      %1606 = vmatprep.subr.bf16.mxu0 0
      %1607 = vmatpush1.bf16.xpose.msra.mxu0 0
      %1608 = vmatprep.subr.bf16.mxu0 0
      %1609 = vmatpush1.bf16.xpose.msra.mxu0 0
      %1610 = vmatprep.subr.bf16.mxu0 0
      %1611 = vmatpush1.bf16.xpose.msra.mxu0 0
      %1612 = vmatprep.subr.bf16.mxu0 0
      %1613 = vmatpush1.bf16.xpose.msra.mxu0 0
      %1614 = vmatprep.subr.bf16.mxu0 0
      %1615 = vmatpush1.bf16.xpose.msra.mxu0 0
      %1616 = vmatprep.subr.bf16.mxu0 0
      %1617 = vmatpush1.bf16.xpose.msra.mxu0 0
      %1618 = vmatprep.subr.bf16.mxu0 0
      %1619 = vmatpush1.bf16.xpose.msra.mxu0 %v1602
      %1620 = vmatprep.subr.bf16.mxu0 0
      %1621 = vmatpush2.bf16.xpose.msra.mxu0 0
      %1622 = vmatprep.subr.bf16.mxu0 0
      %1623 = vmatpush2.bf16.xpose.msra.mxu0 0
      %1624 = vmatprep.subr.bf16.mxu0 0
      %1625 = vmatpush2.bf16.xpose.msra.mxu0 0
      %1626 = vmatprep.subr.bf16.mxu0 0
      %1627 = vmatpush2.bf16.xpose.msra.mxu0 0
      %1628 = vmatprep.subr.bf16.mxu0 0
      %1629 = vmatpush2.bf16.xpose.msra.mxu0 0
      %1630 = vmatprep.subr.bf16.mxu0 0
      %1631 = vmatpush2.bf16.xpose.msra.mxu0 0
      %1632 = vmatprep.subr.bf16.mxu0 0
      %1633 = vmatpush2.bf16.xpose.msra.mxu0 0
      %1634 = vmatprep.subr.bf16.mxu0 0
      %1635 = vmatpush2.bf16.xpose.msra.mxu0 0
      %1636 = vmatprep.mubr.bf16.mxu0 0
      %1637 = vmatmul.mubr.bf16.gmra.mxu0 %v1599
      %v1638 = vpop.f32.mrf.mxu0
      %v1639 = vadd.f32 0.0, %v1638
      %v1640 = vpop.f32.mrf.mxu0
      %v1641 = vpop.f32.mrf.mxu0
      %v1642 = vadd.f32 0.0, %v1641
      %v1643 = vpop.f32.mrf.mxu0
      %1644 = vdwg.mxu0
      %v1645 = vsel %vm494, %v1639, -10000.0
      %v1646 = vsel %vm495, %v1642, -10000.0
      %v1647 = vsel %vm583, %v1645, -inf
      %1648 = vmax.xlane.f32.xlu0 %v1647
      %v1649 = vpop.xlane.xlu0 %1648
      %v1650 = vsel %vm583, %v1646, -inf
      %1651 = vmax.xlane.f32.xlu0 %v1650
      %v1652 = vpop.xlane.xlu0 %1651
      %v1653 = vsub.f32 %v1645, %v1649
      %v1654 = vsub.f32 %v1646, %v1652
      %v1655 = vmul.f32 %v1653, 1.442695
      %v1656 = vpow.pop %v1655
      %v1657 = vmul.f32 %v1654, 1.442695
      %v1658 = vpow.pop %v1657
      %v1659 = vsel %vm583, %v1656, 0.0
      %1660 = vadd.xlane.f32.xlu0 %v1659
      %v1661 = vpop.xlane.xlu0 %1660
      %v1662 = vsel %vm583, %v1658, 0.0
      %1663 = vadd.xlane.f32.xlu0 %v1662
      %v1664 = vpop.xlane.xlu0 %1663
      %v1665 = vrcp.pop %v1661
      %v1666 = vrcp.pop %v1664
      %v1667 = vmul.f32 %v1656, %v1665
      %v1668 = vmul.f32 %v1658, %v1666
      %v1669 = vpack.c.bf16 %v1668, %v1667
      %v1670 = vpack.c.bf16 %v1588, %v1587
      %1672 = vrot.lane.b32.xlu0 %v1670, 96
      %v1673 = vpop.permute.xlu0 %1672
      %v1676 = vsel %vm583, %v1669, 0
      %1678 = vmatprep.subr.bf16.mxu0 0
      %1679 = vmatpush1.bf16.msra.mxu0 0
      %1680 = vmatprep.subr.bf16.mxu0 0
      %1681 = vmatpush1.bf16.msra.mxu0 0
      %1682 = vmatprep.subr.bf16.mxu0 0
      %1683 = vmatpush1.bf16.msra.mxu0 0
      %1684 = vmatprep.subr.bf16.mxu0 0
      %1685 = vmatpush1.bf16.msra.mxu0 0
      %1686 = vmatprep.subr.bf16.mxu0 0
      %1687 = vmatpush1.bf16.msra.mxu0 0
      %1688 = vmatprep.subr.bf16.mxu0 0
      %1689 = vmatpush1.bf16.msra.mxu0 0
      %1690 = vmatprep.subr.bf16.mxu0 0
      %1691 = vmatpush1.bf16.msra.mxu0 0
      %1692 = vmatprep.subr.bf16.mxu0 0
      %1693 = vmatpush1.bf16.msra.mxu0 %v1673
      %1694 = vmatprep.subr.bf16.mxu0 0
      %1695 = vmatpush2.bf16.msra.mxu0 0
      %1696 = vmatprep.subr.bf16.mxu0 0
      %1697 = vmatpush2.bf16.msra.mxu0 0
      %1698 = vmatprep.subr.bf16.mxu0 0
      %1699 = vmatpush2.bf16.msra.mxu0 0
      %1700 = vmatprep.subr.bf16.mxu0 0
      %1701 = vmatpush2.bf16.msra.mxu0 0
      %1702 = vmatprep.subr.bf16.mxu0 0
      %1703 = vmatpush2.bf16.msra.mxu0 0
      %1704 = vmatprep.subr.bf16.mxu0 0
      %1705 = vmatpush2.bf16.msra.mxu0 0
      %1706 = vmatprep.subr.bf16.mxu0 0
      %1707 = vmatpush2.bf16.msra.mxu0 0
      %1708 = vmatprep.subr.bf16.mxu0 0
      %1709 = vmatpush2.bf16.msra.mxu0 0
      %1710 = vmatprep.mubr.bf16.mxu0 0
      %1711 = vmatmul.mubr.bf16.gmra.mxu0 %v1676
      %v1712 = vpop.f32.mrf.mxu0
      %v1713 = vadd.f32 0.0, %v1712
      %v1714 = vpop.f32.mrf.mxu0
      %v1715 = vpop.f32.mrf.mxu0
      %v1716 = vadd.f32 0.0, %v1715
      %v1717 = vpop.f32.mrf.mxu0
      %1718 = vdwg.mxu0
      %v1719 = vpack.c.bf16 %v1716, %v1713
      %v1722 = vunpack.c.l.b16 %v1592
      %v1723 = vunpack.c.l.b16 %v1593
      %v1724 = vpack.c.b16 %v1723, %v1722
      %v1727 = vsel %vm583, %v1719, 0
      %1729 = vmatprep.subr.bf16.mxu0 0
      %1730 = vmatpush1.bf16.msra.mxu0 0
      %1731 = vmatprep.subr.bf16.mxu0 0
      %1732 = vmatpush1.bf16.msra.mxu0 0
      %1733 = vmatprep.subr.bf16.mxu0 0
      %1734 = vmatpush1.bf16.msra.mxu0 0
      %1735 = vmatprep.subr.bf16.mxu0 0
      %1736 = vmatpush1.bf16.msra.mxu0 0
      %1737 = vmatprep.subr.bf16.mxu0 0
      %1738 = vmatpush1.bf16.msra.mxu0 0
      %1739 = vmatprep.subr.bf16.mxu0 0
      %1740 = vmatpush1.bf16.msra.mxu0 0
      %1741 = vmatprep.subr.bf16.mxu0 0
      %1742 = vmatpush1.bf16.msra.mxu0 0
      %1743 = vmatprep.subr.bf16.mxu0 0
      %1744 = vmatpush1.bf16.msra.mxu0 %v1724
      %1745 = vmatprep.subr.bf16.mxu0 0
      %1746 = vmatpush2.bf16.msra.mxu0 0
      %1747 = vmatprep.subr.bf16.mxu0 0
      %1748 = vmatpush2.bf16.msra.mxu0 0
      %1749 = vmatprep.subr.bf16.mxu0 0
      %1750 = vmatpush2.bf16.msra.mxu0 0
      %1751 = vmatprep.subr.bf16.mxu0 0
      %1752 = vmatpush2.bf16.msra.mxu0 0
      %1753 = vmatprep.subr.bf16.mxu0 0
      %1754 = vmatpush2.bf16.msra.mxu0 0
      %1755 = vmatprep.subr.bf16.mxu0 0
      %1756 = vmatpush2.bf16.msra.mxu0 0
      %1757 = vmatprep.subr.bf16.mxu0 0
      %1758 = vmatpush2.bf16.msra.mxu0 0
      %1759 = vmatprep.subr.bf16.mxu0 0
      %1760 = vmatpush2.bf16.msra.mxu0 0
      %1761 = vmatprep.mubr.bf16.mxu0 0
      %1762 = vmatmul.mubr.bf16.gmra.mxu0 %v1727
      %v1763 = vpop.f32.mrf.mxu0
      %v1764 = vadd.f32 0.0, %v1763
      %v1765 = vpop.f32.mrf.mxu0
      %v1766 = vpop.f32.mrf.mxu0
      %v1767 = vadd.f32 0.0, %v1766
      %v1768 = vpop.f32.mrf.mxu0
      %1769 = vdwg.mxu0
      %v1770 = vlaneseq
      %v1771 = vshrl.u32 %v1770, 7
      %v1772 = vsub.s32 2, %v1771
      %v1773 = vrot.slane %v1510, %v1772
      %v1774 = vadd.f32 %v1773, %v1764
      %v1775 = vadd.f32 %v1773, %v1767
      %1777 = vrot.lane.b32.xlu0 %v1596, 112
      %v1778 = vpop.permute.xlu0 %1777
      %1780 = vrot.lane.b32.xlu0 %v1597, 112
      %v1781 = vpop.permute.xlu0 %1780
      %v1783 = vsel %vm583, %v1778, 0
      %v1786 = vsel %vm583, %v1781, 0
      %1788 = vmatprep.subr.bf16.mxu0 0
      %1789 = vmatpush1.bf16.xpose.msra.mxu0 0
      %1790 = vmatprep.subr.bf16.mxu0 0
      %1791 = vmatpush1.bf16.xpose.msra.mxu0 0
      %1792 = vmatprep.subr.bf16.mxu0 0
      %1793 = vmatpush1.bf16.xpose.msra.mxu0 0
      %1794 = vmatprep.subr.bf16.mxu0 0
      %1795 = vmatpush1.bf16.xpose.msra.mxu0 0
      %1796 = vmatprep.subr.bf16.mxu0 0
      %1797 = vmatpush1.bf16.xpose.msra.mxu0 0
      %1798 = vmatprep.subr.bf16.mxu0 0
      %1799 = vmatpush1.bf16.xpose.msra.mxu0 0
      %1800 = vmatprep.subr.bf16.mxu0 0
      %1801 = vmatpush1.bf16.xpose.msra.mxu0 0
      %1802 = vmatprep.subr.bf16.mxu0 0
      %1803 = vmatpush1.bf16.xpose.msra.mxu0 %v1786
      %1804 = vmatprep.subr.bf16.mxu0 0
      %1805 = vmatpush2.bf16.xpose.msra.mxu0 0
      %1806 = vmatprep.subr.bf16.mxu0 0
      %1807 = vmatpush2.bf16.xpose.msra.mxu0 0
      %1808 = vmatprep.subr.bf16.mxu0 0
      %1809 = vmatpush2.bf16.xpose.msra.mxu0 0
      %1810 = vmatprep.subr.bf16.mxu0 0
      %1811 = vmatpush2.bf16.xpose.msra.mxu0 0
      %1812 = vmatprep.subr.bf16.mxu0 0
      %1813 = vmatpush2.bf16.xpose.msra.mxu0 0
      %1814 = vmatprep.subr.bf16.mxu0 0
      %1815 = vmatpush2.bf16.xpose.msra.mxu0 0
      %1816 = vmatprep.subr.bf16.mxu0 0
      %1817 = vmatpush2.bf16.xpose.msra.mxu0 0
      %1818 = vmatprep.subr.bf16.mxu0 0
      %1819 = vmatpush2.bf16.xpose.msra.mxu0 0
      %1820 = vmatprep.mubr.bf16.mxu0 0
      %1821 = vmatmul.mubr.bf16.gmra.mxu0 %v1783
      %v1822 = vpop.f32.mrf.mxu0
      %v1823 = vadd.f32 0.0, %v1822
      %v1824 = vpop.f32.mrf.mxu0
      %v1825 = vpop.f32.mrf.mxu0
      %v1826 = vadd.f32 0.0, %v1825
      %v1827 = vpop.f32.mrf.mxu0
      %1828 = vdwg.mxu0
      %v1829 = vsel %vm494, %v1823, -10000.0
      %v1830 = vsel %vm495, %v1826, -10000.0
      %v1831 = vsel %vm583, %v1829, -inf
      %1832 = vmax.xlane.f32.xlu0 %v1831
      %v1833 = vpop.xlane.xlu0 %1832
      %v1834 = vsel %vm583, %v1830, -inf
      %1835 = vmax.xlane.f32.xlu0 %v1834
      %v1836 = vpop.xlane.xlu0 %1835
      %v1837 = vsub.f32 %v1829, %v1833
      %v1838 = vsub.f32 %v1830, %v1836
      %v1839 = vmul.f32 %v1837, 1.442695
      %v1840 = vpow.pop %v1839
      %v1841 = vmul.f32 %v1838, 1.442695
      %v1842 = vpow.pop %v1841
      %v1843 = vsel %vm583, %v1840, 0.0
      %1844 = vadd.xlane.f32.xlu0 %v1843
      %v1845 = vpop.xlane.xlu0 %1844
      %v1846 = vsel %vm583, %v1842, 0.0
      %1847 = vadd.xlane.f32.xlu0 %v1846
      %v1848 = vpop.xlane.xlu0 %1847
      %v1849 = vrcp.pop %v1845
      %v1850 = vrcp.pop %v1848
      %v1851 = vmul.f32 %v1840, %v1849
      %v1852 = vmul.f32 %v1842, %v1850
      %v1853 = vpack.c.bf16 %v1852, %v1851
      %1854 = vrot.lane.b32.xlu0 %v1670, 80
      %v1855 = vpop.permute.xlu0 %1854
      %v1858 = vsel %vm583, %v1853, 0
      %1860 = vmatprep.subr.bf16.mxu0 0
      %1861 = vmatpush1.bf16.msra.mxu0 0
      %1862 = vmatprep.subr.bf16.mxu0 0
      %1863 = vmatpush1.bf16.msra.mxu0 0
      %1864 = vmatprep.subr.bf16.mxu0 0
      %1865 = vmatpush1.bf16.msra.mxu0 0
      %1866 = vmatprep.subr.bf16.mxu0 0
      %1867 = vmatpush1.bf16.msra.mxu0 0
      %1868 = vmatprep.subr.bf16.mxu0 0
      %1869 = vmatpush1.bf16.msra.mxu0 0
      %1870 = vmatprep.subr.bf16.mxu0 0
      %1871 = vmatpush1.bf16.msra.mxu0 0
      %1872 = vmatprep.subr.bf16.mxu0 0
      %1873 = vmatpush1.bf16.msra.mxu0 0
      %1874 = vmatprep.subr.bf16.mxu0 0
      %1875 = vmatpush1.bf16.msra.mxu0 %v1855
      %1876 = vmatprep.subr.bf16.mxu0 0
      %1877 = vmatpush2.bf16.msra.mxu0 0
      %1878 = vmatprep.subr.bf16.mxu0 0
      %1879 = vmatpush2.bf16.msra.mxu0 0
      %1880 = vmatprep.subr.bf16.mxu0 0
      %1881 = vmatpush2.bf16.msra.mxu0 0
      %1882 = vmatprep.subr.bf16.mxu0 0
      %1883 = vmatpush2.bf16.msra.mxu0 0
      %1884 = vmatprep.subr.bf16.mxu0 0
      %1885 = vmatpush2.bf16.msra.mxu0 0
      %1886 = vmatprep.subr.bf16.mxu0 0
      %1887 = vmatpush2.bf16.msra.mxu0 0
      %1888 = vmatprep.subr.bf16.mxu0 0
      %1889 = vmatpush2.bf16.msra.mxu0 0
      %1890 = vmatprep.subr.bf16.mxu0 0
      %1891 = vmatpush2.bf16.msra.mxu0 0
      %1892 = vmatprep.mubr.bf16.mxu0 0
      %1893 = vmatmul.mubr.bf16.gmra.mxu0 %v1858
      %v1894 = vpop.f32.mrf.mxu0
      %v1895 = vadd.f32 0.0, %v1894
      %v1896 = vpop.f32.mrf.mxu0
      %v1897 = vpop.f32.mrf.mxu0
      %v1898 = vadd.f32 0.0, %v1897
      %v1899 = vpop.f32.mrf.mxu0
      %1900 = vdwg.mxu0
      %v1901 = vpack.c.bf16 %v1898, %v1895
      %v1904 = vunpack.c.l.b16 %v1594
      %v1905 = vunpack.c.l.b16 %v1595
      %v1906 = vpack.c.b16 %v1905, %v1904
      %v1909 = vsel %vm583, %v1901, 0
      %1911 = vmatprep.subr.bf16.mxu0 0
      %1912 = vmatpush1.bf16.msra.mxu0 0
      %1913 = vmatprep.subr.bf16.mxu0 0
      %1914 = vmatpush1.bf16.msra.mxu0 0
      %1915 = vmatprep.subr.bf16.mxu0 0
      %1916 = vmatpush1.bf16.msra.mxu0 0
      %1917 = vmatprep.subr.bf16.mxu0 0
      %1918 = vmatpush1.bf16.msra.mxu0 0
      %1919 = vmatprep.subr.bf16.mxu0 0
      %1920 = vmatpush1.bf16.msra.mxu0 0
      %1921 = vmatprep.subr.bf16.mxu0 0
      %1922 = vmatpush1.bf16.msra.mxu0 0
      %1923 = vmatprep.subr.bf16.mxu0 0
      %1924 = vmatpush1.bf16.msra.mxu0 0
      %1925 = vmatprep.subr.bf16.mxu0 0
      %1926 = vmatpush1.bf16.msra.mxu0 %v1906
      %1927 = vmatprep.subr.bf16.mxu0 0
      %1928 = vmatpush2.bf16.msra.mxu0 0
      %1929 = vmatprep.subr.bf16.mxu0 0
      %1930 = vmatpush2.bf16.msra.mxu0 0
      %1931 = vmatprep.subr.bf16.mxu0 0
      %1932 = vmatpush2.bf16.msra.mxu0 0
      %1933 = vmatprep.subr.bf16.mxu0 0
      %1934 = vmatpush2.bf16.msra.mxu0 0
      %1935 = vmatprep.subr.bf16.mxu0 0
      %1936 = vmatpush2.bf16.msra.mxu0 0
      %1937 = vmatprep.subr.bf16.mxu0 0
      %1938 = vmatpush2.bf16.msra.mxu0 0
      %1939 = vmatprep.subr.bf16.mxu0 0
      %1940 = vmatpush2.bf16.msra.mxu0 0
      %1941 = vmatprep.subr.bf16.mxu0 0
      %1942 = vmatpush2.bf16.msra.mxu0 0
      %1943 = vmatprep.mubr.bf16.mxu0 0
      %1944 = vmatmul.mubr.bf16.gmra.mxu0 %v1909
      %v1945 = vpop.f32.mrf.mxu0
      %v1946 = vadd.f32 0.0, %v1945
      %v1947 = vpop.f32.mrf.mxu0
      %v1948 = vpop.f32.mrf.mxu0
      %v1949 = vadd.f32 0.0, %v1948
      %v1950 = vpop.f32.mrf.mxu0
      %1951 = vdwg.mxu0
      %v1952 = vadd.f32 %v1774, %v1946
      %v1953 = vadd.f32 %v1775, %v1949
      %v1954 = vadd.f32 %v1507, %v1952
      %v1955 = vadd.f32 %v1508, %v1953
      %v1956 = vsel %vm514, %v1954, 0.0
      %1957 = vadd.xlane.f32.xlu0 %v1956
      %v1958 = vpop.xlane.xlu0 %1957
      %v1959 = vsel %vm514, %v1955, 0.0
      %1960 = vadd.xlane.f32.xlu0 %v1959
      %v1961 = vpop.xlane.xlu0 %1960
      %v1962 = vmul.f32 %v1958, %v948
      %v1963 = vmul.f32 %v1961, %v948
      %v1964 = vsub.f32 %v1954, %v1962
      %v1965 = vsub.f32 %v1955, %v1963
      %v1966 = vmul.f32 %v1964, %v1964
      %v1967 = vmul.f32 %v1965, %v1965
      %v1968 = vsel %vm514, %v1966, 0.0
      %1969 = vadd.xlane.f32.xlu0 %v1968
      %v1970 = vpop.xlane.xlu0 %1969
      %v1971 = vsel %vm514, %v1967, 0.0
      %1972 = vadd.xlane.f32.xlu0 %v1971
      %v1973 = vpop.xlane.xlu0 %1972
      %v1974 = vmul.f32 %v1970, %v948
      %v1975 = vmul.f32 %v1973, %v948
      %v1976 = vadd.f32 %v1974, 1e-05
      %v1977 = vadd.f32 %v1975, 1e-05
      %v1978 = vrsqrt.pop %v1976
      %v1979 = vrsqrt.pop %v1977
      %v1980 = vmul.f32 %v1964, %v1978
      %v1981 = vmul.f32 %v1965, %v1979
      %v1982 = vlaneseq
      %v1983 = vshrl.u32 %v1982, 7
      %v1984 = vsub.s32 3, %v1983
      %v1985 = vrot.slane %v1510, %v1984
      %v1986 = vmul.f32 %v1980, %v1985
      %v1987 = vmul.f32 %v1981, %v1985
      %v1988 = vlaneseq
      %v1989 = vshrl.u32 %v1988, 7
      %v1990 = vsub.s32 4, %v1989
      %v1991 = vrot.slane %v1510, %v1990
      %v1992 = vadd.f32 %v1986, %v1991
      %v1993 = vadd.f32 %v1987, %v1991
      %v1994 = vmul.f32 %v1992, %v480
      %v1995 = vmul.f32 %v1993, %v485
      %s1996 = scalar_lea.vmem %s7, 1
      %v1997 = vld [vmem:[%s1996] sm:$0x1]
      %v1998 = vrot.slane %v1994, 6
      %v1999 = vrot.slane %v1995, 6
      %v2000 = vsel %vm986, %v1998, %v1999
      %v2001 = vsel %vm986, %v1999, %v1998
      %v2002 = vsel %vm993, %v2001, 0.0
      %v2003 = vsel %vm994, %v2000, 0.0
      %s2004 = scalar_lea.vmem %s6, 48
      %v2005 = vld [vmem:[%s2004] sm:$0xf]
      %v2006 = vld [vmem:[%s2004 + $0x4] sm:$0xf]
      %v2007 = vld [vmem:[%s2004 + $0x8] sm:$0xf]
      %v2008 = vld [vmem:[%s2004 + $0xc] sm:$0xf]
      %v2009 = vpack.c.bf16 %v2003, %v2002
      %v2014 = vunpack.c.l.b16 %v2005
      %v2015 = vunpack.c.l.b16 %v2006
      %v2016 = vunpack.c.l.b16 %v2007
      %v2017 = vunpack.c.l.b16 %v2008
      %v2018 = vpack.c.b16 %v2015, %v2014
      %v2019 = vpack.c.b16 %v2017, %v2016
      %v2023 = vsel %vm514, %v2009, 0
      %2025 = vmatprep.subr.bf16.mxu0 0
      %2026 = vmatpush1.bf16.msra.mxu0 0
      %2027 = vmatprep.subr.bf16.mxu0 0
      %2028 = vmatpush1.bf16.msra.mxu0 0
      %2029 = vmatprep.subr.bf16.mxu0 0
      %2030 = vmatpush1.bf16.msra.mxu0 0
      %2031 = vmatprep.subr.bf16.mxu0 0
      %2032 = vmatpush1.bf16.msra.mxu0 0
      %2033 = vmatprep.subr.bf16.mxu0 0
      %2034 = vmatpush1.bf16.msra.mxu0 0
      %2035 = vmatprep.subr.bf16.mxu0 0
      %2036 = vmatpush1.bf16.msra.mxu0 0
      %2037 = vmatprep.subr.bf16.mxu0 0
      %2038 = vmatpush1.bf16.msra.mxu0 %v2019
      %2039 = vmatprep.subr.bf16.mxu0 0
      %2040 = vmatpush1.bf16.msra.mxu0 %v2018
      %2041 = vmatprep.subr.bf16.mxu0 0
      %2042 = vmatpush2.bf16.msra.mxu0 0
      %2043 = vmatprep.subr.bf16.mxu0 0
      %2044 = vmatpush2.bf16.msra.mxu0 0
      %2045 = vmatprep.subr.bf16.mxu0 0
      %2046 = vmatpush2.bf16.msra.mxu0 0
      %2047 = vmatprep.subr.bf16.mxu0 0
      %2048 = vmatpush2.bf16.msra.mxu0 0
      %2049 = vmatprep.subr.bf16.mxu0 0
      %2050 = vmatpush2.bf16.msra.mxu0 0
      %2051 = vmatprep.subr.bf16.mxu0 0
      %2052 = vmatpush2.bf16.msra.mxu0 0
      %2053 = vmatprep.subr.bf16.mxu0 0
      %2054 = vmatpush2.bf16.msra.mxu0 0
      %2055 = vmatprep.subr.bf16.mxu0 0
      %2056 = vmatpush2.bf16.msra.mxu0 0
      %2057 = vmatprep.mubr.bf16.mxu0 0
      %2058 = vmatmul.mubr.bf16.gmra.mxu0 %v2023
      %v2059 = vpop.f32.mrf.mxu0
      %v2060 = vadd.f32 0.0, %v2059
      %v2061 = vpop.f32.mrf.mxu0
      %v2062 = vpop.f32.mrf.mxu0
      %v2063 = vadd.f32 0.0, %v2062
      %v2064 = vpop.f32.mrf.mxu0
      %2065 = vdwg.mxu0
      %v2067 = vlaneseq
      %v2068 = vshrl.u32 %v2067, 7
      %v2069 = vsub.s32 0, %v2068
      %v2070 = vrot.slane %v1997, %v2069
      %v2072 = vadd.f32 %v2070, %v2060
      %v2073 = vadd.f32 %v2070, %v2063
      %v2074 = vrot.slane %v1994, 7
      %v2075 = vrot.slane %v1995, 7
      %v2076 = vsel %vm1068, %v2074, %v2075
      %v2077 = vsel %vm1068, %v2075, %v2074
      %v2078 = vsel %vm1075, %v2077, 0.0
      %v2079 = vsel %vm1076, %v2076, 0.0
      %s2080 = scalar_lea.vmem %s6, 64
      %v2081 = vld [vmem:[%s2080] sm:$0xf]
      %v2082 = vld [vmem:[%s2080 + $0x4] sm:$0xf]
      %v2083 = vld [vmem:[%s2080 + $0x8] sm:$0xf]
      %v2084 = vld [vmem:[%s2080 + $0xc] sm:$0xf]
      %v2085 = vpack.c.bf16 %v2079, %v2078
      %v2090 = vunpack.c.l.b16 %v2081
      %v2091 = vunpack.c.l.b16 %v2082
      %v2092 = vunpack.c.l.b16 %v2083
      %v2093 = vunpack.c.l.b16 %v2084
      %v2094 = vpack.c.b16 %v2091, %v2090
      %v2095 = vpack.c.b16 %v2093, %v2092
      %v2099 = vsel %vm514, %v2085, 0
      %2101 = vmatprep.subr.bf16.mxu0 0
      %2102 = vmatpush1.bf16.msra.mxu0 0
      %2103 = vmatprep.subr.bf16.mxu0 0
      %2104 = vmatpush1.bf16.msra.mxu0 0
      %2105 = vmatprep.subr.bf16.mxu0 0
      %2106 = vmatpush1.bf16.msra.mxu0 0
      %2107 = vmatprep.subr.bf16.mxu0 0
      %2108 = vmatpush1.bf16.msra.mxu0 0
      %2109 = vmatprep.subr.bf16.mxu0 0
      %2110 = vmatpush1.bf16.msra.mxu0 0
      %2111 = vmatprep.subr.bf16.mxu0 0
      %2112 = vmatpush1.bf16.msra.mxu0 0
      %2113 = vmatprep.subr.bf16.mxu0 0
      %2114 = vmatpush1.bf16.msra.mxu0 %v2095
      %2115 = vmatprep.subr.bf16.mxu0 0
      %2116 = vmatpush1.bf16.msra.mxu0 %v2094
      %2117 = vmatprep.subr.bf16.mxu0 0
      %2118 = vmatpush2.bf16.msra.mxu0 0
      %2119 = vmatprep.subr.bf16.mxu0 0
      %2120 = vmatpush2.bf16.msra.mxu0 0
      %2121 = vmatprep.subr.bf16.mxu0 0
      %2122 = vmatpush2.bf16.msra.mxu0 0
      %2123 = vmatprep.subr.bf16.mxu0 0
      %2124 = vmatpush2.bf16.msra.mxu0 0
      %2125 = vmatprep.subr.bf16.mxu0 0
      %2126 = vmatpush2.bf16.msra.mxu0 0
      %2127 = vmatprep.subr.bf16.mxu0 0
      %2128 = vmatpush2.bf16.msra.mxu0 0
      %2129 = vmatprep.subr.bf16.mxu0 0
      %2130 = vmatpush2.bf16.msra.mxu0 0
      %2131 = vmatprep.subr.bf16.mxu0 0
      %2132 = vmatpush2.bf16.msra.mxu0 0
      %2133 = vmatprep.mubr.bf16.mxu0 0
      %2134 = vmatmul.mubr.bf16.gmra.mxu0 %v2099
      %v2135 = vpop.f32.mrf.mxu0
      %v2136 = vadd.f32 0.0, %v2135
      %v2137 = vpop.f32.mrf.mxu0
      %v2138 = vpop.f32.mrf.mxu0
      %v2139 = vadd.f32 0.0, %v2138
      %v2140 = vpop.f32.mrf.mxu0
      %2141 = vdwg.mxu0
      %v2142 = vadd.f32 %v2072, %v2136
      %v2143 = vadd.f32 %v2073, %v2139
      %s2144 = scalar_lea.vmem %s6, 80
      %v2145 = vld [vmem:[%s2144] sm:$0xf]
      %v2146 = vld [vmem:[%s2144 + $0x4] sm:$0xf]
      %v2147 = vld [vmem:[%s2144 + $0x8] sm:$0xf]
      %v2148 = vld [vmem:[%s2144 + $0xc] sm:$0xf]
      %v2149 = vpack.c.bf16 %v1995, %v1994
      %v2154 = vunpack.c.l.b16 %v2145
      %v2155 = vunpack.c.l.b16 %v2146
      %v2156 = vunpack.c.l.b16 %v2147
      %v2157 = vunpack.c.l.b16 %v2148
      %v2158 = vpack.c.b16 %v2155, %v2154
      %v2159 = vpack.c.b16 %v2157, %v2156
      %v2163 = vsel %vm514, %v2149, 0
      %2165 = vmatprep.subr.bf16.mxu0 0
      %2166 = vmatpush1.bf16.msra.mxu0 0
      %2167 = vmatprep.subr.bf16.mxu0 0
      %2168 = vmatpush1.bf16.msra.mxu0 0
      %2169 = vmatprep.subr.bf16.mxu0 0
      %2170 = vmatpush1.bf16.msra.mxu0 0
      %2171 = vmatprep.subr.bf16.mxu0 0
      %2172 = vmatpush1.bf16.msra.mxu0 0
      %2173 = vmatprep.subr.bf16.mxu0 0
      %2174 = vmatpush1.bf16.msra.mxu0 0
      %2175 = vmatprep.subr.bf16.mxu0 0
      %2176 = vmatpush1.bf16.msra.mxu0 0
      %2177 = vmatprep.subr.bf16.mxu0 0
      %2178 = vmatpush1.bf16.msra.mxu0 %v2159
      %2179 = vmatprep.subr.bf16.mxu0 0
      %2180 = vmatpush1.bf16.msra.mxu0 %v2158
      %2181 = vmatprep.subr.bf16.mxu0 0
      %2182 = vmatpush2.bf16.msra.mxu0 0
      %2183 = vmatprep.subr.bf16.mxu0 0
      %2184 = vmatpush2.bf16.msra.mxu0 0
      %2185 = vmatprep.subr.bf16.mxu0 0
      %2186 = vmatpush2.bf16.msra.mxu0 0
      %2187 = vmatprep.subr.bf16.mxu0 0
      %2188 = vmatpush2.bf16.msra.mxu0 0
      %2189 = vmatprep.subr.bf16.mxu0 0
      %2190 = vmatpush2.bf16.msra.mxu0 0
      %2191 = vmatprep.subr.bf16.mxu0 0
      %2192 = vmatpush2.bf16.msra.mxu0 0
      %2193 = vmatprep.subr.bf16.mxu0 0
      %2194 = vmatpush2.bf16.msra.mxu0 0
      %2195 = vmatprep.subr.bf16.mxu0 0
      %2196 = vmatpush2.bf16.msra.mxu0 0
      %2197 = vmatprep.mubr.bf16.mxu0 0
      %2198 = vmatmul.mubr.bf16.gmra.mxu0 %v2163
      %v2199 = vpop.f32.mrf.mxu0
      %v2200 = vadd.f32 0.0, %v2199
      %v2201 = vpop.f32.mrf.mxu0
      %v2202 = vpop.f32.mrf.mxu0
      %v2203 = vadd.f32 0.0, %v2202
      %v2204 = vpop.f32.mrf.mxu0
      %2205 = vdwg.mxu0
      %v2206 = vadd.f32 %v2142, %v2200
      %v2207 = vadd.f32 %v2143, %v2203
      %v2208 = vmax.f32 %v2206, 0.0
      %v2209 = vmax.f32 %v2207, 0.0
      %v2210 = vmul.f32 %v2208, %v480
      %v2211 = vmul.f32 %v2209, %v485
      %v2212 = vrot.slane %v2210, 6
      %v2213 = vrot.slane %v2211, 6
      %v2214 = vsel %vm986, %v2212, %v2213
      %v2215 = vsel %vm986, %v2213, %v2212
      %v2216 = vsel %vm993, %v2215, 0.0
      %v2217 = vsel %vm994, %v2214, 0.0
      %s2218 = scalar_lea.vmem %s8, 96
      %v2219 = vld [vmem:[%s2218] sm:$0xf]
      %v2220 = vld [vmem:[%s2218 + $0x4] sm:$0xf]
      %v2221 = vld [vmem:[%s2218 + $0x8] sm:$0xf]
      %v2222 = vld [vmem:[%s2218 + $0xc] sm:$0xf]
      %v2223 = vld [vmem:[%s2218 + $0x10] sm:$0xf]
      %v2224 = vld [vmem:[%s2218 + $0x14] sm:$0xf]
      %v2225 = vld [vmem:[%s2218 + $0x18] sm:$0xf]
      %v2226 = vld [vmem:[%s2218 + $0x1c] sm:$0xf]
      %v2227 = vpack.c.bf16 %v2217, %v2216
      %v2236 = vunpack.c.l.b16 %v2219
      %v2237 = vunpack.c.l.b16 %v2220
      %v2238 = vunpack.c.l.b16 %v2221
      %v2239 = vunpack.c.l.b16 %v2222
      %v2240 = vunpack.c.l.b16 %v2223
      %v2241 = vunpack.c.l.b16 %v2224
      %v2242 = vunpack.c.l.b16 %v2225
      %v2243 = vunpack.c.l.b16 %v2226
      %v2244 = vpack.c.b16 %v2237, %v2236
      %v2245 = vpack.c.b16 %v2239, %v2238
      %v2246 = vpack.c.b16 %v2241, %v2240
      %v2247 = vpack.c.b16 %v2243, %v2242
      %v2253 = vsel %vm1250, %v2227, 0
      %2255 = vmatprep.subr.bf16.mxu0 0
      %2256 = vmatpush1.bf16.msra.mxu0 0
      %2257 = vmatprep.subr.bf16.mxu0 0
      %2258 = vmatpush1.bf16.msra.mxu0 0
      %2259 = vmatprep.subr.bf16.mxu0 0
      %2260 = vmatpush1.bf16.msra.mxu0 0
      %2261 = vmatprep.subr.bf16.mxu0 0
      %2262 = vmatpush1.bf16.msra.mxu0 0
      %2263 = vmatprep.subr.bf16.mxu0 0
      %2264 = vmatpush1.bf16.msra.mxu0 %v2247
      %2265 = vmatprep.subr.bf16.mxu0 0
      %2266 = vmatpush1.bf16.msra.mxu0 %v2246
      %2267 = vmatprep.subr.bf16.mxu0 0
      %2268 = vmatpush1.bf16.msra.mxu0 %v2245
      %2269 = vmatprep.subr.bf16.mxu0 0
      %2270 = vmatpush1.bf16.msra.mxu0 %v2244
      %2271 = vmatprep.subr.bf16.mxu0 0
      %2272 = vmatpush2.bf16.msra.mxu0 0
      %2273 = vmatprep.subr.bf16.mxu0 0
      %2274 = vmatpush2.bf16.msra.mxu0 0
      %2275 = vmatprep.subr.bf16.mxu0 0
      %2276 = vmatpush2.bf16.msra.mxu0 0
      %2277 = vmatprep.subr.bf16.mxu0 0
      %2278 = vmatpush2.bf16.msra.mxu0 0
      %2279 = vmatprep.subr.bf16.mxu0 0
      %2280 = vmatpush2.bf16.msra.mxu0 0
      %2281 = vmatprep.subr.bf16.mxu0 0
      %2282 = vmatpush2.bf16.msra.mxu0 0
      %2283 = vmatprep.subr.bf16.mxu0 0
      %2284 = vmatpush2.bf16.msra.mxu0 0
      %2285 = vmatprep.subr.bf16.mxu0 0
      %2286 = vmatpush2.bf16.msra.mxu0 0
      %2287 = vmatprep.mubr.bf16.mxu0 0
      %2288 = vmatmul.mubr.bf16.gmra.mxu0 %v2253
      %v2289 = vpop.f32.mrf.mxu0
      %v2290 = vadd.f32 0.0, %v2289
      %v2291 = vpop.f32.mrf.mxu0
      %v2292 = vpop.f32.mrf.mxu0
      %v2293 = vadd.f32 0.0, %v2292
      %v2294 = vpop.f32.mrf.mxu0
      %2295 = vdwg.mxu0
      %v2296 = vlaneseq
      %v2297 = vshrl.u32 %v2296, 7
      %v2298 = vsub.s32 7, %v2297
      %v2299 = vrot.slane %v1510, %v2298
      %v2300 = vadd.f32 %v2299, %v2290
      %v2301 = vadd.f32 %v2299, %v2293
      %v2302 = vrot.slane %v2210, 7
      %v2303 = vrot.slane %v2211, 7
      %v2304 = vsel %vm1068, %v2302, %v2303
      %v2305 = vsel %vm1068, %v2303, %v2302
      %v2306 = vsel %vm1075, %v2305, 0.0
      %v2307 = vsel %vm1076, %v2304, 0.0
      %s2308 = scalar_lea.vmem %s8, 128
      %v2309 = vld [vmem:[%s2308] sm:$0xf]
      %v2310 = vld [vmem:[%s2308 + $0x4] sm:$0xf]
      %v2311 = vld [vmem:[%s2308 + $0x8] sm:$0xf]
      %v2312 = vld [vmem:[%s2308 + $0xc] sm:$0xf]
      %v2313 = vld [vmem:[%s2308 + $0x10] sm:$0xf]
      %v2314 = vld [vmem:[%s2308 + $0x14] sm:$0xf]
      %v2315 = vld [vmem:[%s2308 + $0x18] sm:$0xf]
      %v2316 = vld [vmem:[%s2308 + $0x1c] sm:$0xf]
      %v2317 = vpack.c.bf16 %v2307, %v2306
      %v2326 = vunpack.c.l.b16 %v2309
      %v2327 = vunpack.c.l.b16 %v2310
      %v2328 = vunpack.c.l.b16 %v2311
      %v2329 = vunpack.c.l.b16 %v2312
      %v2330 = vunpack.c.l.b16 %v2313
      %v2331 = vunpack.c.l.b16 %v2314
      %v2332 = vunpack.c.l.b16 %v2315
      %v2333 = vunpack.c.l.b16 %v2316
      %v2334 = vpack.c.b16 %v2327, %v2326
      %v2335 = vpack.c.b16 %v2329, %v2328
      %v2336 = vpack.c.b16 %v2331, %v2330
      %v2337 = vpack.c.b16 %v2333, %v2332
      %v2343 = vsel %vm1250, %v2317, 0
      %2345 = vmatprep.subr.bf16.mxu0 0
      %2346 = vmatpush1.bf16.msra.mxu0 0
      %2347 = vmatprep.subr.bf16.mxu0 0
      %2348 = vmatpush1.bf16.msra.mxu0 0
      %2349 = vmatprep.subr.bf16.mxu0 0
      %2350 = vmatpush1.bf16.msra.mxu0 0
      %2351 = vmatprep.subr.bf16.mxu0 0
      %2352 = vmatpush1.bf16.msra.mxu0 0
      %2353 = vmatprep.subr.bf16.mxu0 0
      %2354 = vmatpush1.bf16.msra.mxu0 %v2337
      %2355 = vmatprep.subr.bf16.mxu0 0
      %2356 = vmatpush1.bf16.msra.mxu0 %v2336
      %2357 = vmatprep.subr.bf16.mxu0 0
      %2358 = vmatpush1.bf16.msra.mxu0 %v2335
      %2359 = vmatprep.subr.bf16.mxu0 0
      %2360 = vmatpush1.bf16.msra.mxu0 %v2334
      %2361 = vmatprep.subr.bf16.mxu0 0
      %2362 = vmatpush2.bf16.msra.mxu0 0
      %2363 = vmatprep.subr.bf16.mxu0 0
      %2364 = vmatpush2.bf16.msra.mxu0 0
      %2365 = vmatprep.subr.bf16.mxu0 0
      %2366 = vmatpush2.bf16.msra.mxu0 0
      %2367 = vmatprep.subr.bf16.mxu0 0
      %2368 = vmatpush2.bf16.msra.mxu0 0
      %2369 = vmatprep.subr.bf16.mxu0 0
      %2370 = vmatpush2.bf16.msra.mxu0 0
      %2371 = vmatprep.subr.bf16.mxu0 0
      %2372 = vmatpush2.bf16.msra.mxu0 0
      %2373 = vmatprep.subr.bf16.mxu0 0
      %2374 = vmatpush2.bf16.msra.mxu0 0
      %2375 = vmatprep.subr.bf16.mxu0 0
      %2376 = vmatpush2.bf16.msra.mxu0 0
      %2377 = vmatprep.mubr.bf16.mxu0 0
      %2378 = vmatmul.mubr.bf16.gmra.mxu0 %v2343
      %v2379 = vpop.f32.mrf.mxu0
      %v2380 = vadd.f32 0.0, %v2379
      %v2381 = vpop.f32.mrf.mxu0
      %v2382 = vpop.f32.mrf.mxu0
      %v2383 = vadd.f32 0.0, %v2382
      %v2384 = vpop.f32.mrf.mxu0
      %2385 = vdwg.mxu0
      %v2386 = vadd.f32 %v2300, %v2380
      %v2387 = vadd.f32 %v2301, %v2383
      %s2388 = scalar_lea.vmem %s8, 160
      %v2389 = vld [vmem:[%s2388] sm:$0xf]
      %v2390 = vld [vmem:[%s2388 + $0x4] sm:$0xf]
      %v2391 = vld [vmem:[%s2388 + $0x8] sm:$0xf]
      %v2392 = vld [vmem:[%s2388 + $0xc] sm:$0xf]
      %v2393 = vld [vmem:[%s2388 + $0x10] sm:$0xf]
      %v2394 = vld [vmem:[%s2388 + $0x14] sm:$0xf]
      %v2395 = vld [vmem:[%s2388 + $0x18] sm:$0xf]
      %v2396 = vld [vmem:[%s2388 + $0x1c] sm:$0xf]
      %v2397 = vpack.c.bf16 %v2211, %v2210
      %v2406 = vunpack.c.l.b16 %v2389
      %v2407 = vunpack.c.l.b16 %v2390
      %v2408 = vunpack.c.l.b16 %v2391
      %v2409 = vunpack.c.l.b16 %v2392
      %v2410 = vunpack.c.l.b16 %v2393
      %v2411 = vunpack.c.l.b16 %v2394
      %v2412 = vunpack.c.l.b16 %v2395
      %v2413 = vunpack.c.l.b16 %v2396
      %v2414 = vpack.c.b16 %v2407, %v2406
      %v2415 = vpack.c.b16 %v2409, %v2408
      %v2416 = vpack.c.b16 %v2411, %v2410
      %v2417 = vpack.c.b16 %v2413, %v2412
      %v2423 = vsel %vm1250, %v2397, 0
      %2425 = vmatprep.subr.bf16.mxu0 0
      %2426 = vmatpush1.bf16.msra.mxu0 0
      %2427 = vmatprep.subr.bf16.mxu0 0
      %2428 = vmatpush1.bf16.msra.mxu0 0
      %2429 = vmatprep.subr.bf16.mxu0 0
      %2430 = vmatpush1.bf16.msra.mxu0 0
      %2431 = vmatprep.subr.bf16.mxu0 0
      %2432 = vmatpush1.bf16.msra.mxu0 0
      %2433 = vmatprep.subr.bf16.mxu0 0
      %2434 = vmatpush1.bf16.msra.mxu0 %v2417
      %2435 = vmatprep.subr.bf16.mxu0 0
      %2436 = vmatpush1.bf16.msra.mxu0 %v2416
      %2437 = vmatprep.subr.bf16.mxu0 0
      %2438 = vmatpush1.bf16.msra.mxu0 %v2415
      %2439 = vmatprep.subr.bf16.mxu0 0
      %2440 = vmatpush1.bf16.msra.mxu0 %v2414
      %2441 = vmatprep.subr.bf16.mxu0 0
      %2442 = vmatpush2.bf16.msra.mxu0 0
      %2443 = vmatprep.subr.bf16.mxu0 0
      %2444 = vmatpush2.bf16.msra.mxu0 0
      %2445 = vmatprep.subr.bf16.mxu0 0
      %2446 = vmatpush2.bf16.msra.mxu0 0
      %2447 = vmatprep.subr.bf16.mxu0 0
      %2448 = vmatpush2.bf16.msra.mxu0 0
      %2449 = vmatprep.subr.bf16.mxu0 0
      %2450 = vmatpush2.bf16.msra.mxu0 0
      %2451 = vmatprep.subr.bf16.mxu0 0
      %2452 = vmatpush2.bf16.msra.mxu0 0
      %2453 = vmatprep.subr.bf16.mxu0 0
      %2454 = vmatpush2.bf16.msra.mxu0 0
      %2455 = vmatprep.subr.bf16.mxu0 0
      %2456 = vmatpush2.bf16.msra.mxu0 0
      %2457 = vmatprep.mubr.bf16.mxu0 0
      %2458 = vmatmul.mubr.bf16.gmra.mxu0 %v2423
      %v2459 = vpop.f32.mrf.mxu0
      %v2460 = vadd.f32 0.0, %v2459
      %v2461 = vpop.f32.mrf.mxu0
      %v2462 = vpop.f32.mrf.mxu0
      %v2463 = vadd.f32 0.0, %v2462
      %v2464 = vpop.f32.mrf.mxu0
      %2465 = vdwg.mxu0
      %v2466 = vadd.f32 %v2386, %v2460
      %v2467 = vadd.f32 %v2387, %v2463
      %v2468 = vmul.f32 %v2466, %v480
      %v2469 = vmul.f32 %v2467, %v485
      %v2470 = vadd.f32 %v1992, %v2468
      %v2471 = vadd.f32 %v1993, %v2469
      %v2472 = vsel %vm514, %v2470, 0.0
      %2473 = vadd.xlane.f32.xlu0 %v2472
      %v2474 = vpop.xlane.xlu0 %2473
      %v2475 = vsel %vm514, %v2471, 0.0
      %2476 = vadd.xlane.f32.xlu0 %v2475
      %v2477 = vpop.xlane.xlu0 %2476
      %v2478 = vmul.f32 %v2474, %v948
      %v2479 = vmul.f32 %v2477, %v948
      %v2480 = vsub.f32 %v2470, %v2478
      %v2481 = vsub.f32 %v2471, %v2479
      %v2482 = vmul.f32 %v2480, %v2480
      %v2483 = vmul.f32 %v2481, %v2481
      %v2484 = vsel %vm514, %v2482, 0.0
      %2485 = vadd.xlane.f32.xlu0 %v2484
      %v2486 = vpop.xlane.xlu0 %2485
      %v2487 = vsel %vm514, %v2483, 0.0
      %2488 = vadd.xlane.f32.xlu0 %v2487
      %v2489 = vpop.xlane.xlu0 %2488
      %v2490 = vmul.f32 %v2486, %v948
      %v2491 = vmul.f32 %v2489, %v948
      %v2492 = vadd.f32 %v2490, 1e-05
      %v2493 = vadd.f32 %v2491, 1e-05
      %v2494 = vrsqrt.pop %v2492
      %v2495 = vrsqrt.pop %v2493
      %v2496 = vmul.f32 %v2480, %v2494
      %v2497 = vmul.f32 %v2481, %v2495
      %v2498 = vlaneseq
      %v2499 = vshrl.u32 %v2498, 7
      %v2500 = vsub.s32 5, %v2499
      %v2501 = vrot.slane %v1510, %v2500
      %v2502 = vmul.f32 %v2496, %v2501
      %v2503 = vmul.f32 %v2497, %v2501
      %v2504 = vlaneseq
      %v2505 = vshrl.u32 %v2504, 7
      %v2506 = vsub.s32 6, %v2505
      %v2507 = vrot.slane %v1510, %v2506
      %v2508 = vadd.f32 %v2502, %v2507
      %v2509 = vadd.f32 %v2503, %v2507
      %v2510 = vmul.f32 %v2508, %v480
      %v2511 = vmul.f32 %v2509, %v485
      %v2512 = vadd.f32 %v2510, %v487
      %v2513 = vadd.f32 %v2511, %v488
      %v2514 = vld [vmem:[%s9] sm:$0xff]
      %v2515 = vld [vmem:[%s9 + $0x8] sm:$0xff]
      %v2516 = vld [vmem:[%s9 + $0x10] sm:$0xff]
      %v2517 = vld [vmem:[%s9 + $0x18] sm:$0xff]
      %v2518 = vld [vmem:[%s9 + $0x20] sm:$0x1]
      %v2519 = vpack.c.bf16 %v2513, %v2512
      %v2520 = vpack.c.bf16 %v2515, %v2514
      %v2521 = vpack.c.bf16 %v2517, %v2516
      %v2522 = vlaneseq
      %v2523 = vshrl.u32 %v2522, 7
      %v2524 = vsub.s32 0, %v2523
      %v2525 = vrot.slane %v2518, %v2524
      %v2527 = vsel %vm514, %v2519, 0
      %2529 = vmatprep.subr.bf16.mxu0 0
      %2530 = vmatpush1.bf16.msra.mxu0 0
      %2531 = vmatprep.subr.bf16.mxu0 0
      %2532 = vmatpush1.bf16.msra.mxu0 0
      %2533 = vmatprep.subr.bf16.mxu0 0
      %2534 = vmatpush1.bf16.msra.mxu0 0
      %2535 = vmatprep.subr.bf16.mxu0 0
      %2536 = vmatpush1.bf16.msra.mxu0 0
      %2537 = vmatprep.subr.bf16.mxu0 0
      %2538 = vmatpush1.bf16.msra.mxu0 0
      %2539 = vmatprep.subr.bf16.mxu0 0
      %2540 = vmatpush1.bf16.msra.mxu0 0
      %2541 = vmatprep.subr.bf16.mxu0 0
      %2542 = vmatpush1.bf16.msra.mxu0 %v2521
      %2543 = vmatprep.subr.bf16.mxu0 0
      %2544 = vmatpush1.bf16.msra.mxu0 %v2520
      %2545 = vmatprep.subr.bf16.mxu0 0
      %2546 = vmatpush2.bf16.msra.mxu0 0
      %2547 = vmatprep.subr.bf16.mxu0 0
      %2548 = vmatpush2.bf16.msra.mxu0 0
      %2549 = vmatprep.subr.bf16.mxu0 0
      %2550 = vmatpush2.bf16.msra.mxu0 0
      %2551 = vmatprep.subr.bf16.mxu0 0
      %2552 = vmatpush2.bf16.msra.mxu0 0
      %2553 = vmatprep.subr.bf16.mxu0 0
      %2554 = vmatpush2.bf16.msra.mxu0 0
      %2555 = vmatprep.subr.bf16.mxu0 0
      %2556 = vmatpush2.bf16.msra.mxu0 0
      %2557 = vmatprep.subr.bf16.mxu0 0
      %2558 = vmatpush2.bf16.msra.mxu0 0
      %2559 = vmatprep.subr.bf16.mxu0 0
      %2560 = vmatpush2.bf16.msra.mxu0 0
      %2561 = vmatprep.mubr.bf16.mxu0 0
      %2562 = vmatmul.mubr.bf16.gmra.mxu0 %v2527
      %v2563 = vpop.f32.mrf.mxu0
      %v2564 = vadd.f32 %v2525, %v2563
      %v2565 = vpop.f32.mrf.mxu0
      %v2566 = vpop.f32.mrf.mxu0
      %v2567 = vadd.f32 %v2525, %v2566
      %v2568 = vpop.f32.mrf.mxu0
      %2569 = vdwg.mxu0
      %v2570 = vmul.f32 %v2564, %v480
      %v2571 = vmul.f32 %v2567, %v485
      %v2572 = vmul.f32 %v2570, 1.442695
      %v2573 = vpow.pop %v2572
      %v2574 = vmul.f32 %v2571, 1.442695
      %v2575 = vpow.pop %v2574
      %v2576 = vmul.f32 %v417, %v2573
      %v2577 = vmul.f32 %v418, %v2575
      %v2578 = vmul.f32 %v2576, %v480
      %v2579 = vmul.f32 %v2577, %v485
      %2582 = vrot.lane.b32.xlu0 %v2578, 126
      %v2583 = vpop.permute.xlu0 %2582
      %2584 = vrot.lane.b32.xlu0 %v2579, 126
      %v2585 = vpop.permute.xlu0 %2584
      %v2588 = vadd.f32 %v2570, %v2583
      %v2589 = vadd.f32 %v2571, %v2585
      %2592 = vrot.lane.b32.xlu0 %v2588, 2
      %v2593 = vpop.permute.xlu0 %2592
      %2594 = vrot.lane.b32.xlu0 %v2589, 2
      %v2595 = vpop.permute.xlu0 %2594
      %v2598 = vsel %vm428, %v417, %v2593
      %v2599 = vsel %vm428, %v418, %v2595
      %vm2600 = vcmask 31744
      %2601 = vst.msk [vmem:[%s412] sm:$0xff] %vm2600, %v2598
      %2602 = vst.msk [vmem:[%s412 + $0x8] sm:$0xff] %vm2600, %v2599
      %vm2603 = vcmask 31760
      %v2604 = vsel %vm2603, %v2570, 0.0
      %v2605 = vsel %vm2603, %v2571, 0.0
      %v2606 = vadd.f32 %v2604, %v2605
      %v2607 = vrot.slane %v2606, 4
      %v2608 = vadd.f32 %v2606, %v2607
      %v2609 = vrot.slane %v2608, 2
      %v2610 = vadd.f32 %v2608, %v2609
      %v2611 = vrot.slane %v2610, 1
      %v2612 = vadd.f32 %v2610, %v2611
      %2614 = vrot.lane.b32.xlu0 %v2612, 126
      %v2615 = vpop.permute.xlu0 %2614
      %v2617 = vsel %vm428, %v2615, 0.0
      %2618 = vadd.xlane.f32.xlu0 %v2617
      %v2619 = vpop.xlane.xlu0 %2618
      %vm2620 = vcmask 0
      %2621 = vst.msk [vmem:[%s415] sm:$0x1] %vm2620, %v2619
      %p2622 = scmp.lt.s32.totalorder %s23, 1
      %s2623 = scalar_select %p2622, %s23, 1
      %s2624 = smul.addr %s2623, 2
      %s2625 = smul.addr %s2624, 8
      %s2626 = scalar_lea.vmem %s10, %s2625
      %p2627 = scmp.lt.s32.totalorder %s23, 1
      %s2628 = scalar_select %p2627, %s23, 1
      %s2629 = scalar_lea.vmem %s11, %s2628
      // Predicated region
      $region61: #{tpu_custom_call.1} parent=59 // pred_check
        %p2630 = pneg %p261
      $region62: #{tpu_custom_call.1} parent=59 // pred_check_branch
        %2632 = sbr.rel (%p2630) target = $region64
      $region63: #{tpu_custom_call.1} parent=59 // pred_region
        _
      $region64: #{tpu_custom_call.1} parent=59 // pred_fallthru
        _
      // Predicated region
      $region65: #{tpu_custom_call.1} parent=59 // pred_check
        %p2633 = pneg %p287
      $region66: #{tpu_custom_call.1} parent=59 // pred_check_branch
        %2635 = sbr.rel (%p2633) target = $region68
      $region67: #{tpu_custom_call.1} parent=59 // pred_region
        _
      $region68: #{tpu_custom_call.1} parent=59 // pred_fallthru
        _
    $region60: #{tpu_custom_call.1} parent=5 // pred_fallthru
      _
    %p2636 = scmp.le.s32.totalorder 2, %s18
    // Predicated region
    $region69: #{tpu_custom_call.1} parent=5 // pred_check
      %p2637 = pneg %p2636
    $region70: #{tpu_custom_call.1} parent=5 // pred_check_branch
      %2639 = sbr.rel (%p2637) target = $region72
    $region71: #{tpu_custom_call.1} parent=5 // pred_region
      %s2640 = ssub.s32 %s18, 2
      // Predicated region
      $region73: #{tpu_custom_call.1} parent=71 // pred_check
        %p2641 = pneg %p267
      $region74: #{tpu_custom_call.1} parent=71 // pred_check_branch
        %2643 = sbr.rel (%p2641) target = $region76
      $region75: #{tpu_custom_call.1} parent=71 // pred_region
        %p2644 = scmp.lt.s32.totalorder %s24, 1
        %s2645 = scalar_select %p2644, %s24, 1
        %s2646 = smul.addr %s2645, 2
        %s2647 = smul.addr %s2646, 8
        %s2648 = scalar_lea.vmem %s10, %s2647
      $region76: #{tpu_custom_call.1} parent=71 // pred_fallthru
        _
      // Predicated region
      $region77: #{tpu_custom_call.1} parent=71 // pred_check
        %p2649 = pneg %p293
      $region78: #{tpu_custom_call.1} parent=71 // pred_check_branch
        %2651 = sbr.rel (%p2649) target = $region80
      $region79: #{tpu_custom_call.1} parent=71 // pred_region
        %p2652 = scmp.lt.s32.totalorder %s24, 1
        %s2653 = scalar_select %p2652, %s24, 1
        %s2654 = scalar_lea.vmem %s11, %s2653
      $region80: #{tpu_custom_call.1} parent=71 // pred_fallthru
        _
    $region72: #{tpu_custom_call.1} parent=5 // pred_fallthru
      _
  $region6: #{tpu_custom_call.1} parent=0 // loop_footer
    %s22 = sadd.s32 1, %s18
  $region7: #{tpu_custom_call.1} parent=0 // loop_footer_branch
    %17 = sbr.rel target = $region3
  $region8: #{tpu_custom_call.1} parent=0 // loop_exit
    _

</llo_original>
